<compile_context>
chip_gen: v7x
topology: tpu7x:2x2x1
jax: 0.10.0
libtpu: 0.0.40
codegen_flags: <defaults>
</compile_context>

<pallas_src>
import functools

import jax
import jax.numpy as jnp
from jax.experimental import pallas as pl
from jax.experimental.pallas import tpu as pltpu  # noqa: F401  (CompilerParams only needed at BERT scale)


HEAD_PAD = 128  # lane-dense padded width for the fused pos+tag logits slab


def _gelu_erf(x):
    # Exact (erf-based) GELU to match HuggingFace BERT (gelu, approximate=False).
    # erf is computed with the Abramowitz & Stegun 7.1.26 polynomial (max abs err
    # ~1.5e-7) so only exp / mul / add / abs / select are required to lower on Mosaic.
    z = x * 0.7071067811865476
    az = jnp.abs(z)
    t = 1.0 / (1.0 + 0.3275911 * az)
    poly = t * (0.254829592 + t * (-0.284496736 + t * (1.421413741
             + t * (-1.453152027 + t * 1.061405429))))
    erf_abs = 1.0 - poly * jnp.exp(-az * az)
    erf_z = jnp.where(z >= 0.0, erf_abs, -erf_abs)
    return 0.5 * x * (1.0 + erf_z)


def _fused_entity_kernel(
    x_ref, bias_ref, mask_ref, tpos_ref, ttag_ref,
    embg_ref, embb_ref,
    wqkv_ref, bqkv_ref, wo_ref, bo_ref,
    ln1g_ref, ln1b_ref, w1_ref, b1_ref, w2_ref, b2_ref, ln2g_ref, ln2b_ref,
    whead_ref, bhead_ref,
    logits_ref, loss_ref,
    *, B, S, nh, n_layers, num_pos, num_tag, eps):
    H = x_ref.shape[1]
    dh = H // nh
    scale = 1.0 / float(dh) ** 0.5

    def layernorm(y, g, b):
        mu = jnp.mean(y, axis=-1, keepdims=True)
        d = y - mu
        var = jnp.mean(d * d, axis=-1, keepdims=True)
        return d * jax.lax.rsqrt(var + eps) * g + b

    bias = bias_ref[...]                                   # [B, S] additive key mask (0 / -1e9)
    x = layernorm(x_ref[...], embg_ref[...], embb_ref[...])  # [N, H] embedding LN

    # Encoder layers, fully fused and unrolled (n_layers is small & static).
    for l in range(n_layers):
        # Fused Q/K/V projection: one [H, 3H] matmul.
        qkv = jnp.dot(x, wqkv_ref[l], preferred_element_type=jnp.float32) + bqkv_ref[l]

        # Per-(batch, head) attention, unrolled (B*nh tiny matmuls, all in VMEM /
        # vregs, no HBM relayout or grid-step overhead).
        ctx_rows = []
        for b in range(B):
            q_b = qkv[b * S:(b + 1) * S, 0:H]
            k_b = qkv[b * S:(b + 1) * S, H:2 * H]
            v_b = qkv[b * S:(b + 1) * S, 2 * H:3 * H]
            bias_b = bias[b:b + 1, :]                      # [1, S] broadcast over query rows
            heads = []
            for h in range(nh):
                qh = q_b[:, h * dh:(h + 1) * dh]
                kh = k_b[:, h * dh:(h + 1) * dh]
                vh = v_b[:, h * dh:(h + 1) * dh]
                s = jax.lax.dot_general(qh, kh, (((1,), (1,)), ((), ())),
                                        preferred_element_type=jnp.float32) * scale
                s = s + bias_b
                s = s - jnp.max(s, axis=-1, keepdims=True)
                p = jnp.exp(s)
                p = p * pl.reciprocal(jnp.sum(p, axis=-1, keepdims=True), approx=True)
                heads.append(jnp.dot(p, vh, preferred_element_type=jnp.float32))
            ctx_rows.append(jnp.concatenate(heads, axis=-1))   # [S, H]
        ctx = jnp.concatenate(ctx_rows, axis=0)                # [N, H]

        attn_out = jnp.dot(ctx, wo_ref[l], preferred_element_type=jnp.float32) + bo_ref[l]
        x = layernorm(attn_out + x, ln1g_ref[l], ln1b_ref[l])

        hmid = jnp.dot(x, w1_ref[l], preferred_element_type=jnp.float32) + b1_ref[l]
        hmid = _gelu_erf(hmid)
        ff = jnp.dot(hmid, w2_ref[l], preferred_element_type=jnp.float32) + b2_ref[l]
        x = layernorm(ff + x, ln2g_ref[l], ln2b_ref[l])

    # TODO(synk): bert_drop_1 / bert_drop_2 (Dropout(0.3)) are identity here (eval semantics).
    # Fused pos+tag heads, padded to a lane-dense 128-wide slab (unmasked stores).
    logits = jnp.dot(x, whead_ref[...], preferred_element_type=jnp.float32) + bhead_ref[...]
    logits_ref[...] = logits

    # Both masked cross-entropy losses in this same kernel.  Matches
    # nn.CrossEntropyLoss applied after torch.where(mask==1, target, ignore_index):
    # mean of (logsumexp - target_logit) over tokens with mask == 1.
    m = mask_ref[...]                                                     # [N, 1] f32
    inv_cnt = pl.reciprocal(jnp.sum(m, axis=0, keepdims=True), approx=True)  # [1, 1]

    def masked_ce_sum(lg, labels):
        mx = jnp.max(lg, axis=-1, keepdims=True)
        lse = jnp.log(jnp.sum(jnp.exp(lg - mx), axis=-1, keepdims=True)) + mx
        col = jax.lax.broadcasted_iota(jnp.int32, lg.shape, 1)
        tgt = jnp.sum(jnp.where(col == labels, lg, 0.0), axis=-1, keepdims=True)
        return jnp.sum((lse - tgt) * m, axis=0, keepdims=True)            # [1, 1]

    loss_pos = masked_ce_sum(logits[:, :num_pos], tpos_ref[...])
    loss_tag = masked_ce_sum(logits[:, num_pos:num_pos + num_tag], ttag_ref[...])
    loss_ref[...] = (loss_tag + loss_pos) * 0.5 * inv_cnt


def entity_model_forward(params, ids, mask, token_type_ids, target_pos, target_tag):
    B, S = ids.shape
    H = params["word_emb"].shape[1]
    num_pos, num_tag = params["num_pos"], params["num_tag"]
    n_layers = params["wqkv"].shape[0]
    N = B * S

    # Embedding gathers are glue (tiny table lookups); all matmul / attention /
    # layernorm / loss compute runs in the single fused Pallas kernel below.
    x = (params["word_emb"][ids]
         + params["pos_emb"][jnp.arange(S)][None, :, :]
         + params["type_emb"][token_type_ids]).astype(jnp.float32).reshape(N, H)

    attn_bias = (1.0 - mask.astype(jnp.float32)) * -1e9                   # [B, S]
    mask_f = mask.astype(jnp.float32).reshape(N, 1)
    tpos = target_pos.reshape(N, 1).astype(jnp.int32)
    ttag = target_tag.reshape(N, 1).astype(jnp.int32)

    kernel = functools.partial(
        _fused_entity_kernel, B=B, S=S, nh=params["num_heads"],
        n_layers=int(n_layers), num_pos=num_pos, num_tag=num_tag, eps=1e-12)

    # TODO(synk): at real BERT scale (H=768, B*S in the thousands) this single fused
    # call would need a row-tiled grid / BlockSpecs, bf16 MXU inputs, and
    # vmem_limit_bytes (~512-row tiles on v7x's 64 MiB VMEM) instead of whole-array
    # residency; at this toy size whole-array residency is optimal.
    logits_pad, loss = pl.pallas_call(
        kernel,
        out_shape=(jax.ShapeDtypeStruct((N, HEAD_PAD), jnp.float32),
                   jax.ShapeDtypeStruct((1, 1), jnp.float32)),
    )(x, attn_bias, mask_f, tpos, ttag,
      params["emb_ln_g"], params["emb_ln_b"],
      params["wqkv"], params["bqkv"], params["wo"], params["bo"],
      params["ln1_g"], params["ln1_b"], params["w1"], params["b1"],
      params["w2"], params["b2"], params["ln2_g"], params["ln2_b"],
      params["w_head"], params["b_head"])

    pos_logits = logits_pad[:, :num_pos].reshape(B, S, num_pos)
    tag_logits = logits_pad[:, num_pos:num_pos + num_tag].reshape(B, S, num_tag)
    return tag_logits, pos_logits, loss[0, 0]


def init_params(key, *, vocab, max_pos, type_vocab=2, H=32, nh=4, inter=64,
                n_layers=2, num_pos=5, num_tag=7):
    keys = list(jax.random.split(key, 128))
    it = iter(keys)

    def nrm(shape, scale=0.02):
        return jax.random.normal(next(it), shape, jnp.float32) * scale

    wqkv, bqkv, wo, bo = [], [], [], []
    ln1g, ln1b, w1, b1, w2, b2, ln2g, ln2b = [], [], [], [], [], [], [], []
    for _ in range(n_layers):
        wqkv.append(jnp.concatenate([nrm((H, H)), nrm((H, H)), nrm((H, H))], axis=1))
        bqkv.append(jnp.zeros((1, 3 * H), jnp.float32))
        wo.append(nrm((H, H))); bo.append(jnp.zeros((1, H), jnp.float32))
        ln1g.append(jnp.ones((1, H), jnp.float32)); ln1b.append(jnp.zeros((1, H), jnp.float32))
        w1.append(nrm((H, inter))); b1.append(jnp.zeros((1, inter), jnp.float32))
        w2.append(nrm((inter, H))); b2.append(jnp.zeros((1, H), jnp.float32))
        ln2g.append(jnp.ones((1, H), jnp.float32)); ln2b.append(jnp.zeros((1, H), jnp.float32))

    # Fused + lane-padded classification heads: cols [0, num_pos) = out_pos,
    # cols [num_pos, num_pos+num_tag) = out_tag, rest zero padding.
    w_pos = nrm((H, num_pos))
    w_tag = nrm((H, num_tag))
    w_head = jnp.zeros((H, HEAD_PAD), jnp.float32)
    w_head = w_head.at[:, :num_pos].set(w_pos)
    w_head = w_head.at[:, num_pos:num_pos + num_tag].set(w_tag)
    b_head = jnp.zeros((1, HEAD_PAD), jnp.float32)

    return {
        "word_emb": nrm((vocab, H)),
        "pos_emb": nrm((max_pos, H)),
        "type_emb": nrm((type_vocab, H)),
        "emb_ln_g": jnp.ones((1, H), jnp.float32),
        "emb_ln_b": jnp.zeros((1, H), jnp.float32),
        "wqkv": jnp.stack(wqkv), "bqkv": jnp.stack(bqkv),
        "wo": jnp.stack(wo), "bo": jnp.stack(bo),
        "ln1_g": jnp.stack(ln1g), "ln1_b": jnp.stack(ln1b),
        "w1": jnp.stack(w1), "b1": jnp.stack(b1),
        "w2": jnp.stack(w2), "b2": jnp.stack(b2),
        "ln2_g": jnp.stack(ln2g), "ln2_b": jnp.stack(ln2b),
        "w_head": w_head, "b_head": b_head,
        "num_heads": nh, "num_pos": num_pos, "num_tag": num_tag,
    }


if __name__ == "__main__":
    key = jax.random.PRNGKey(0)
    pkey, dkey = jax.random.split(key)

    B, S, H = 2, 8, 32
    num_pos, num_tag = 5, 7
    vocab = 50

    params = init_params(pkey, vocab=vocab, max_pos=S, H=H, nh=4, inter=64,
                         n_layers=2, num_pos=num_pos, num_tag=num_tag)

    k1, k2, k3 = jax.random.split(dkey, 3)
    ids = jax.random.randint(k1, (B, S), 0, vocab, dtype=jnp.int32)
    token_type_ids = jnp.zeros((B, S), jnp.int32)
    mask = jnp.array([[1, 1, 1, 1, 1, 1, 0, 0],
                      [1, 1, 1, 1, 1, 1, 1, 1]], jnp.int32)
    target_pos = jax.random.randint(k2, (B, S), 0, num_pos, dtype=jnp.int32)
    target_tag = jax.random.randint(k3, (B, S), 0, num_tag, dtype=jnp.int32)

    tag, pos, loss = entity_model_forward(params, ids, mask, token_type_ids,
                                          target_pos, target_tag)
    jax.block_until_ready((tag, pos, loss))
    assert tag.shape == (B, S, num_tag)
    assert pos.shape == (B, S, num_pos)
    assert loss.shape == ()
    assert bool(jnp.isfinite(loss))
    print("KERNEL_OK")
</pallas_src>

<mosaic_0001>
module attributes {stable_mosaic.version = 11 : i64} {
  func.func @_fused_entity_kernel(%arg0: memref<16x32xf32, #tpu.memory_space<vmem>>, %arg1: memref<2x8xf32, #tpu.memory_space<vmem>>, %arg2: memref<16x1xf32, #tpu.memory_space<vmem>>, %arg3: memref<16x1xi32, #tpu.memory_space<vmem>>, %arg4: memref<16x1xi32, #tpu.memory_space<vmem>>, %arg5: memref<1x32xf32, #tpu.memory_space<vmem>>, %arg6: memref<1x32xf32, #tpu.memory_space<vmem>>, %arg7: memref<2x32x96xf32, #tpu.memory_space<vmem>>, %arg8: memref<2x1x96xf32, #tpu.memory_space<vmem>>, %arg9: memref<2x32x32xf32, #tpu.memory_space<vmem>>, %arg10: memref<2x1x32xf32, #tpu.memory_space<vmem>>, %arg11: memref<2x1x32xf32, #tpu.memory_space<vmem>>, %arg12: memref<2x1x32xf32, #tpu.memory_space<vmem>>, %arg13: memref<2x32x64xf32, #tpu.memory_space<vmem>>, %arg14: memref<2x1x64xf32, #tpu.memory_space<vmem>>, %arg15: memref<2x64x32xf32, #tpu.memory_space<vmem>>, %arg16: memref<2x1x32xf32, #tpu.memory_space<vmem>>, %arg17: memref<2x1x32xf32, #tpu.memory_space<vmem>>, %arg18: memref<2x1x32xf32, #tpu.memory_space<vmem>>, %arg19: memref<32x128xf32, #tpu.memory_space<vmem>>, %arg20: memref<1x128xf32, #tpu.memory_space<vmem>>, %arg21: memref<16x128xf32, #tpu.memory_space<vmem>>, %arg22: memref<1x1xf32, #tpu.memory_space<vmem>>) attributes {dimension_semantics = [], scalar_prefetch = 0 : i64, scratch_operands = 0 : i64, tpu.core_type = #tpu.core_type<tc>} {
    %c0 = arith.constant 0 : index
    %c0_0 = arith.constant 0 : index
    %0 = vector.load %arg1[%c0, %c0_0] : memref<2x8xf32, #tpu.memory_space<vmem>>, vector<2x8xf32>
    %c0_1 = arith.constant 0 : index
    %c0_2 = arith.constant 0 : index
    %1 = vector.load %arg0[%c0_1, %c0_2] : memref<16x32xf32, #tpu.memory_space<vmem>>, vector<16x32xf32>
    %c0_3 = arith.constant 0 : index
    %c0_4 = arith.constant 0 : index
    %2 = vector.load %arg5[%c0_3, %c0_4] : memref<1x32xf32, #tpu.memory_space<vmem>>, vector<1x32xf32>
    %c0_5 = arith.constant 0 : index
    %c0_6 = arith.constant 0 : index
    %3 = vector.load %arg6[%c0_5, %c0_6] : memref<1x32xf32, #tpu.memory_space<vmem>>, vector<1x32xf32>
    %cst = arith.constant dense<0.000000e+00> : vector<16xf32>
    %4 = vector.multi_reduction <add>, %1, %cst [1] : vector<16x32xf32> to vector<16xf32>
    %5 = vector.shape_cast %4 : vector<16xf32> to vector<16x1xf32>
    %cst_7 = arith.constant 3.200000e+01 : f32
    %6 = vector.broadcast %cst_7 : f32 to vector<16x1xf32>
    %7 = arith.divf %5, %6 : vector<16x1xf32>
    %8 = vector.broadcast %7 : vector<16x1xf32> to vector<16x32xf32>
    %9 = arith.subf %1, %8 : vector<16x32xf32>
    %10 = arith.mulf %9, %9 : vector<16x32xf32>
    %cst_8 = arith.constant dense<0.000000e+00> : vector<16xf32>
    %11 = vector.multi_reduction <add>, %10, %cst_8 [1] : vector<16x32xf32> to vector<16xf32>
    %12 = vector.shape_cast %11 : vector<16xf32> to vector<16x1xf32>
    %cst_9 = arith.constant 3.200000e+01 : f32
    %13 = vector.broadcast %cst_9 : f32 to vector<16x1xf32>
    %14 = arith.divf %12, %13 : vector<16x1xf32>
    %cst_10 = arith.constant 9.99999996E-13 : f32
    %15 = vector.broadcast %cst_10 : f32 to vector<16x1xf32>
    %16 = arith.addf %14, %15 : vector<16x1xf32>
    %17 = math.rsqrt %16 : vector<16x1xf32>
    %18 = vector.broadcast %17 : vector<16x1xf32> to vector<16x32xf32>
    %19 = arith.mulf %9, %18 : vector<16x32xf32>
    %20 = vector.broadcast %2 : vector<1x32xf32> to vector<16x32xf32>
    %21 = arith.mulf %19, %20 : vector<16x32xf32>
    %22 = vector.broadcast %3 : vector<1x32xf32> to vector<16x32xf32>
    %23 = arith.addf %21, %22 : vector<16x32xf32>
    %c0_11 = arith.constant 0 : index
    %c0_12 = arith.constant 0 : index
    %c0_13 = arith.constant 0 : index
    %24 = vector.load %arg7[%c0_11, %c0_12, %c0_13] : memref<2x32x96xf32, #tpu.memory_space<vmem>>, vector<1x32x96xf32>
    %25 = vector.shape_cast %24 : vector<1x32x96xf32> to vector<32x96xf32>
    %cst_14 = arith.constant dense<0.000000e+00> : vector<16x96xf32>
    %26 = tpu.matmul %23, %25, %cst_14 {dimension_numbers = #tpu.dot_dimension_numbers<[1], [0], [0], [1], [0, 0, 1, 1], [], []>} : vector<16x32xf32>, vector<32x96xf32>, vector<16x96xf32> -> vector<16x96xf32>
    %c0_15 = arith.constant 0 : index
    %c0_16 = arith.constant 0 : index
    %c0_17 = arith.constant 0 : index
    %27 = vector.load %arg8[%c0_15, %c0_16, %c0_17] : memref<2x1x96xf32, #tpu.memory_space<vmem>>, vector<1x1x96xf32>
    %28 = vector.shape_cast %27 : vector<1x1x96xf32> to vector<1x96xf32>
    %29 = vector.broadcast %28 : vector<1x96xf32> to vector<16x96xf32>
    %30 = arith.addf %26, %29 : vector<16x96xf32>
    %31 = vector.extract_strided_slice %30 {offsets = [0, 0], sizes = [8, 32], strides = [1, 1]} : vector<16x96xf32> to vector<8x32xf32>
    %32 = vector.extract_strided_slice %30 {offsets = [0, 32], sizes = [8, 32], strides = [1, 1]} : vector<16x96xf32> to vector<8x32xf32>
    %33 = vector.extract_strided_slice %30 {offsets = [0, 64], sizes = [8, 32], strides = [1, 1]} : vector<16x96xf32> to vector<8x32xf32>
    %34 = vector.extract_strided_slice %0 {offsets = [0, 0], sizes = [1, 8], strides = [1, 1]} : vector<2x8xf32> to vector<1x8xf32>
    %35 = vector.extract_strided_slice %31 {offsets = [0, 0], sizes = [8, 8], strides = [1, 1]} : vector<8x32xf32> to vector<8x8xf32>
    %36 = vector.extract_strided_slice %32 {offsets = [0, 0], sizes = [8, 8], strides = [1, 1]} : vector<8x32xf32> to vector<8x8xf32>
    %37 = vector.extract_strided_slice %33 {offsets = [0, 0], sizes = [8, 8], strides = [1, 1]} : vector<8x32xf32> to vector<8x8xf32>
    %cst_18 = arith.constant dense<0.000000e+00> : vector<8x8xf32>
    %38 = tpu.matmul %35, %36, %cst_18 {dimension_numbers = #tpu.dot_dimension_numbers<[1], [1], [0], [0], [0, 0, 1, 0], [], []>} : vector<8x8xf32>, vector<8x8xf32>, vector<8x8xf32> -> vector<8x8xf32>
    %cst_19 = arith.constant 0.353553385 : f32
    %39 = vector.broadcast %cst_19 : f32 to vector<8x8xf32>
    %40 = arith.mulf %38, %39 : vector<8x8xf32>
    %41 = vector.broadcast %34 : vector<1x8xf32> to vector<8x8xf32>
    %42 = arith.addf %40, %41 : vector<8x8xf32>
    %cst_20 = arith.constant dense<0xFF800000> : vector<8xf32>
    %43 = vector.multi_reduction <maximumf>, %42, %cst_20 [1] : vector<8x8xf32> to vector<8xf32>
    %44 = vector.shape_cast %43 : vector<8xf32> to vector<8x1xf32>
    %45 = vector.broadcast %44 : vector<8x1xf32> to vector<8x8xf32>
    %46 = arith.subf %42, %45 : vector<8x8xf32>
    %47 = math.exp %46 : vector<8x8xf32>
    %cst_21 = arith.constant dense<0.000000e+00> : vector<8xf32>
    %48 = vector.multi_reduction <add>, %47, %cst_21 [1] : vector<8x8xf32> to vector<8xf32>
    %49 = vector.shape_cast %48 : vector<8xf32> to vector<8x1xf32>
    %50 = tpu.reciprocal %49 {approx = true} : vector<8x1xf32> -> vector<8x1xf32>
    %51 = vector.broadcast %50 : vector<8x1xf32> to vector<8x8xf32>
    %52 = arith.mulf %47, %51 : vector<8x8xf32>
    %cst_22 = arith.constant dense<0.000000e+00> : vector<8x8xf32>
    %53 = tpu.matmul %52, %37, %cst_22 {dimension_numbers = #tpu.dot_dimension_numbers<[1], [0], [0], [1], [0, 0, 1, 1], [], []>} : vector<8x8xf32>, vector<8x8xf32>, vector<8x8xf32> -> vector<8x8xf32>
    %54 = vector.extract_strided_slice %31 {offsets = [0, 8], sizes = [8, 8], strides = [1, 1]} : vector<8x32xf32> to vector<8x8xf32>
    %55 = vector.extract_strided_slice %32 {offsets = [0, 8], sizes = [8, 8], strides = [1, 1]} : vector<8x32xf32> to vector<8x8xf32>
    %56 = vector.extract_strided_slice %33 {offsets = [0, 8], sizes = [8, 8], strides = [1, 1]} : vector<8x32xf32> to vector<8x8xf32>
    %cst_23 = arith.constant dense<0.000000e+00> : vector<8x8xf32>
    %57 = tpu.matmul %54, %55, %cst_23 {dimension_numbers = #tpu.dot_dimension_numbers<[1], [1], [0], [0], [0, 0, 1, 0], [], []>} : vector<8x8xf32>, vector<8x8xf32>, vector<8x8xf32> -> vector<8x8xf32>
    %cst_24 = arith.constant 0.353553385 : f32
    %58 = vector.broadcast %cst_24 : f32 to vector<8x8xf32>
    %59 = arith.mulf %57, %58 : vector<8x8xf32>
    %60 = vector.broadcast %34 : vector<1x8xf32> to vector<8x8xf32>
    %61 = arith.addf %59, %60 : vector<8x8xf32>
    %cst_25 = arith.constant dense<0xFF800000> : vector<8xf32>
    %62 = vector.multi_reduction <maximumf>, %61, %cst_25 [1] : vector<8x8xf32> to vector<8xf32>
    %63 = vector.shape_cast %62 : vector<8xf32> to vector<8x1xf32>
    %64 = vector.broadcast %63 : vector<8x1xf32> to vector<8x8xf32>
    %65 = arith.subf %61, %64 : vector<8x8xf32>
    %66 = math.exp %65 : vector<8x8xf32>
    %cst_26 = arith.constant dense<0.000000e+00> : vector<8xf32>
    %67 = vector.multi_reduction <add>, %66, %cst_26 [1] : vector<8x8xf32> to vector<8xf32>
    %68 = vector.shape_cast %67 : vector<8xf32> to vector<8x1xf32>
    %69 = tpu.reciprocal %68 {approx = true} : vector<8x1xf32> -> vector<8x1xf32>
    %70 = vector.broadcast %69 : vector<8x1xf32> to vector<8x8xf32>
    %71 = arith.mulf %66, %70 : vector<8x8xf32>
    %cst_27 = arith.constant dense<0.000000e+00> : vector<8x8xf32>
    %72 = tpu.matmul %71, %56, %cst_27 {dimension_numbers = #tpu.dot_dimension_numbers<[1], [0], [0], [1], [0, 0, 1, 1], [], []>} : vector<8x8xf32>, vector<8x8xf32>, vector<8x8xf32> -> vector<8x8xf32>
    %73 = vector.extract_strided_slice %31 {offsets = [0, 16], sizes = [8, 8], strides = [1, 1]} : vector<8x32xf32> to vector<8x8xf32>
    %74 = vector.extract_strided_slice %32 {offsets = [0, 16], sizes = [8, 8], strides = [1, 1]} : vector<8x32xf32> to vector<8x8xf32>
    %75 = vector.extract_strided_slice %33 {offsets = [0, 16], sizes = [8, 8], strides = [1, 1]} : vector<8x32xf32> to vector<8x8xf32>
    %cst_28 = arith.constant dense<0.000000e+00> : vector<8x8xf32>
    %76 = tpu.matmul %73, %74, %cst_28 {dimension_numbers = #tpu.dot_dimension_numbers<[1], [1], [0], [0], [0, 0, 1, 0], [], []>} : vector<8x8xf32>, vector<8x8xf32>, vector<8x8xf32> -> vector<8x8xf32>
    %cst_29 = arith.constant 0.353553385 : f32
    %77 = vector.broadcast %cst_29 : f32 to vector<8x8xf32>
    %78 = arith.mulf %76, %77 : vector<8x8xf32>
    %79 = vector.broadcast %34 : vector<1x8xf32> to vector<8x8xf32>
    %80 = arith.addf %78, %79 : vector<8x8xf32>
    %cst_30 = arith.constant dense<0xFF800000> : vector<8xf32>
    %81 = vector.multi_reduction <maximumf>, %80, %cst_30 [1] : vector<8x8xf32> to vector<8xf32>
    %82 = vector.shape_cast %81 : vector<8xf32> to vector<8x1xf32>
    %83 = vector.broadcast %82 : vector<8x1xf32> to vector<8x8xf32>
    %84 = arith.subf %80, %83 : vector<8x8xf32>
    %85 = math.exp %84 : vector<8x8xf32>
    %cst_31 = arith.constant dense<0.000000e+00> : vector<8xf32>
    %86 = vector.multi_reduction <add>, %85, %cst_31 [1] : vector<8x8xf32> to vector<8xf32>
    %87 = vector.shape_cast %86 : vector<8xf32> to vector<8x1xf32>
    %88 = tpu.reciprocal %87 {approx = true} : vector<8x1xf32> -> vector<8x1xf32>
    %89 = vector.broadcast %88 : vector<8x1xf32> to vector<8x8xf32>
    %90 = arith.mulf %85, %89 : vector<8x8xf32>
    %cst_32 = arith.constant dense<0.000000e+00> : vector<8x8xf32>
    %91 = tpu.matmul %90, %75, %cst_32 {dimension_numbers = #tpu.dot_dimension_numbers<[1], [0], [0], [1], [0, 0, 1, 1], [], []>} : vector<8x8xf32>, vector<8x8xf32>, vector<8x8xf32> -> vector<8x8xf32>
    %92 = vector.extract_strided_slice %31 {offsets = [0, 24], sizes = [8, 8], strides = [1, 1]} : vector<8x32xf32> to vector<8x8xf32>
    %93 = vector.extract_strided_slice %32 {offsets = [0, 24], sizes = [8, 8], strides = [1, 1]} : vector<8x32xf32> to vector<8x8xf32>
    %94 = vector.extract_strided_slice %33 {offsets = [0, 24], sizes = [8, 8], strides = [1, 1]} : vector<8x32xf32> to vector<8x8xf32>
    %cst_33 = arith.constant dense<0.000000e+00> : vector<8x8xf32>
    %95 = tpu.matmul %92, %93, %cst_33 {dimension_numbers = #tpu.dot_dimension_numbers<[1], [1], [0], [0], [0, 0, 1, 0], [], []>} : vector<8x8xf32>, vector<8x8xf32>, vector<8x8xf32> -> vector<8x8xf32>
    %cst_34 = arith.constant 0.353553385 : f32
    %96 = vector.broadcast %cst_34 : f32 to vector<8x8xf32>
    %97 = arith.mulf %95, %96 : vector<8x8xf32>
    %98 = vector.broadcast %34 : vector<1x8xf32> to vector<8x8xf32>
    %99 = arith.addf %97, %98 : vector<8x8xf32>
    %cst_35 = arith.constant dense<0xFF800000> : vector<8xf32>
    %100 = vector.multi_reduction <maximumf>, %99, %cst_35 [1] : vector<8x8xf32> to vector<8xf32>
    %101 = vector.shape_cast %100 : vector<8xf32> to vector<8x1xf32>
    %102 = vector.broadcast %101 : vector<8x1xf32> to vector<8x8xf32>
    %103 = arith.subf %99, %102 : vector<8x8xf32>
    %104 = math.exp %103 : vector<8x8xf32>
    %cst_36 = arith.constant dense<0.000000e+00> : vector<8xf32>
    %105 = vector.multi_reduction <add>, %104, %cst_36 [1] : vector<8x8xf32> to vector<8xf32>
    %106 = vector.shape_cast %105 : vector<8xf32> to vector<8x1xf32>
    %107 = tpu.reciprocal %106 {approx = true} : vector<8x1xf32> -> vector<8x1xf32>
    %108 = vector.broadcast %107 : vector<8x1xf32> to vector<8x8xf32>
    %109 = arith.mulf %104, %108 : vector<8x8xf32>
    %cst_37 = arith.constant dense<0.000000e+00> : vector<8x8xf32>
    %110 = tpu.matmul %109, %94, %cst_37 {dimension_numbers = #tpu.dot_dimension_numbers<[1], [0], [0], [1], [0, 0, 1, 1], [], []>} : vector<8x8xf32>, vector<8x8xf32>, vector<8x8xf32> -> vector<8x8xf32>
    %111 = tpu.concatenate %53, %72, %91, %110 in 1 : vector<8x8xf32>, vector<8x8xf32>, vector<8x8xf32>, vector<8x8xf32> -> vector<8x32xf32>
    %112 = vector.extract_strided_slice %30 {offsets = [8, 0], sizes = [8, 32], strides = [1, 1]} : vector<16x96xf32> to vector<8x32xf32>
    %113 = vector.extract_strided_slice %30 {offsets = [8, 32], sizes = [8, 32], strides = [1, 1]} : vector<16x96xf32> to vector<8x32xf32>
    %114 = vector.extract_strided_slice %30 {offsets = [8, 64], sizes = [8, 32], strides = [1, 1]} : vector<16x96xf32> to vector<8x32xf32>
    %115 = vector.extract_strided_slice %0 {offsets = [1, 0], sizes = [1, 8], strides = [1, 1]} : vector<2x8xf32> to vector<1x8xf32>
    %116 = vector.extract_strided_slice %112 {offsets = [0, 0], sizes = [8, 8], strides = [1, 1]} : vector<8x32xf32> to vector<8x8xf32>
    %117 = vector.extract_strided_slice %113 {offsets = [0, 0], sizes = [8, 8], strides = [1, 1]} : vector<8x32xf32> to vector<8x8xf32>
    %118 = vector.extract_strided_slice %114 {offsets = [0, 0], sizes = [8, 8], strides = [1, 1]} : vector<8x32xf32> to vector<8x8xf32>
    %cst_38 = arith.constant dense<0.000000e+00> : vector<8x8xf32>
    %119 = tpu.matmul %116, %117, %cst_38 {dimension_numbers = #tpu.dot_dimension_numbers<[1], [1], [0], [0], [0, 0, 1, 0], [], []>} : vector<8x8xf32>, vector<8x8xf32>, vector<8x8xf32> -> vector<8x8xf32>
    %cst_39 = arith.constant 0.353553385 : f32
    %120 = vector.broadcast %cst_39 : f32 to vector<8x8xf32>
    %121 = arith.mulf %119, %120 : vector<8x8xf32>
    %122 = vector.broadcast %115 : vector<1x8xf32> to vector<8x8xf32>
    %123 = arith.addf %121, %122 : vector<8x8xf32>
    %cst_40 = arith.constant dense<0xFF800000> : vector<8xf32>
    %124 = vector.multi_reduction <maximumf>, %123, %cst_40 [1] : vector<8x8xf32> to vector<8xf32>
    %125 = vector.shape_cast %124 : vector<8xf32> to vector<8x1xf32>
    %126 = vector.broadcast %125 : vector<8x1xf32> to vector<8x8xf32>
    %127 = arith.subf %123, %126 : vector<8x8xf32>
    %128 = math.exp %127 : vector<8x8xf32>
    %cst_41 = arith.constant dense<0.000000e+00> : vector<8xf32>
    %129 = vector.multi_reduction <add>, %128, %cst_41 [1] : vector<8x8xf32> to vector<8xf32>
    %130 = vector.shape_cast %129 : vector<8xf32> to vector<8x1xf32>
    %131 = tpu.reciprocal %130 {approx = true} : vector<8x1xf32> -> vector<8x1xf32>
    %132 = vector.broadcast %131 : vector<8x1xf32> to vector<8x8xf32>
    %133 = arith.mulf %128, %132 : vector<8x8xf32>
    %cst_42 = arith.constant dense<0.000000e+00> : vector<8x8xf32>
    %134 = tpu.matmul %133, %118, %cst_42 {dimension_numbers = #tpu.dot_dimension_numbers<[1], [0], [0], [1], [0, 0, 1, 1], [], []>} : vector<8x8xf32>, vector<8x8xf32>, vector<8x8xf32> -> vector<8x8xf32>
    %135 = vector.extract_strided_slice %112 {offsets = [0, 8], sizes = [8, 8], strides = [1, 1]} : vector<8x32xf32> to vector<8x8xf32>
    %136 = vector.extract_strided_slice %113 {offsets = [0, 8], sizes = [8, 8], strides = [1, 1]} : vector<8x32xf32> to vector<8x8xf32>
    %137 = vector.extract_strided_slice %114 {offsets = [0, 8], sizes = [8, 8], strides = [1, 1]} : vector<8x32xf32> to vector<8x8xf32>
    %cst_43 = arith.constant dense<0.000000e+00> : vector<8x8xf32>
    %138 = tpu.matmul %135, %136, %cst_43 {dimension_numbers = #tpu.dot_dimension_numbers<[1], [1], [0], [0], [0, 0, 1, 0], [], []>} : vector<8x8xf32>, vector<8x8xf32>, vector<8x8xf32> -> vector<8x8xf32>
    %cst_44 = arith.constant 0.353553385 : f32
    %139 = vector.broadcast %cst_44 : f32 to vector<8x8xf32>
    %140 = arith.mulf %138, %139 : vector<8x8xf32>
    %141 = vector.broadcast %115 : vector<1x8xf32> to vector<8x8xf32>
    %142 = arith.addf %140, %141 : vector<8x8xf32>
    %cst_45 = arith.constant dense<0xFF800000> : vector<8xf32>
    %143 = vector.multi_reduction <maximumf>, %142, %cst_45 [1] : vector<8x8xf32> to vector<8xf32>
    %144 = vector.shape_cast %143 : vector<8xf32> to vector<8x1xf32>
    %145 = vector.broadcast %144 : vector<8x1xf32> to vector<8x8xf32>
    %146 = arith.subf %142, %145 : vector<8x8xf32>
    %147 = math.exp %146 : vector<8x8xf32>
    %cst_46 = arith.constant dense<0.000000e+00> : vector<8xf32>
    %148 = vector.multi_reduction <add>, %147, %cst_46 [1] : vector<8x8xf32> to vector<8xf32>
    %149 = vector.shape_cast %148 : vector<8xf32> to vector<8x1xf32>
    %150 = tpu.reciprocal %149 {approx = true} : vector<8x1xf32> -> vector<8x1xf32>
    %151 = vector.broadcast %150 : vector<8x1xf32> to vector<8x8xf32>
    %152 = arith.mulf %147, %151 : vector<8x8xf32>
    %cst_47 = arith.constant dense<0.000000e+00> : vector<8x8xf32>
    %153 = tpu.matmul %152, %137, %cst_47 {dimension_numbers = #tpu.dot_dimension_numbers<[1], [0], [0], [1], [0, 0, 1, 1], [], []>} : vector<8x8xf32>, vector<8x8xf32>, vector<8x8xf32> -> vector<8x8xf32>
    %154 = vector.extract_strided_slice %112 {offsets = [0, 16], sizes = [8, 8], strides = [1, 1]} : vector<8x32xf32> to vector<8x8xf32>
    %155 = vector.extract_strided_slice %113 {offsets = [0, 16], sizes = [8, 8], strides = [1, 1]} : vector<8x32xf32> to vector<8x8xf32>
    %156 = vector.extract_strided_slice %114 {offsets = [0, 16], sizes = [8, 8], strides = [1, 1]} : vector<8x32xf32> to vector<8x8xf32>
    %cst_48 = arith.constant dense<0.000000e+00> : vector<8x8xf32>
    %157 = tpu.matmul %154, %155, %cst_48 {dimension_numbers = #tpu.dot_dimension_numbers<[1], [1], [0], [0], [0, 0, 1, 0], [], []>} : vector<8x8xf32>, vector<8x8xf32>, vector<8x8xf32> -> vector<8x8xf32>
    %cst_49 = arith.constant 0.353553385 : f32
    %158 = vector.broadcast %cst_49 : f32 to vector<8x8xf32>
    %159 = arith.mulf %157, %158 : vector<8x8xf32>
    %160 = vector.broadcast %115 : vector<1x8xf32> to vector<8x8xf32>
    %161 = arith.addf %159, %160 : vector<8x8xf32>
    %cst_50 = arith.constant dense<0xFF800000> : vector<8xf32>
    %162 = vector.multi_reduction <maximumf>, %161, %cst_50 [1] : vector<8x8xf32> to vector<8xf32>
    %163 = vector.shape_cast %162 : vector<8xf32> to vector<8x1xf32>
    %164 = vector.broadcast %163 : vector<8x1xf32> to vector<8x8xf32>
    %165 = arith.subf %161, %164 : vector<8x8xf32>
    %166 = math.exp %165 : vector<8x8xf32>
    %cst_51 = arith.constant dense<0.000000e+00> : vector<8xf32>
    %167 = vector.multi_reduction <add>, %166, %cst_51 [1] : vector<8x8xf32> to vector<8xf32>
    %168 = vector.shape_cast %167 : vector<8xf32> to vector<8x1xf32>
    %169 = tpu.reciprocal %168 {approx = true} : vector<8x1xf32> -> vector<8x1xf32>
    %170 = vector.broadcast %169 : vector<8x1xf32> to vector<8x8xf32>
    %171 = arith.mulf %166, %170 : vector<8x8xf32>
    %cst_52 = arith.constant dense<0.000000e+00> : vector<8x8xf32>
    %172 = tpu.matmul %171, %156, %cst_52 {dimension_numbers = #tpu.dot_dimension_numbers<[1], [0], [0], [1], [0, 0, 1, 1], [], []>} : vector<8x8xf32>, vector<8x8xf32>, vector<8x8xf32> -> vector<8x8xf32>
    %173 = vector.extract_strided_slice %112 {offsets = [0, 24], sizes = [8, 8], strides = [1, 1]} : vector<8x32xf32> to vector<8x8xf32>
    %174 = vector.extract_strided_slice %113 {offsets = [0, 24], sizes = [8, 8], strides = [1, 1]} : vector<8x32xf32> to vector<8x8xf32>
    %175 = vector.extract_strided_slice %114 {offsets = [0, 24], sizes = [8, 8], strides = [1, 1]} : vector<8x32xf32> to vector<8x8xf32>
    %cst_53 = arith.constant dense<0.000000e+00> : vector<8x8xf32>
    %176 = tpu.matmul %173, %174, %cst_53 {dimension_numbers = #tpu.dot_dimension_numbers<[1], [1], [0], [0], [0, 0, 1, 0], [], []>} : vector<8x8xf32>, vector<8x8xf32>, vector<8x8xf32> -> vector<8x8xf32>
    %cst_54 = arith.constant 0.353553385 : f32
    %177 = vector.broadcast %cst_54 : f32 to vector<8x8xf32>
    %178 = arith.mulf %176, %177 : vector<8x8xf32>
    %179 = vector.broadcast %115 : vector<1x8xf32> to vector<8x8xf32>
    %180 = arith.addf %178, %179 : vector<8x8xf32>
    %cst_55 = arith.constant dense<0xFF800000> : vector<8xf32>
    %181 = vector.multi_reduction <maximumf>, %180, %cst_55 [1] : vector<8x8xf32> to vector<8xf32>
    %182 = vector.shape_cast %181 : vector<8xf32> to vector<8x1xf32>
    %183 = vector.broadcast %182 : vector<8x1xf32> to vector<8x8xf32>
    %184 = arith.subf %180, %183 : vector<8x8xf32>
    %185 = math.exp %184 : vector<8x8xf32>
    %cst_56 = arith.constant dense<0.000000e+00> : vector<8xf32>
    %186 = vector.multi_reduction <add>, %185, %cst_56 [1] : vector<8x8xf32> to vector<8xf32>
    %187 = vector.shape_cast %186 : vector<8xf32> to vector<8x1xf32>
    %188 = tpu.reciprocal %187 {approx = true} : vector<8x1xf32> -> vector<8x1xf32>
    %189 = vector.broadcast %188 : vector<8x1xf32> to vector<8x8xf32>
    %190 = arith.mulf %185, %189 : vector<8x8xf32>
    %cst_57 = arith.constant dense<0.000000e+00> : vector<8x8xf32>
    %191 = tpu.matmul %190, %175, %cst_57 {dimension_numbers = #tpu.dot_dimension_numbers<[1], [0], [0], [1], [0, 0, 1, 1], [], []>} : vector<8x8xf32>, vector<8x8xf32>, vector<8x8xf32> -> vector<8x8xf32>
    %192 = tpu.concatenate %134, %153, %172, %191 in 1 : vector<8x8xf32>, vector<8x8xf32>, vector<8x8xf32>, vector<8x8xf32> -> vector<8x32xf32>
    %193 = tpu.concatenate %111, %192 in 0 : vector<8x32xf32>, vector<8x32xf32> -> vector<16x32xf32>
    %c0_58 = arith.constant 0 : index
    %c0_59 = arith.constant 0 : index
    %c0_60 = arith.constant 0 : index
    %194 = vector.load %arg9[%c0_58, %c0_59, %c0_60] : memref<2x32x32xf32, #tpu.memory_space<vmem>>, vector<1x32x32xf32>
    %195 = vector.shape_cast %194 : vector<1x32x32xf32> to vector<32x32xf32>
    %cst_61 = arith.constant dense<0.000000e+00> : vector<16x32xf32>
    %196 = tpu.matmul %193, %195, %cst_61 {dimension_numbers = #tpu.dot_dimension_numbers<[1], [0], [0], [1], [0, 0, 1, 1], [], []>} : vector<16x32xf32>, vector<32x32xf32>, vector<16x32xf32> -> vector<16x32xf32>
    %c0_62 = arith.constant 0 : index
    %c0_63 = arith.constant 0 : index
    %c0_64 = arith.constant 0 : index
    %197 = vector.load %arg10[%c0_62, %c0_63, %c0_64] : memref<2x1x32xf32, #tpu.memory_space<vmem>>, vector<1x1x32xf32>
    %198 = vector.shape_cast %197 : vector<1x1x32xf32> to vector<1x32xf32>
    %199 = vector.broadcast %198 : vector<1x32xf32> to vector<16x32xf32>
    %200 = arith.addf %196, %199 : vector<16x32xf32>
    %201 = arith.addf %200, %23 : vector<16x32xf32>
    %c0_65 = arith.constant 0 : index
    %c0_66 = arith.constant 0 : index
    %c0_67 = arith.constant 0 : index
    %202 = vector.load %arg11[%c0_65, %c0_66, %c0_67] : memref<2x1x32xf32, #tpu.memory_space<vmem>>, vector<1x1x32xf32>
    %203 = vector.shape_cast %202 : vector<1x1x32xf32> to vector<1x32xf32>
    %c0_68 = arith.constant 0 : index
    %c0_69 = arith.constant 0 : index
    %c0_70 = arith.constant 0 : index
    %204 = vector.load %arg12[%c0_68, %c0_69, %c0_70] : memref<2x1x32xf32, #tpu.memory_space<vmem>>, vector<1x1x32xf32>
    %205 = vector.shape_cast %204 : vector<1x1x32xf32> to vector<1x32xf32>
    %cst_71 = arith.constant dense<0.000000e+00> : vector<16xf32>
    %206 = vector.multi_reduction <add>, %201, %cst_71 [1] : vector<16x32xf32> to vector<16xf32>
    %207 = vector.shape_cast %206 : vector<16xf32> to vector<16x1xf32>
    %cst_72 = arith.constant 3.200000e+01 : f32
    %208 = vector.broadcast %cst_72 : f32 to vector<16x1xf32>
    %209 = arith.divf %207, %208 : vector<16x1xf32>
    %210 = vector.broadcast %209 : vector<16x1xf32> to vector<16x32xf32>
    %211 = arith.subf %201, %210 : vector<16x32xf32>
    %212 = arith.mulf %211, %211 : vector<16x32xf32>
    %cst_73 = arith.constant dense<0.000000e+00> : vector<16xf32>
    %213 = vector.multi_reduction <add>, %212, %cst_73 [1] : vector<16x32xf32> to vector<16xf32>
    %214 = vector.shape_cast %213 : vector<16xf32> to vector<16x1xf32>
    %cst_74 = arith.constant 3.200000e+01 : f32
    %215 = vector.broadcast %cst_74 : f32 to vector<16x1xf32>
    %216 = arith.divf %214, %215 : vector<16x1xf32>
    %cst_75 = arith.constant 9.99999996E-13 : f32
    %217 = vector.broadcast %cst_75 : f32 to vector<16x1xf32>
    %218 = arith.addf %216, %217 : vector<16x1xf32>
    %219 = math.rsqrt %218 : vector<16x1xf32>
    %220 = vector.broadcast %219 : vector<16x1xf32> to vector<16x32xf32>
    %221 = arith.mulf %211, %220 : vector<16x32xf32>
    %222 = vector.broadcast %203 : vector<1x32xf32> to vector<16x32xf32>
    %223 = arith.mulf %221, %222 : vector<16x32xf32>
    %224 = vector.broadcast %205 : vector<1x32xf32> to vector<16x32xf32>
    %225 = arith.addf %223, %224 : vector<16x32xf32>
    %c0_76 = arith.constant 0 : index
    %c0_77 = arith.constant 0 : index
    %c0_78 = arith.constant 0 : index
    %226 = vector.load %arg13[%c0_76, %c0_77, %c0_78] : memref<2x32x64xf32, #tpu.memory_space<vmem>>, vector<1x32x64xf32>
    %227 = vector.shape_cast %226 : vector<1x32x64xf32> to vector<32x64xf32>
    %cst_79 = arith.constant dense<0.000000e+00> : vector<16x64xf32>
    %228 = tpu.matmul %225, %227, %cst_79 {dimension_numbers = #tpu.dot_dimension_numbers<[1], [0], [0], [1], [0, 0, 1, 1], [], []>} : vector<16x32xf32>, vector<32x64xf32>, vector<16x64xf32> -> vector<16x64xf32>
    %c0_80 = arith.constant 0 : index
    %c0_81 = arith.constant 0 : index
    %c0_82 = arith.constant 0 : index
    %229 = vector.load %arg14[%c0_80, %c0_81, %c0_82] : memref<2x1x64xf32, #tpu.memory_space<vmem>>, vector<1x1x64xf32>
    %230 = vector.shape_cast %229 : vector<1x1x64xf32> to vector<1x64xf32>
    %231 = vector.broadcast %230 : vector<1x64xf32> to vector<16x64xf32>
    %232 = arith.addf %228, %231 : vector<16x64xf32>
    %cst_83 = arith.constant 0.707106769 : f32
    %233 = vector.broadcast %cst_83 : f32 to vector<16x64xf32>
    %234 = arith.mulf %232, %233 : vector<16x64xf32>
    %235 = math.absf %234 : vector<16x64xf32>
    %cst_84 = arith.constant 0.327591091 : f32
    %236 = vector.broadcast %cst_84 : f32 to vector<16x64xf32>
    %237 = arith.mulf %236, %235 : vector<16x64xf32>
    %cst_85 = arith.constant 1.000000e+00 : f32
    %238 = vector.broadcast %cst_85 : f32 to vector<16x64xf32>
    %239 = arith.addf %238, %237 : vector<16x64xf32>
    %cst_86 = arith.constant 1.000000e+00 : f32
    %240 = vector.broadcast %cst_86 : f32 to vector<16x64xf32>
    %241 = arith.divf %240, %239 : vector<16x64xf32>
    %cst_87 = arith.constant 1.06140542 : f32
    %242 = vector.broadcast %cst_87 : f32 to vector<16x64xf32>
    %243 = arith.mulf %241, %242 : vector<16x64xf32>
    %cst_88 = arith.constant -1.45315206 : f32
    %244 = vector.broadcast %cst_88 : f32 to vector<16x64xf32>
    %245 = arith.addf %244, %243 : vector<16x64xf32>
    %246 = arith.mulf %241, %245 : vector<16x64xf32>
    %cst_89 = arith.constant 1.42141378 : f32
    %247 = vector.broadcast %cst_89 : f32 to vector<16x64xf32>
    %248 = arith.addf %247, %246 : vector<16x64xf32>
    %249 = arith.mulf %241, %248 : vector<16x64xf32>
    %cst_90 = arith.constant -0.284496725 : f32
    %250 = vector.broadcast %cst_90 : f32 to vector<16x64xf32>
    %251 = arith.addf %250, %249 : vector<16x64xf32>
    %252 = arith.mulf %241, %251 : vector<16x64xf32>
    %cst_91 = arith.constant 0.254829586 : f32
    %253 = vector.broadcast %cst_91 : f32 to vector<16x64xf32>
    %254 = arith.addf %253, %252 : vector<16x64xf32>
    %255 = arith.mulf %241, %254 : vector<16x64xf32>
    %cst_92 = arith.constant 0.000000e+00 : f32
    %256 = vector.broadcast %cst_92 : f32 to vector<16x64xf32>
    %257 = arith.subf %256, %235 : vector<16x64xf32>
    %258 = arith.mulf %257, %235 : vector<16x64xf32>
    %259 = math.exp %258 : vector<16x64xf32>
    %260 = arith.mulf %255, %259 : vector<16x64xf32>
    %cst_93 = arith.constant 1.000000e+00 : f32
    %261 = vector.broadcast %cst_93 : f32 to vector<16x64xf32>
    %262 = arith.subf %261, %260 : vector<16x64xf32>
    %cst_94 = arith.constant 0.000000e+00 : f32
    %263 = vector.broadcast %cst_94 : f32 to vector<16x64xf32>
    %264 = arith.cmpf oge, %234, %263 : vector<16x64xf32>
    %cst_95 = arith.constant 0.000000e+00 : f32
    %265 = vector.broadcast %cst_95 : f32 to vector<16x64xf32>
    %266 = arith.subf %265, %262 : vector<16x64xf32>
    %267 = arith.select %264, %262, %266 : vector<16x64xi1>, vector<16x64xf32>
    %cst_96 = arith.constant 5.000000e-01 : f32
    %268 = vector.broadcast %cst_96 : f32 to vector<16x64xf32>
    %269 = arith.mulf %268, %232 : vector<16x64xf32>
    %cst_97 = arith.constant 1.000000e+00 : f32
    %270 = vector.broadcast %cst_97 : f32 to vector<16x64xf32>
    %271 = arith.addf %270, %267 : vector<16x64xf32>
    %272 = arith.mulf %269, %271 : vector<16x64xf32>
    %c0_98 = arith.constant 0 : index
    %c0_99 = arith.constant 0 : index
    %c0_100 = arith.constant 0 : index
    %273 = vector.load %arg15[%c0_98, %c0_99, %c0_100] : memref<2x64x32xf32, #tpu.memory_space<vmem>>, vector<1x64x32xf32>
    %274 = vector.shape_cast %273 : vector<1x64x32xf32> to vector<64x32xf32>
    %cst_101 = arith.constant dense<0.000000e+00> : vector<16x32xf32>
    %275 = tpu.matmul %272, %274, %cst_101 {dimension_numbers = #tpu.dot_dimension_numbers<[1], [0], [0], [1], [0, 0, 1, 1], [], []>} : vector<16x64xf32>, vector<64x32xf32>, vector<16x32xf32> -> vector<16x32xf32>
    %c0_102 = arith.constant 0 : index
    %c0_103 = arith.constant 0 : index
    %c0_104 = arith.constant 0 : index
    %276 = vector.load %arg16[%c0_102, %c0_103, %c0_104] : memref<2x1x32xf32, #tpu.memory_space<vmem>>, vector<1x1x32xf32>
    %277 = vector.shape_cast %276 : vector<1x1x32xf32> to vector<1x32xf32>
    %278 = vector.broadcast %277 : vector<1x32xf32> to vector<16x32xf32>
    %279 = arith.addf %275, %278 : vector<16x32xf32>
    %280 = arith.addf %279, %225 : vector<16x32xf32>
    %c0_105 = arith.constant 0 : index
    %c0_106 = arith.constant 0 : index
    %c0_107 = arith.constant 0 : index
    %281 = vector.load %arg17[%c0_105, %c0_106, %c0_107] : memref<2x1x32xf32, #tpu.memory_space<vmem>>, vector<1x1x32xf32>
    %282 = vector.shape_cast %281 : vector<1x1x32xf32> to vector<1x32xf32>
    %c0_108 = arith.constant 0 : index
    %c0_109 = arith.constant 0 : index
    %c0_110 = arith.constant 0 : index
    %283 = vector.load %arg18[%c0_108, %c0_109, %c0_110] : memref<2x1x32xf32, #tpu.memory_space<vmem>>, vector<1x1x32xf32>
    %284 = vector.shape_cast %283 : vector<1x1x32xf32> to vector<1x32xf32>
    %cst_111 = arith.constant dense<0.000000e+00> : vector<16xf32>
    %285 = vector.multi_reduction <add>, %280, %cst_111 [1] : vector<16x32xf32> to vector<16xf32>
    %286 = vector.shape_cast %285 : vector<16xf32> to vector<16x1xf32>
    %cst_112 = arith.constant 3.200000e+01 : f32
    %287 = vector.broadcast %cst_112 : f32 to vector<16x1xf32>
    %288 = arith.divf %286, %287 : vector<16x1xf32>
    %289 = vector.broadcast %288 : vector<16x1xf32> to vector<16x32xf32>
    %290 = arith.subf %280, %289 : vector<16x32xf32>
    %291 = arith.mulf %290, %290 : vector<16x32xf32>
    %cst_113 = arith.constant dense<0.000000e+00> : vector<16xf32>
    %292 = vector.multi_reduction <add>, %291, %cst_113 [1] : vector<16x32xf32> to vector<16xf32>
    %293 = vector.shape_cast %292 : vector<16xf32> to vector<16x1xf32>
    %cst_114 = arith.constant 3.200000e+01 : f32
    %294 = vector.broadcast %cst_114 : f32 to vector<16x1xf32>
    %295 = arith.divf %293, %294 : vector<16x1xf32>
    %cst_115 = arith.constant 9.99999996E-13 : f32
    %296 = vector.broadcast %cst_115 : f32 to vector<16x1xf32>
    %297 = arith.addf %295, %296 : vector<16x1xf32>
    %298 = math.rsqrt %297 : vector<16x1xf32>
    %299 = vector.broadcast %298 : vector<16x1xf32> to vector<16x32xf32>
    %300 = arith.mulf %290, %299 : vector<16x32xf32>
    %301 = vector.broadcast %282 : vector<1x32xf32> to vector<16x32xf32>
    %302 = arith.mulf %300, %301 : vector<16x32xf32>
    %303 = vector.broadcast %284 : vector<1x32xf32> to vector<16x32xf32>
    %304 = arith.addf %302, %303 : vector<16x32xf32>
    %c1 = arith.constant 1 : index
    %c0_116 = arith.constant 0 : index
    %c0_117 = arith.constant 0 : index
    %305 = vector.load %arg7[%c1, %c0_116, %c0_117] : memref<2x32x96xf32, #tpu.memory_space<vmem>>, vector<1x32x96xf32>
    %306 = vector.shape_cast %305 : vector<1x32x96xf32> to vector<32x96xf32>
    %cst_118 = arith.constant dense<0.000000e+00> : vector<16x96xf32>
    %307 = tpu.matmul %304, %306, %cst_118 {dimension_numbers = #tpu.dot_dimension_numbers<[1], [0], [0], [1], [0, 0, 1, 1], [], []>} : vector<16x32xf32>, vector<32x96xf32>, vector<16x96xf32> -> vector<16x96xf32>
    %c1_119 = arith.constant 1 : index
    %c0_120 = arith.constant 0 : index
    %c0_121 = arith.constant 0 : index
    %308 = vector.load %arg8[%c1_119, %c0_120, %c0_121] : memref<2x1x96xf32, #tpu.memory_space<vmem>>, vector<1x1x96xf32>
    %309 = vector.shape_cast %308 : vector<1x1x96xf32> to vector<1x96xf32>
    %310 = vector.broadcast %309 : vector<1x96xf32> to vector<16x96xf32>
    %311 = arith.addf %307, %310 : vector<16x96xf32>
    %312 = vector.extract_strided_slice %311 {offsets = [0, 0], sizes = [8, 32], strides = [1, 1]} : vector<16x96xf32> to vector<8x32xf32>
    %313 = vector.extract_strided_slice %311 {offsets = [0, 32], sizes = [8, 32], strides = [1, 1]} : vector<16x96xf32> to vector<8x32xf32>
    %314 = vector.extract_strided_slice %311 {offsets = [0, 64], sizes = [8, 32], strides = [1, 1]} : vector<16x96xf32> to vector<8x32xf32>
    %315 = vector.extract_strided_slice %0 {offsets = [0, 0], sizes = [1, 8], strides = [1, 1]} : vector<2x8xf32> to vector<1x8xf32>
    %316 = vector.extract_strided_slice %312 {offsets = [0, 0], sizes = [8, 8], strides = [1, 1]} : vector<8x32xf32> to vector<8x8xf32>
    %317 = vector.extract_strided_slice %313 {offsets = [0, 0], sizes = [8, 8], strides = [1, 1]} : vector<8x32xf32> to vector<8x8xf32>
    %318 = vector.extract_strided_slice %314 {offsets = [0, 0], sizes = [8, 8], strides = [1, 1]} : vector<8x32xf32> to vector<8x8xf32>
    %cst_122 = arith.constant dense<0.000000e+00> : vector<8x8xf32>
    %319 = tpu.matmul %316, %317, %cst_122 {dimension_numbers = #tpu.dot_dimension_numbers<[1], [1], [0], [0], [0, 0, 1, 0], [], []>} : vector<8x8xf32>, vector<8x8xf32>, vector<8x8xf32> -> vector<8x8xf32>
    %cst_123 = arith.constant 0.353553385 : f32
    %320 = vector.broadcast %cst_123 : f32 to vector<8x8xf32>
    %321 = arith.mulf %319, %320 : vector<8x8xf32>
    %322 = vector.broadcast %315 : vector<1x8xf32> to vector<8x8xf32>
    %323 = arith.addf %321, %322 : vector<8x8xf32>
    %cst_124 = arith.constant dense<0xFF800000> : vector<8xf32>
    %324 = vector.multi_reduction <maximumf>, %323, %cst_124 [1] : vector<8x8xf32> to vector<8xf32>
    %325 = vector.shape_cast %324 : vector<8xf32> to vector<8x1xf32>
    %326 = vector.broadcast %325 : vector<8x1xf32> to vector<8x8xf32>
    %327 = arith.subf %323, %326 : vector<8x8xf32>
    %328 = math.exp %327 : vector<8x8xf32>
    %cst_125 = arith.constant dense<0.000000e+00> : vector<8xf32>
    %329 = vector.multi_reduction <add>, %328, %cst_125 [1] : vector<8x8xf32> to vector<8xf32>
    %330 = vector.shape_cast %329 : vector<8xf32> to vector<8x1xf32>
    %331 = tpu.reciprocal %330 {approx = true} : vector<8x1xf32> -> vector<8x1xf32>
    %332 = vector.broadcast %331 : vector<8x1xf32> to vector<8x8xf32>
    %333 = arith.mulf %328, %332 : vector<8x8xf32>
    %cst_126 = arith.constant dense<0.000000e+00> : vector<8x8xf32>
    %334 = tpu.matmul %333, %318, %cst_126 {dimension_numbers = #tpu.dot_dimension_numbers<[1], [0], [0], [1], [0, 0, 1, 1], [], []>} : vector<8x8xf32>, vector<8x8xf32>, vector<8x8xf32> -> vector<8x8xf32>
    %335 = vector.extract_strided_slice %312 {offsets = [0, 8], sizes = [8, 8], strides = [1, 1]} : vector<8x32xf32> to vector<8x8xf32>
    %336 = vector.extract_strided_slice %313 {offsets = [0, 8], sizes = [8, 8], strides = [1, 1]} : vector<8x32xf32> to vector<8x8xf32>
    %337 = vector.extract_strided_slice %314 {offsets = [0, 8], sizes = [8, 8], strides = [1, 1]} : vector<8x32xf32> to vector<8x8xf32>
    %cst_127 = arith.constant dense<0.000000e+00> : vector<8x8xf32>
    %338 = tpu.matmul %335, %336, %cst_127 {dimension_numbers = #tpu.dot_dimension_numbers<[1], [1], [0], [0], [0, 0, 1, 0], [], []>} : vector<8x8xf32>, vector<8x8xf32>, vector<8x8xf32> -> vector<8x8xf32>
    %cst_128 = arith.constant 0.353553385 : f32
    %339 = vector.broadcast %cst_128 : f32 to vector<8x8xf32>
    %340 = arith.mulf %338, %339 : vector<8x8xf32>
    %341 = vector.broadcast %315 : vector<1x8xf32> to vector<8x8xf32>
    %342 = arith.addf %340, %341 : vector<8x8xf32>
    %cst_129 = arith.constant dense<0xFF800000> : vector<8xf32>
    %343 = vector.multi_reduction <maximumf>, %342, %cst_129 [1] : vector<8x8xf32> to vector<8xf32>
    %344 = vector.shape_cast %343 : vector<8xf32> to vector<8x1xf32>
    %345 = vector.broadcast %344 : vector<8x1xf32> to vector<8x8xf32>
    %346 = arith.subf %342, %345 : vector<8x8xf32>
    %347 = math.exp %346 : vector<8x8xf32>
    %cst_130 = arith.constant dense<0.000000e+00> : vector<8xf32>
    %348 = vector.multi_reduction <add>, %347, %cst_130 [1] : vector<8x8xf32> to vector<8xf32>
    %349 = vector.shape_cast %348 : vector<8xf32> to vector<8x1xf32>
    %350 = tpu.reciprocal %349 {approx = true} : vector<8x1xf32> -> vector<8x1xf32>
    %351 = vector.broadcast %350 : vector<8x1xf32> to vector<8x8xf32>
    %352 = arith.mulf %347, %351 : vector<8x8xf32>
    %cst_131 = arith.constant dense<0.000000e+00> : vector<8x8xf32>
    %353 = tpu.matmul %352, %337, %cst_131 {dimension_numbers = #tpu.dot_dimension_numbers<[1], [0], [0], [1], [0, 0, 1, 1], [], []>} : vector<8x8xf32>, vector<8x8xf32>, vector<8x8xf32> -> vector<8x8xf32>
    %354 = vector.extract_strided_slice %312 {offsets = [0, 16], sizes = [8, 8], strides = [1, 1]} : vector<8x32xf32> to vector<8x8xf32>
    %355 = vector.extract_strided_slice %313 {offsets = [0, 16], sizes = [8, 8], strides = [1, 1]} : vector<8x32xf32> to vector<8x8xf32>
    %356 = vector.extract_strided_slice %314 {offsets = [0, 16], sizes = [8, 8], strides = [1, 1]} : vector<8x32xf32> to vector<8x8xf32>
    %cst_132 = arith.constant dense<0.000000e+00> : vector<8x8xf32>
    %357 = tpu.matmul %354, %355, %cst_132 {dimension_numbers = #tpu.dot_dimension_numbers<[1], [1], [0], [0], [0, 0, 1, 0], [], []>} : vector<8x8xf32>, vector<8x8xf32>, vector<8x8xf32> -> vector<8x8xf32>
    %cst_133 = arith.constant 0.353553385 : f32
    %358 = vector.broadcast %cst_133 : f32 to vector<8x8xf32>
    %359 = arith.mulf %357, %358 : vector<8x8xf32>
    %360 = vector.broadcast %315 : vector<1x8xf32> to vector<8x8xf32>
    %361 = arith.addf %359, %360 : vector<8x8xf32>
    %cst_134 = arith.constant dense<0xFF800000> : vector<8xf32>
    %362 = vector.multi_reduction <maximumf>, %361, %cst_134 [1] : vector<8x8xf32> to vector<8xf32>
    %363 = vector.shape_cast %362 : vector<8xf32> to vector<8x1xf32>
    %364 = vector.broadcast %363 : vector<8x1xf32> to vector<8x8xf32>
    %365 = arith.subf %361, %364 : vector<8x8xf32>
    %366 = math.exp %365 : vector<8x8xf32>
    %cst_135 = arith.constant dense<0.000000e+00> : vector<8xf32>
    %367 = vector.multi_reduction <add>, %366, %cst_135 [1] : vector<8x8xf32> to vector<8xf32>
    %368 = vector.shape_cast %367 : vector<8xf32> to vector<8x1xf32>
    %369 = tpu.reciprocal %368 {approx = true} : vector<8x1xf32> -> vector<8x1xf32>
    %370 = vector.broadcast %369 : vector<8x1xf32> to vector<8x8xf32>
    %371 = arith.mulf %366, %370 : vector<8x8xf32>
    %cst_136 = arith.constant dense<0.000000e+00> : vector<8x8xf32>
    %372 = tpu.matmul %371, %356, %cst_136 {dimension_numbers = #tpu.dot_dimension_numbers<[1], [0], [0], [1], [0, 0, 1, 1], [], []>} : vector<8x8xf32>, vector<8x8xf32>, vector<8x8xf32> -> vector<8x8xf32>
    %373 = vector.extract_strided_slice %312 {offsets = [0, 24], sizes = [8, 8], strides = [1, 1]} : vector<8x32xf32> to vector<8x8xf32>
    %374 = vector.extract_strided_slice %313 {offsets = [0, 24], sizes = [8, 8], strides = [1, 1]} : vector<8x32xf32> to vector<8x8xf32>
    %375 = vector.extract_strided_slice %314 {offsets = [0, 24], sizes = [8, 8], strides = [1, 1]} : vector<8x32xf32> to vector<8x8xf32>
    %cst_137 = arith.constant dense<0.000000e+00> : vector<8x8xf32>
    %376 = tpu.matmul %373, %374, %cst_137 {dimension_numbers = #tpu.dot_dimension_numbers<[1], [1], [0], [0], [0, 0, 1, 0], [], []>} : vector<8x8xf32>, vector<8x8xf32>, vector<8x8xf32> -> vector<8x8xf32>
    %cst_138 = arith.constant 0.353553385 : f32
    %377 = vector.broadcast %cst_138 : f32 to vector<8x8xf32>
    %378 = arith.mulf %376, %377 : vector<8x8xf32>
    %379 = vector.broadcast %315 : vector<1x8xf32> to vector<8x8xf32>
    %380 = arith.addf %378, %379 : vector<8x8xf32>
    %cst_139 = arith.constant dense<0xFF800000> : vector<8xf32>
    %381 = vector.multi_reduction <maximumf>, %380, %cst_139 [1] : vector<8x8xf32> to vector<8xf32>
    %382 = vector.shape_cast %381 : vector<8xf32> to vector<8x1xf32>
    %383 = vector.broadcast %382 : vector<8x1xf32> to vector<8x8xf32>
    %384 = arith.subf %380, %383 : vector<8x8xf32>
    %385 = math.exp %384 : vector<8x8xf32>
    %cst_140 = arith.constant dense<0.000000e+00> : vector<8xf32>
    %386 = vector.multi_reduction <add>, %385, %cst_140 [1] : vector<8x8xf32> to vector<8xf32>
    %387 = vector.shape_cast %386 : vector<8xf32> to vector<8x1xf32>
    %388 = tpu.reciprocal %387 {approx = true} : vector<8x1xf32> -> vector<8x1xf32>
    %389 = vector.broadcast %388 : vector<8x1xf32> to vector<8x8xf32>
    %390 = arith.mulf %385, %389 : vector<8x8xf32>
    %cst_141 = arith.constant dense<0.000000e+00> : vector<8x8xf32>
    %391 = tpu.matmul %390, %375, %cst_141 {dimension_numbers = #tpu.dot_dimension_numbers<[1], [0], [0], [1], [0, 0, 1, 1], [], []>} : vector<8x8xf32>, vector<8x8xf32>, vector<8x8xf32> -> vector<8x8xf32>
    %392 = tpu.concatenate %334, %353, %372, %391 in 1 : vector<8x8xf32>, vector<8x8xf32>, vector<8x8xf32>, vector<8x8xf32> -> vector<8x32xf32>
    %393 = vector.extract_strided_slice %311 {offsets = [8, 0], sizes = [8, 32], strides = [1, 1]} : vector<16x96xf32> to vector<8x32xf32>
    %394 = vector.extract_strided_slice %311 {offsets = [8, 32], sizes = [8, 32], strides = [1, 1]} : vector<16x96xf32> to vector<8x32xf32>
    %395 = vector.extract_strided_slice %311 {offsets = [8, 64], sizes = [8, 32], strides = [1, 1]} : vector<16x96xf32> to vector<8x32xf32>
    %396 = vector.extract_strided_slice %0 {offsets = [1, 0], sizes = [1, 8], strides = [1, 1]} : vector<2x8xf32> to vector<1x8xf32>
    %397 = vector.extract_strided_slice %393 {offsets = [0, 0], sizes = [8, 8], strides = [1, 1]} : vector<8x32xf32> to vector<8x8xf32>
    %398 = vector.extract_strided_slice %394 {offsets = [0, 0], sizes = [8, 8], strides = [1, 1]} : vector<8x32xf32> to vector<8x8xf32>
    %399 = vector.extract_strided_slice %395 {offsets = [0, 0], sizes = [8, 8], strides = [1, 1]} : vector<8x32xf32> to vector<8x8xf32>
    %cst_142 = arith.constant dense<0.000000e+00> : vector<8x8xf32>
    %400 = tpu.matmul %397, %398, %cst_142 {dimension_numbers = #tpu.dot_dimension_numbers<[1], [1], [0], [0], [0, 0, 1, 0], [], []>} : vector<8x8xf32>, vector<8x8xf32>, vector<8x8xf32> -> vector<8x8xf32>
    %cst_143 = arith.constant 0.353553385 : f32
    %401 = vector.broadcast %cst_143 : f32 to vector<8x8xf32>
    %402 = arith.mulf %400, %401 : vector<8x8xf32>
    %403 = vector.broadcast %396 : vector<1x8xf32> to vector<8x8xf32>
    %404 = arith.addf %402, %403 : vector<8x8xf32>
    %cst_144 = arith.constant dense<0xFF800000> : vector<8xf32>
    %405 = vector.multi_reduction <maximumf>, %404, %cst_144 [1] : vector<8x8xf32> to vector<8xf32>
    %406 = vector.shape_cast %405 : vector<8xf32> to vector<8x1xf32>
    %407 = vector.broadcast %406 : vector<8x1xf32> to vector<8x8xf32>
    %408 = arith.subf %404, %407 : vector<8x8xf32>
    %409 = math.exp %408 : vector<8x8xf32>
    %cst_145 = arith.constant dense<0.000000e+00> : vector<8xf32>
    %410 = vector.multi_reduction <add>, %409, %cst_145 [1] : vector<8x8xf32> to vector<8xf32>
    %411 = vector.shape_cast %410 : vector<8xf32> to vector<8x1xf32>
    %412 = tpu.reciprocal %411 {approx = true} : vector<8x1xf32> -> vector<8x1xf32>
    %413 = vector.broadcast %412 : vector<8x1xf32> to vector<8x8xf32>
    %414 = arith.mulf %409, %413 : vector<8x8xf32>
    %cst_146 = arith.constant dense<0.000000e+00> : vector<8x8xf32>
    %415 = tpu.matmul %414, %399, %cst_146 {dimension_numbers = #tpu.dot_dimension_numbers<[1], [0], [0], [1], [0, 0, 1, 1], [], []>} : vector<8x8xf32>, vector<8x8xf32>, vector<8x8xf32> -> vector<8x8xf32>
    %416 = vector.extract_strided_slice %393 {offsets = [0, 8], sizes = [8, 8], strides = [1, 1]} : vector<8x32xf32> to vector<8x8xf32>
    %417 = vector.extract_strided_slice %394 {offsets = [0, 8], sizes = [8, 8], strides = [1, 1]} : vector<8x32xf32> to vector<8x8xf32>
    %418 = vector.extract_strided_slice %395 {offsets = [0, 8], sizes = [8, 8], strides = [1, 1]} : vector<8x32xf32> to vector<8x8xf32>
    %cst_147 = arith.constant dense<0.000000e+00> : vector<8x8xf32>
    %419 = tpu.matmul %416, %417, %cst_147 {dimension_numbers = #tpu.dot_dimension_numbers<[1], [1], [0], [0], [0, 0, 1, 0], [], []>} : vector<8x8xf32>, vector<8x8xf32>, vector<8x8xf32> -> vector<8x8xf32>
    %cst_148 = arith.constant 0.353553385 : f32
    %420 = vector.broadcast %cst_148 : f32 to vector<8x8xf32>
    %421 = arith.mulf %419, %420 : vector<8x8xf32>
    %422 = vector.broadcast %396 : vector<1x8xf32> to vector<8x8xf32>
    %423 = arith.addf %421, %422 : vector<8x8xf32>
    %cst_149 = arith.constant dense<0xFF800000> : vector<8xf32>
    %424 = vector.multi_reduction <maximumf>, %423, %cst_149 [1] : vector<8x8xf32> to vector<8xf32>
    %425 = vector.shape_cast %424 : vector<8xf32> to vector<8x1xf32>
    %426 = vector.broadcast %425 : vector<8x1xf32> to vector<8x8xf32>
    %427 = arith.subf %423, %426 : vector<8x8xf32>
    %428 = math.exp %427 : vector<8x8xf32>
    %cst_150 = arith.constant dense<0.000000e+00> : vector<8xf32>
    %429 = vector.multi_reduction <add>, %428, %cst_150 [1] : vector<8x8xf32> to vector<8xf32>
    %430 = vector.shape_cast %429 : vector<8xf32> to vector<8x1xf32>
    %431 = tpu.reciprocal %430 {approx = true} : vector<8x1xf32> -> vector<8x1xf32>
    %432 = vector.broadcast %431 : vector<8x1xf32> to vector<8x8xf32>
    %433 = arith.mulf %428, %432 : vector<8x8xf32>
    %cst_151 = arith.constant dense<0.000000e+00> : vector<8x8xf32>
    %434 = tpu.matmul %433, %418, %cst_151 {dimension_numbers = #tpu.dot_dimension_numbers<[1], [0], [0], [1], [0, 0, 1, 1], [], []>} : vector<8x8xf32>, vector<8x8xf32>, vector<8x8xf32> -> vector<8x8xf32>
    %435 = vector.extract_strided_slice %393 {offsets = [0, 16], sizes = [8, 8], strides = [1, 1]} : vector<8x32xf32> to vector<8x8xf32>
    %436 = vector.extract_strided_slice %394 {offsets = [0, 16], sizes = [8, 8], strides = [1, 1]} : vector<8x32xf32> to vector<8x8xf32>
    %437 = vector.extract_strided_slice %395 {offsets = [0, 16], sizes = [8, 8], strides = [1, 1]} : vector<8x32xf32> to vector<8x8xf32>
    %cst_152 = arith.constant dense<0.000000e+00> : vector<8x8xf32>
    %438 = tpu.matmul %435, %436, %cst_152 {dimension_numbers = #tpu.dot_dimension_numbers<[1], [1], [0], [0], [0, 0, 1, 0], [], []>} : vector<8x8xf32>, vector<8x8xf32>, vector<8x8xf32> -> vector<8x8xf32>
    %cst_153 = arith.constant 0.353553385 : f32
    %439 = vector.broadcast %cst_153 : f32 to vector<8x8xf32>
    %440 = arith.mulf %438, %439 : vector<8x8xf32>
    %441 = vector.broadcast %396 : vector<1x8xf32> to vector<8x8xf32>
    %442 = arith.addf %440, %441 : vector<8x8xf32>
    %cst_154 = arith.constant dense<0xFF800000> : vector<8xf32>
    %443 = vector.multi_reduction <maximumf>, %442, %cst_154 [1] : vector<8x8xf32> to vector<8xf32>
    %444 = vector.shape_cast %443 : vector<8xf32> to vector<8x1xf32>
    %445 = vector.broadcast %444 : vector<8x1xf32> to vector<8x8xf32>
    %446 = arith.subf %442, %445 : vector<8x8xf32>
    %447 = math.exp %446 : vector<8x8xf32>
    %cst_155 = arith.constant dense<0.000000e+00> : vector<8xf32>
    %448 = vector.multi_reduction <add>, %447, %cst_155 [1] : vector<8x8xf32> to vector<8xf32>
    %449 = vector.shape_cast %448 : vector<8xf32> to vector<8x1xf32>
    %450 = tpu.reciprocal %449 {approx = true} : vector<8x1xf32> -> vector<8x1xf32>
    %451 = vector.broadcast %450 : vector<8x1xf32> to vector<8x8xf32>
    %452 = arith.mulf %447, %451 : vector<8x8xf32>
    %cst_156 = arith.constant dense<0.000000e+00> : vector<8x8xf32>
    %453 = tpu.matmul %452, %437, %cst_156 {dimension_numbers = #tpu.dot_dimension_numbers<[1], [0], [0], [1], [0, 0, 1, 1], [], []>} : vector<8x8xf32>, vector<8x8xf32>, vector<8x8xf32> -> vector<8x8xf32>
    %454 = vector.extract_strided_slice %393 {offsets = [0, 24], sizes = [8, 8], strides = [1, 1]} : vector<8x32xf32> to vector<8x8xf32>
    %455 = vector.extract_strided_slice %394 {offsets = [0, 24], sizes = [8, 8], strides = [1, 1]} : vector<8x32xf32> to vector<8x8xf32>
    %456 = vector.extract_strided_slice %395 {offsets = [0, 24], sizes = [8, 8], strides = [1, 1]} : vector<8x32xf32> to vector<8x8xf32>
    %cst_157 = arith.constant dense<0.000000e+00> : vector<8x8xf32>
    %457 = tpu.matmul %454, %455, %cst_157 {dimension_numbers = #tpu.dot_dimension_numbers<[1], [1], [0], [0], [0, 0, 1, 0], [], []>} : vector<8x8xf32>, vector<8x8xf32>, vector<8x8xf32> -> vector<8x8xf32>
    %cst_158 = arith.constant 0.353553385 : f32
    %458 = vector.broadcast %cst_158 : f32 to vector<8x8xf32>
    %459 = arith.mulf %457, %458 : vector<8x8xf32>
    %460 = vector.broadcast %396 : vector<1x8xf32> to vector<8x8xf32>
    %461 = arith.addf %459, %460 : vector<8x8xf32>
    %cst_159 = arith.constant dense<0xFF800000> : vector<8xf32>
    %462 = vector.multi_reduction <maximumf>, %461, %cst_159 [1] : vector<8x8xf32> to vector<8xf32>
    %463 = vector.shape_cast %462 : vector<8xf32> to vector<8x1xf32>
    %464 = vector.broadcast %463 : vector<8x1xf32> to vector<8x8xf32>
    %465 = arith.subf %461, %464 : vector<8x8xf32>
    %466 = math.exp %465 : vector<8x8xf32>
    %cst_160 = arith.constant dense<0.000000e+00> : vector<8xf32>
    %467 = vector.multi_reduction <add>, %466, %cst_160 [1] : vector<8x8xf32> to vector<8xf32>
    %468 = vector.shape_cast %467 : vector<8xf32> to vector<8x1xf32>
    %469 = tpu.reciprocal %468 {approx = true} : vector<8x1xf32> -> vector<8x1xf32>
    %470 = vector.broadcast %469 : vector<8x1xf32> to vector<8x8xf32>
    %471 = arith.mulf %466, %470 : vector<8x8xf32>
    %cst_161 = arith.constant dense<0.000000e+00> : vector<8x8xf32>
    %472 = tpu.matmul %471, %456, %cst_161 {dimension_numbers = #tpu.dot_dimension_numbers<[1], [0], [0], [1], [0, 0, 1, 1], [], []>} : vector<8x8xf32>, vector<8x8xf32>, vector<8x8xf32> -> vector<8x8xf32>
    %473 = tpu.concatenate %415, %434, %453, %472 in 1 : vector<8x8xf32>, vector<8x8xf32>, vector<8x8xf32>, vector<8x8xf32> -> vector<8x32xf32>
    %474 = tpu.concatenate %392, %473 in 0 : vector<8x32xf32>, vector<8x32xf32> -> vector<16x32xf32>
    %c1_162 = arith.constant 1 : index
    %c0_163 = arith.constant 0 : index
    %c0_164 = arith.constant 0 : index
    %475 = vector.load %arg9[%c1_162, %c0_163, %c0_164] : memref<2x32x32xf32, #tpu.memory_space<vmem>>, vector<1x32x32xf32>
    %476 = vector.shape_cast %475 : vector<1x32x32xf32> to vector<32x32xf32>
    %cst_165 = arith.constant dense<0.000000e+00> : vector<16x32xf32>
    %477 = tpu.matmul %474, %476, %cst_165 {dimension_numbers = #tpu.dot_dimension_numbers<[1], [0], [0], [1], [0, 0, 1, 1], [], []>} : vector<16x32xf32>, vector<32x32xf32>, vector<16x32xf32> -> vector<16x32xf32>
    %c1_166 = arith.constant 1 : index
    %c0_167 = arith.constant 0 : index
    %c0_168 = arith.constant 0 : index
    %478 = vector.load %arg10[%c1_166, %c0_167, %c0_168] : memref<2x1x32xf32, #tpu.memory_space<vmem>>, vector<1x1x32xf32>
    %479 = vector.shape_cast %478 : vector<1x1x32xf32> to vector<1x32xf32>
    %480 = vector.broadcast %479 : vector<1x32xf32> to vector<16x32xf32>
    %481 = arith.addf %477, %480 : vector<16x32xf32>
    %482 = arith.addf %481, %304 : vector<16x32xf32>
    %c1_169 = arith.constant 1 : index
    %c0_170 = arith.constant 0 : index
    %c0_171 = arith.constant 0 : index
    %483 = vector.load %arg11[%c1_169, %c0_170, %c0_171] : memref<2x1x32xf32, #tpu.memory_space<vmem>>, vector<1x1x32xf32>
    %484 = vector.shape_cast %483 : vector<1x1x32xf32> to vector<1x32xf32>
    %c1_172 = arith.constant 1 : index
    %c0_173 = arith.constant 0 : index
    %c0_174 = arith.constant 0 : index
    %485 = vector.load %arg12[%c1_172, %c0_173, %c0_174] : memref<2x1x32xf32, #tpu.memory_space<vmem>>, vector<1x1x32xf32>
    %486 = vector.shape_cast %485 : vector<1x1x32xf32> to vector<1x32xf32>
    %cst_175 = arith.constant dense<0.000000e+00> : vector<16xf32>
    %487 = vector.multi_reduction <add>, %482, %cst_175 [1] : vector<16x32xf32> to vector<16xf32>
    %488 = vector.shape_cast %487 : vector<16xf32> to vector<16x1xf32>
    %cst_176 = arith.constant 3.200000e+01 : f32
    %489 = vector.broadcast %cst_176 : f32 to vector<16x1xf32>
    %490 = arith.divf %488, %489 : vector<16x1xf32>
    %491 = vector.broadcast %490 : vector<16x1xf32> to vector<16x32xf32>
    %492 = arith.subf %482, %491 : vector<16x32xf32>
    %493 = arith.mulf %492, %492 : vector<16x32xf32>
    %cst_177 = arith.constant dense<0.000000e+00> : vector<16xf32>
    %494 = vector.multi_reduction <add>, %493, %cst_177 [1] : vector<16x32xf32> to vector<16xf32>
    %495 = vector.shape_cast %494 : vector<16xf32> to vector<16x1xf32>
    %cst_178 = arith.constant 3.200000e+01 : f32
    %496 = vector.broadcast %cst_178 : f32 to vector<16x1xf32>
    %497 = arith.divf %495, %496 : vector<16x1xf32>
    %cst_179 = arith.constant 9.99999996E-13 : f32
    %498 = vector.broadcast %cst_179 : f32 to vector<16x1xf32>
    %499 = arith.addf %497, %498 : vector<16x1xf32>
    %500 = math.rsqrt %499 : vector<16x1xf32>
    %501 = vector.broadcast %500 : vector<16x1xf32> to vector<16x32xf32>
    %502 = arith.mulf %492, %501 : vector<16x32xf32>
    %503 = vector.broadcast %484 : vector<1x32xf32> to vector<16x32xf32>
    %504 = arith.mulf %502, %503 : vector<16x32xf32>
    %505 = vector.broadcast %486 : vector<1x32xf32> to vector<16x32xf32>
    %506 = arith.addf %504, %505 : vector<16x32xf32>
    %c1_180 = arith.constant 1 : index
    %c0_181 = arith.constant 0 : index
    %c0_182 = arith.constant 0 : index
    %507 = vector.load %arg13[%c1_180, %c0_181, %c0_182] : memref<2x32x64xf32, #tpu.memory_space<vmem>>, vector<1x32x64xf32>
    %508 = vector.shape_cast %507 : vector<1x32x64xf32> to vector<32x64xf32>
    %cst_183 = arith.constant dense<0.000000e+00> : vector<16x64xf32>
    %509 = tpu.matmul %506, %508, %cst_183 {dimension_numbers = #tpu.dot_dimension_numbers<[1], [0], [0], [1], [0, 0, 1, 1], [], []>} : vector<16x32xf32>, vector<32x64xf32>, vector<16x64xf32> -> vector<16x64xf32>
    %c1_184 = arith.constant 1 : index
    %c0_185 = arith.constant 0 : index
    %c0_186 = arith.constant 0 : index
    %510 = vector.load %arg14[%c1_184, %c0_185, %c0_186] : memref<2x1x64xf32, #tpu.memory_space<vmem>>, vector<1x1x64xf32>
    %511 = vector.shape_cast %510 : vector<1x1x64xf32> to vector<1x64xf32>
    %512 = vector.broadcast %511 : vector<1x64xf32> to vector<16x64xf32>
    %513 = arith.addf %509, %512 : vector<16x64xf32>
    %cst_187 = arith.constant 0.707106769 : f32
    %514 = vector.broadcast %cst_187 : f32 to vector<16x64xf32>
    %515 = arith.mulf %513, %514 : vector<16x64xf32>
    %516 = math.absf %515 : vector<16x64xf32>
    %cst_188 = arith.constant 0.327591091 : f32
    %517 = vector.broadcast %cst_188 : f32 to vector<16x64xf32>
    %518 = arith.mulf %517, %516 : vector<16x64xf32>
    %cst_189 = arith.constant 1.000000e+00 : f32
    %519 = vector.broadcast %cst_189 : f32 to vector<16x64xf32>
    %520 = arith.addf %519, %518 : vector<16x64xf32>
    %cst_190 = arith.constant 1.000000e+00 : f32
    %521 = vector.broadcast %cst_190 : f32 to vector<16x64xf32>
    %522 = arith.divf %521, %520 : vector<16x64xf32>
    %cst_191 = arith.constant 1.06140542 : f32
    %523 = vector.broadcast %cst_191 : f32 to vector<16x64xf32>
    %524 = arith.mulf %522, %523 : vector<16x64xf32>
    %cst_192 = arith.constant -1.45315206 : f32
    %525 = vector.broadcast %cst_192 : f32 to vector<16x64xf32>
    %526 = arith.addf %525, %524 : vector<16x64xf32>
    %527 = arith.mulf %522, %526 : vector<16x64xf32>
    %cst_193 = arith.constant 1.42141378 : f32
    %528 = vector.broadcast %cst_193 : f32 to vector<16x64xf32>
    %529 = arith.addf %528, %527 : vector<16x64xf32>
    %530 = arith.mulf %522, %529 : vector<16x64xf32>
    %cst_194 = arith.constant -0.284496725 : f32
    %531 = vector.broadcast %cst_194 : f32 to vector<16x64xf32>
    %532 = arith.addf %531, %530 : vector<16x64xf32>
    %533 = arith.mulf %522, %532 : vector<16x64xf32>
    %cst_195 = arith.constant 0.254829586 : f32
    %534 = vector.broadcast %cst_195 : f32 to vector<16x64xf32>
    %535 = arith.addf %534, %533 : vector<16x64xf32>
    %536 = arith.mulf %522, %535 : vector<16x64xf32>
    %cst_196 = arith.constant 0.000000e+00 : f32
    %537 = vector.broadcast %cst_196 : f32 to vector<16x64xf32>
    %538 = arith.subf %537, %516 : vector<16x64xf32>
    %539 = arith.mulf %538, %516 : vector<16x64xf32>
    %540 = math.exp %539 : vector<16x64xf32>
    %541 = arith.mulf %536, %540 : vector<16x64xf32>
    %cst_197 = arith.constant 1.000000e+00 : f32
    %542 = vector.broadcast %cst_197 : f32 to vector<16x64xf32>
    %543 = arith.subf %542, %541 : vector<16x64xf32>
    %cst_198 = arith.constant 0.000000e+00 : f32
    %544 = vector.broadcast %cst_198 : f32 to vector<16x64xf32>
    %545 = arith.cmpf oge, %515, %544 : vector<16x64xf32>
    %cst_199 = arith.constant 0.000000e+00 : f32
    %546 = vector.broadcast %cst_199 : f32 to vector<16x64xf32>
    %547 = arith.subf %546, %543 : vector<16x64xf32>
    %548 = arith.select %545, %543, %547 : vector<16x64xi1>, vector<16x64xf32>
    %cst_200 = arith.constant 5.000000e-01 : f32
    %549 = vector.broadcast %cst_200 : f32 to vector<16x64xf32>
    %550 = arith.mulf %549, %513 : vector<16x64xf32>
    %cst_201 = arith.constant 1.000000e+00 : f32
    %551 = vector.broadcast %cst_201 : f32 to vector<16x64xf32>
    %552 = arith.addf %551, %548 : vector<16x64xf32>
    %553 = arith.mulf %550, %552 : vector<16x64xf32>
    %c1_202 = arith.constant 1 : index
    %c0_203 = arith.constant 0 : index
    %c0_204 = arith.constant 0 : index
    %554 = vector.load %arg15[%c1_202, %c0_203, %c0_204] : memref<2x64x32xf32, #tpu.memory_space<vmem>>, vector<1x64x32xf32>
    %555 = vector.shape_cast %554 : vector<1x64x32xf32> to vector<64x32xf32>
    %cst_205 = arith.constant dense<0.000000e+00> : vector<16x32xf32>
    %556 = tpu.matmul %553, %555, %cst_205 {dimension_numbers = #tpu.dot_dimension_numbers<[1], [0], [0], [1], [0, 0, 1, 1], [], []>} : vector<16x64xf32>, vector<64x32xf32>, vector<16x32xf32> -> vector<16x32xf32>
    %c1_206 = arith.constant 1 : index
    %c0_207 = arith.constant 0 : index
    %c0_208 = arith.constant 0 : index
    %557 = vector.load %arg16[%c1_206, %c0_207, %c0_208] : memref<2x1x32xf32, #tpu.memory_space<vmem>>, vector<1x1x32xf32>
    %558 = vector.shape_cast %557 : vector<1x1x32xf32> to vector<1x32xf32>
    %559 = vector.broadcast %558 : vector<1x32xf32> to vector<16x32xf32>
    %560 = arith.addf %556, %559 : vector<16x32xf32>
    %561 = arith.addf %560, %506 : vector<16x32xf32>
    %c1_209 = arith.constant 1 : index
    %c0_210 = arith.constant 0 : index
    %c0_211 = arith.constant 0 : index
    %562 = vector.load %arg17[%c1_209, %c0_210, %c0_211] : memref<2x1x32xf32, #tpu.memory_space<vmem>>, vector<1x1x32xf32>
    %563 = vector.shape_cast %562 : vector<1x1x32xf32> to vector<1x32xf32>
    %c1_212 = arith.constant 1 : index
    %c0_213 = arith.constant 0 : index
    %c0_214 = arith.constant 0 : index
    %564 = vector.load %arg18[%c1_212, %c0_213, %c0_214] : memref<2x1x32xf32, #tpu.memory_space<vmem>>, vector<1x1x32xf32>
    %565 = vector.shape_cast %564 : vector<1x1x32xf32> to vector<1x32xf32>
    %cst_215 = arith.constant dense<0.000000e+00> : vector<16xf32>
    %566 = vector.multi_reduction <add>, %561, %cst_215 [1] : vector<16x32xf32> to vector<16xf32>
    %567 = vector.shape_cast %566 : vector<16xf32> to vector<16x1xf32>
    %cst_216 = arith.constant 3.200000e+01 : f32
    %568 = vector.broadcast %cst_216 : f32 to vector<16x1xf32>
    %569 = arith.divf %567, %568 : vector<16x1xf32>
    %570 = vector.broadcast %569 : vector<16x1xf32> to vector<16x32xf32>
    %571 = arith.subf %561, %570 : vector<16x32xf32>
    %572 = arith.mulf %571, %571 : vector<16x32xf32>
    %cst_217 = arith.constant dense<0.000000e+00> : vector<16xf32>
    %573 = vector.multi_reduction <add>, %572, %cst_217 [1] : vector<16x32xf32> to vector<16xf32>
    %574 = vector.shape_cast %573 : vector<16xf32> to vector<16x1xf32>
    %cst_218 = arith.constant 3.200000e+01 : f32
    %575 = vector.broadcast %cst_218 : f32 to vector<16x1xf32>
    %576 = arith.divf %574, %575 : vector<16x1xf32>
    %cst_219 = arith.constant 9.99999996E-13 : f32
    %577 = vector.broadcast %cst_219 : f32 to vector<16x1xf32>
    %578 = arith.addf %576, %577 : vector<16x1xf32>
    %579 = math.rsqrt %578 : vector<16x1xf32>
    %580 = vector.broadcast %579 : vector<16x1xf32> to vector<16x32xf32>
    %581 = arith.mulf %571, %580 : vector<16x32xf32>
    %582 = vector.broadcast %563 : vector<1x32xf32> to vector<16x32xf32>
    %583 = arith.mulf %581, %582 : vector<16x32xf32>
    %584 = vector.broadcast %565 : vector<1x32xf32> to vector<16x32xf32>
    %585 = arith.addf %583, %584 : vector<16x32xf32>
    %c0_220 = arith.constant 0 : index
    %c0_221 = arith.constant 0 : index
    %586 = vector.load %arg19[%c0_220, %c0_221] : memref<32x128xf32, #tpu.memory_space<vmem>>, vector<32x128xf32>
    %cst_222 = arith.constant dense<0.000000e+00> : vector<16x128xf32>
    %587 = tpu.matmul %585, %586, %cst_222 {dimension_numbers = #tpu.dot_dimension_numbers<[1], [0], [0], [1], [0, 0, 1, 1], [], []>} : vector<16x32xf32>, vector<32x128xf32>, vector<16x128xf32> -> vector<16x128xf32>
    %c0_223 = arith.constant 0 : index
    %c0_224 = arith.constant 0 : index
    %588 = vector.load %arg20[%c0_223, %c0_224] : memref<1x128xf32, #tpu.memory_space<vmem>>, vector<1x128xf32>
    %589 = vector.broadcast %588 : vector<1x128xf32> to vector<16x128xf32>
    %590 = arith.addf %587, %589 : vector<16x128xf32>
    %c0_225 = arith.constant 0 : index
    %c0_226 = arith.constant 0 : index
    %591 = vector.load %arg21[%c0_225, %c0_226] : memref<16x128xf32, #tpu.memory_space<vmem>>, vector<16x128xf32>
    tpu.vector_store %arg21[%c0_225, %c0_226], %590 {strides = array<i32>} : memref<16x128xf32, #tpu.memory_space<vmem>>, vector<16x128xf32>,
    %c0_227 = arith.constant 0 : index
    %c0_228 = arith.constant 0 : index
    %592 = vector.load %arg2[%c0_227, %c0_228] : memref<16x1xf32, #tpu.memory_space<vmem>>, vector<16x1xf32>
    %cst_229 = arith.constant dense<0.000000e+00> : vector<1xf32>
    %593 = vector.multi_reduction <add>, %592, %cst_229 [0] : vector<16x1xf32> to vector<1xf32>
    %594 = vector.shape_cast %593 : vector<1xf32> to vector<1x1xf32>
    %595 = tpu.reciprocal %594 {approx = true} : vector<1x1xf32> -> vector<1x1xf32>
    %596 = vector.extract_strided_slice %590 {offsets = [0, 0], sizes = [16, 5], strides = [1, 1]} : vector<16x128xf32> to vector<16x5xf32>
    %c0_230 = arith.constant 0 : index
    %c0_231 = arith.constant 0 : index
    %597 = vector.load %arg3[%c0_230, %c0_231] : memref<16x1xi32, #tpu.memory_space<vmem>>, vector<16x1xi32>
    %cst_232 = arith.constant dense<0xFF800000> : vector<16xf32>
    %598 = vector.multi_reduction <maximumf>, %596, %cst_232 [1] : vector<16x5xf32> to vector<16xf32>
    %599 = vector.shape_cast %598 : vector<16xf32> to vector<16x1xf32>
    %600 = vector.broadcast %599 : vector<16x1xf32> to vector<16x5xf32>
    %601 = arith.subf %596, %600 : vector<16x5xf32>
    %602 = math.exp %601 : vector<16x5xf32>
    %cst_233 = arith.constant dense<0.000000e+00> : vector<16xf32>
    %603 = vector.multi_reduction <add>, %602, %cst_233 [1] : vector<16x5xf32> to vector<16xf32>
    %604 = vector.shape_cast %603 : vector<16xf32> to vector<16x1xf32>
    %605 = math.log %604 : vector<16x1xf32>
    %606 = arith.addf %605, %599 : vector<16x1xf32>
    %607 = tpu.iota {dimensions = array<i32: 1>} : vector<16x5xi32>
    %608 = vector.broadcast %597 : vector<16x1xi32> to vector<16x5xi32>
    %609 = arith.cmpi eq, %607, %608 : vector<16x5xi32>
    %cst_234 = arith.constant 0.000000e+00 : f32
    %610 = vector.broadcast %cst_234 : f32 to vector<16x5xf32>
    %611 = arith.select %609, %596, %610 : vector<16x5xi1>, vector<16x5xf32>
    %cst_235 = arith.constant dense<0.000000e+00> : vector<16xf32>
    %612 = vector.multi_reduction <add>, %611, %cst_235 [1] : vector<16x5xf32> to vector<16xf32>
    %613 = vector.shape_cast %612 : vector<16xf32> to vector<16x1xf32>
    %614 = arith.subf %606, %613 : vector<16x1xf32>
    %615 = arith.mulf %614, %592 : vector<16x1xf32>
    %cst_236 = arith.constant dense<0.000000e+00> : vector<1xf32>
    %616 = vector.multi_reduction <add>, %615, %cst_236 [0] : vector<16x1xf32> to vector<1xf32>
    %617 = vector.shape_cast %616 : vector<1xf32> to vector<1x1xf32>
    %618 = vector.extract_strided_slice %590 {offsets = [0, 5], sizes = [16, 7], strides = [1, 1]} : vector<16x128xf32> to vector<16x7xf32>
    %c0_237 = arith.constant 0 : index
    %c0_238 = arith.constant 0 : index
    %619 = vector.load %arg4[%c0_237, %c0_238] : memref<16x1xi32, #tpu.memory_space<vmem>>, vector<16x1xi32>
    %cst_239 = arith.constant dense<0xFF800000> : vector<16xf32>
    %620 = vector.multi_reduction <maximumf>, %618, %cst_239 [1] : vector<16x7xf32> to vector<16xf32>
    %621 = vector.shape_cast %620 : vector<16xf32> to vector<16x1xf32>
    %622 = vector.broadcast %621 : vector<16x1xf32> to vector<16x7xf32>
    %623 = arith.subf %618, %622 : vector<16x7xf32>
    %624 = math.exp %623 : vector<16x7xf32>
    %cst_240 = arith.constant dense<0.000000e+00> : vector<16xf32>
    %625 = vector.multi_reduction <add>, %624, %cst_240 [1] : vector<16x7xf32> to vector<16xf32>
    %626 = vector.shape_cast %625 : vector<16xf32> to vector<16x1xf32>
    %627 = math.log %626 : vector<16x1xf32>
    %628 = arith.addf %627, %621 : vector<16x1xf32>
    %629 = tpu.iota {dimensions = array<i32: 1>} : vector<16x7xi32>
    %630 = vector.broadcast %619 : vector<16x1xi32> to vector<16x7xi32>
    %631 = arith.cmpi eq, %629, %630 : vector<16x7xi32>
    %cst_241 = arith.constant 0.000000e+00 : f32
    %632 = vector.broadcast %cst_241 : f32 to vector<16x7xf32>
    %633 = arith.select %631, %618, %632 : vector<16x7xi1>, vector<16x7xf32>
    %cst_242 = arith.constant dense<0.000000e+00> : vector<16xf32>
    %634 = vector.multi_reduction <add>, %633, %cst_242 [1] : vector<16x7xf32> to vector<16xf32>
    %635 = vector.shape_cast %634 : vector<16xf32> to vector<16x1xf32>
    %636 = arith.subf %628, %635 : vector<16x1xf32>
    %637 = arith.mulf %636, %592 : vector<16x1xf32>
    %cst_243 = arith.constant dense<0.000000e+00> : vector<1xf32>
    %638 = vector.multi_reduction <add>, %637, %cst_243 [0] : vector<16x1xf32> to vector<1xf32>
    %639 = vector.shape_cast %638 : vector<1xf32> to vector<1x1xf32>
    %640 = arith.addf %639, %617 : vector<1x1xf32>
    %cst_244 = arith.constant 5.000000e-01 : f32
    %641 = vector.broadcast %cst_244 : f32 to vector<1x1xf32>
    %642 = arith.mulf %640, %641 : vector<1x1xf32>
    %643 = arith.mulf %642, %595 : vector<1x1xf32>
    %c0_245 = arith.constant 0 : index
    %c0_246 = arith.constant 0 : index
    %644 = vector.load %arg22[%c0_245, %c0_246] : memref<1x1xf32, #tpu.memory_space<vmem>>, vector<1x1xf32>
    tpu.vector_store %arg22[%c0_245, %c0_246], %643 {strides = array<i32>} : memref<1x1xf32, #tpu.memory_space<vmem>>, vector<1x1xf32>,
    return
  }
}

</mosaic_0001>

<llo_original>
// kernel: tpu_custom_call.1
$region0: #{tpu_custom_call.1}
  #allocation0 [shape = 'u32[]', space=smem, size = 0x4, offset = 0x4, fixed_abs, tag = 'smem constant byte address 0x4 - core index']
  #allocation1 [shape = 'u32[144,128]{1,0:T(1,128)}', space=vmem, size = 0x12000, scoped, tag = 'internal scratch']
  %s0 = inlined_call_operand.hbm [shape: f32[16,32], index: 0, kind: input, shape index: {}]
  %s1 = inlined_call_operand.vmem [shape: f32[2,8], index: 1, kind: input, shape index: {}]
  %s2 = inlined_call_operand.vmem [shape: f32[16,1], index: 2, kind: input, shape index: {}]
  %s3 = inlined_call_operand.vmem [shape: s32[16,1], index: 3, kind: input, shape index: {}]
  %s4 = inlined_call_operand.vmem [shape: s32[16,1], index: 4, kind: input, shape index: {}]
  %s5 = inlined_call_operand.vmem [shape: f32[1,32], index: 5, kind: input, shape index: {}]
  %s6 = inlined_call_operand.hbm [shape: f32[1,32], index: 6, kind: input, shape index: {}]
  %s7 = inlined_call_operand.vmem [shape: f32[2,32,96], index: 7, kind: input, shape index: {}]
  %s8 = inlined_call_operand.vmem [shape: f32[2,1,96], index: 8, kind: input, shape index: {}]
  %s9 = inlined_call_operand.vmem [shape: f32[2,32,32], index: 9, kind: input, shape index: {}]
  %s10 = inlined_call_operand.vmem [shape: f32[2,1,32], index: 10, kind: input, shape index: {}]
  %s11 = inlined_call_operand.vmem [shape: f32[2,1,32], index: 11, kind: input, shape index: {}]
  %s12 = inlined_call_operand.vmem [shape: f32[2,1,32], index: 12, kind: input, shape index: {}]
  %s13 = inlined_call_operand.vmem [shape: f32[2,32,64], index: 13, kind: input, shape index: {}]
  %s14 = inlined_call_operand.hbm [shape: f32[2,1,64], index: 14, kind: input, shape index: {}]
  %s15 = inlined_call_operand.vmem [shape: f32[2,64,32], index: 15, kind: input, shape index: {}]
  %s16 = inlined_call_operand.vmem [shape: f32[2,1,32], index: 16, kind: input, shape index: {}]
  %s17 = inlined_call_operand.vmem [shape: f32[2,1,32], index: 17, kind: input, shape index: {}]
  %s18 = inlined_call_operand.vmem [shape: f32[2,1,32], index: 18, kind: input, shape index: {}]
  %s19 = inlined_call_operand.vmem [shape: f32[32,128], index: 19, kind: input, shape index: {}]
  %s20 = inlined_call_operand.vmem [shape: f32[1,128], index: 20, kind: input, shape index: {}]
  %s21 = inlined_call_operand.hbm [shape: f32[16,128], index: 21, kind: output, shape index: {0}]
  %s22 = inlined_call_operand.hbm [shape: f32[1,1], index: 22, kind: output, shape index: {1}]
  %23 = xla_tuple %s21, %s22
  %s24 = sld [smem:[#allocation0]]
  $region114: #{tpu_custom_call.1} parent=0
    _
  %s26 = ssub.s32 1, %s24
  %s27 = scalar_select 0, %s26, %s24
  $region1: #{tpu_custom_call.1} parent=0
    #allocation2 [shape = 'u8[8192]{0}', space=vmem, size = 0x2000, scoped, tag = 'input window, operand 0, single buffered']
    #allocation3 [shape = 's32[1]{0}', space=sflag, size = 0x4, scoped, tag = 'scoped memory for tpu_custom_call.1']
    #allocation4 [shape = 's32[1]{0}', space=sflag, size = 0x4, scoped, tag = 'scoped memory for tpu_custom_call.1']
    #allocation5 [shape = 'u8[512]{0}', space=vmem, size = 0x400, scoped, tag = 'input window, operand 6, single buffered']
    #allocation6 [shape = 's32[1]{0}', space=sflag, size = 0x4, scoped, tag = 'scoped memory for tpu_custom_call.1']
    #allocation7 [shape = 'u8[1024]{0}', space=vmem, size = 0x400, scoped, tag = 'input window, operand 14, single buffered']
    #allocation8 [shape = 'u8[8192]{0}', space=vmem, size = 0x2000, scoped, tag = 'output window, operand 0, single buffered']
    #allocation9 [shape = 'u8[512]{0}', space=vmem, size = 0x400, scoped, tag = 'output window, operand 1, single buffered']
    #allocation10 [shape = 's32[1]{0}', space=sflag, size = 0x4, scoped, tag = 'scoped memory for tpu_custom_call.1']
    %28 = vsyncpa [#allocation3], 0
    %29 = vsyncpa [#allocation6], 0
    %30 = vsyncpa [#allocation4], 0
    %31 = vsyncpa [#allocation10], 0
    // Predicated region
    $region2: #{tpu_custom_call.1} parent=1 // pred_check
      _
    $region3: #{tpu_custom_call.1} parent=1 // pred_check_branch
      %33 = sbr.rel (0) target = $region5
    $region4: #{tpu_custom_call.1} parent=1 // pred_region
      %s35 = ssub.s32 256, 256
      %36 = vsyncadd [#allocation3], %s35
      %s37 = sshll.u32 [#allocation2], 4
      %s38 = int_to_ptr.vmem [resolvable:$true] %s37
      %43 = dma.hbm_to_vmem [thread:$0]  %s0, 256, %s38, [#allocation3], 128, 128, 8
    $region5: #{tpu_custom_call.1} parent=1 // pred_fallthru
      _
    // Predicated region
    $region6: #{tpu_custom_call.1} parent=1 // pred_check
      _
    $region7: #{tpu_custom_call.1} parent=1 // pred_check_branch
      %45 = sbr.rel (0) target = $region9
    $region8: #{tpu_custom_call.1} parent=1 // pred_region
      _
    $region9: #{tpu_custom_call.1} parent=1 // pred_fallthru
      _
    // Predicated region
    $region10: #{tpu_custom_call.1} parent=1 // pred_check
      _
    $region11: #{tpu_custom_call.1} parent=1 // pred_check_branch
      %47 = sbr.rel (0) target = $region13
    $region12: #{tpu_custom_call.1} parent=1 // pred_region
      _
    $region13: #{tpu_custom_call.1} parent=1 // pred_fallthru
      _
    // Predicated region
    $region14: #{tpu_custom_call.1} parent=1 // pred_check
      _
    $region15: #{tpu_custom_call.1} parent=1 // pred_check_branch
      %49 = sbr.rel (0) target = $region17
    $region16: #{tpu_custom_call.1} parent=1 // pred_region
      _
    $region17: #{tpu_custom_call.1} parent=1 // pred_fallthru
      _
    // Predicated region
    $region18: #{tpu_custom_call.1} parent=1 // pred_check
      _
    $region19: #{tpu_custom_call.1} parent=1 // pred_check_branch
      %51 = sbr.rel (0) target = $region21
    $region20: #{tpu_custom_call.1} parent=1 // pred_region
      _
    $region21: #{tpu_custom_call.1} parent=1 // pred_fallthru
      _
    // Predicated region
    $region22: #{tpu_custom_call.1} parent=1 // pred_check
      _
    $region23: #{tpu_custom_call.1} parent=1 // pred_check_branch
      %53 = sbr.rel (0) target = $region25
    $region24: #{tpu_custom_call.1} parent=1 // pred_region
      _
    $region25: #{tpu_custom_call.1} parent=1 // pred_fallthru
      _
    // Predicated region
    $region26: #{tpu_custom_call.1} parent=1 // pred_check
      _
    $region27: #{tpu_custom_call.1} parent=1 // pred_check_branch
      %55 = sbr.rel (0) target = $region29
    $region28: #{tpu_custom_call.1} parent=1 // pred_region
      %s57 = ssub.s32 16, 16
      %58 = vsyncadd [#allocation6], %s57
      %s60 = sshll.u32 [#allocation5], 4
      %s61 = int_to_ptr.vmem [resolvable:$true] %s60
      %63 = dma.hbm_to_vmem [thread:$0]  %s6, 16, %s61, [#allocation6]
    $region29: #{tpu_custom_call.1} parent=1 // pred_fallthru
      _
    // Predicated region
    $region30: #{tpu_custom_call.1} parent=1 // pred_check
      _
    $region31: #{tpu_custom_call.1} parent=1 // pred_check_branch
      %65 = sbr.rel (0) target = $region33
    $region32: #{tpu_custom_call.1} parent=1 // pred_region
      _
    $region33: #{tpu_custom_call.1} parent=1 // pred_fallthru
      _
    // Predicated region
    $region34: #{tpu_custom_call.1} parent=1 // pred_check
      _
    $region35: #{tpu_custom_call.1} parent=1 // pred_check_branch
      %67 = sbr.rel (0) target = $region37
    $region36: #{tpu_custom_call.1} parent=1 // pred_region
      _
    $region37: #{tpu_custom_call.1} parent=1 // pred_fallthru
      _
    // Predicated region
    $region38: #{tpu_custom_call.1} parent=1 // pred_check
      _
    $region39: #{tpu_custom_call.1} parent=1 // pred_check_branch
      %69 = sbr.rel (0) target = $region41
    $region40: #{tpu_custom_call.1} parent=1 // pred_region
      _
    $region41: #{tpu_custom_call.1} parent=1 // pred_fallthru
      _
    // Predicated region
    $region42: #{tpu_custom_call.1} parent=1 // pred_check
      _
    $region43: #{tpu_custom_call.1} parent=1 // pred_check_branch
      %71 = sbr.rel (0) target = $region45
    $region44: #{tpu_custom_call.1} parent=1 // pred_region
      _
    $region45: #{tpu_custom_call.1} parent=1 // pred_fallthru
      _
    // Predicated region
    $region46: #{tpu_custom_call.1} parent=1 // pred_check
      _
    $region47: #{tpu_custom_call.1} parent=1 // pred_check_branch
      %73 = sbr.rel (0) target = $region49
    $region48: #{tpu_custom_call.1} parent=1 // pred_region
      _
    $region49: #{tpu_custom_call.1} parent=1 // pred_fallthru
      _
    // Predicated region
    $region50: #{tpu_custom_call.1} parent=1 // pred_check
      _
    $region51: #{tpu_custom_call.1} parent=1 // pred_check_branch
      %75 = sbr.rel (0) target = $region53
    $region52: #{tpu_custom_call.1} parent=1 // pred_region
      _
    $region53: #{tpu_custom_call.1} parent=1 // pred_fallthru
      _
    // Predicated region
    $region54: #{tpu_custom_call.1} parent=1 // pred_check
      _
    $region55: #{tpu_custom_call.1} parent=1 // pred_check_branch
      %77 = sbr.rel (0) target = $region57
    $region56: #{tpu_custom_call.1} parent=1 // pred_region
      _
    $region57: #{tpu_custom_call.1} parent=1 // pred_fallthru
      _
    // Predicated region
    $region58: #{tpu_custom_call.1} parent=1 // pred_check
      _
    $region59: #{tpu_custom_call.1} parent=1 // pred_check_branch
      %79 = sbr.rel (0) target = $region61
    $region60: #{tpu_custom_call.1} parent=1 // pred_region
      %s81 = ssub.s32 32, 32
      %82 = vsyncadd [#allocation6], %s81
      %s83 = sshll.u32 [#allocation7], 4
      %s84 = int_to_ptr.vmem [resolvable:$true] %s83
      %89 = dma.hbm_to_vmem [thread:$0]  %s14, 32, %s84, [#allocation6], 16, 16, 1
    $region61: #{tpu_custom_call.1} parent=1 // pred_fallthru
      _
    // Predicated region
    $region62: #{tpu_custom_call.1} parent=1 // pred_check
      _
    $region63: #{tpu_custom_call.1} parent=1 // pred_check_branch
      %91 = sbr.rel (0) target = $region65
    $region64: #{tpu_custom_call.1} parent=1 // pred_region
      _
    $region65: #{tpu_custom_call.1} parent=1 // pred_fallthru
      _
    // Predicated region
    $region66: #{tpu_custom_call.1} parent=1 // pred_check
      _
    $region67: #{tpu_custom_call.1} parent=1 // pred_check_branch
      %93 = sbr.rel (0) target = $region69
    $region68: #{tpu_custom_call.1} parent=1 // pred_region
      _
    $region69: #{tpu_custom_call.1} parent=1 // pred_fallthru
      _
    // Predicated region
    $region70: #{tpu_custom_call.1} parent=1 // pred_check
      _
    $region71: #{tpu_custom_call.1} parent=1 // pred_check_branch
      %95 = sbr.rel (0) target = $region73
    $region72: #{tpu_custom_call.1} parent=1 // pred_region
      _
    $region73: #{tpu_custom_call.1} parent=1 // pred_fallthru
      _
    // Predicated region
    $region74: #{tpu_custom_call.1} parent=1 // pred_check
      _
    $region75: #{tpu_custom_call.1} parent=1 // pred_check_branch
      %97 = sbr.rel (0) target = $region77
    $region76: #{tpu_custom_call.1} parent=1 // pred_region
      _
    $region77: #{tpu_custom_call.1} parent=1 // pred_fallthru
      _
    // Predicated region
    $region78: #{tpu_custom_call.1} parent=1 // pred_check
      _
    $region79: #{tpu_custom_call.1} parent=1 // pred_check_branch
      %99 = sbr.rel (0) target = $region81
    $region80: #{tpu_custom_call.1} parent=1 // pred_region
      _
    $region81: #{tpu_custom_call.1} parent=1 // pred_fallthru
      _
    // Predicated region
    $region82: #{tpu_custom_call.1} parent=1 // pred_check
      _
    $region83: #{tpu_custom_call.1} parent=1 // pred_check_branch
      %101 = sbr.rel (0) target = $region85
    $region84: #{tpu_custom_call.1} parent=1 // pred_region
      _
    $region85: #{tpu_custom_call.1} parent=1 // pred_fallthru
      _
    // Predicated region
    $region86: #{tpu_custom_call.1} parent=1 // pred_check
      _
    $region87: #{tpu_custom_call.1} parent=1 // pred_check_branch
      %103 = sbr.rel (0) target = $region89
    $region88: #{tpu_custom_call.1} parent=1 // pred_region
      %104 = dma.done [#allocation3], 256
    $region89: #{tpu_custom_call.1} parent=1 // pred_fallthru
      _
    // Predicated region
    $region90: #{tpu_custom_call.1} parent=1 // pred_check
      _
    $region91: #{tpu_custom_call.1} parent=1 // pred_check_branch
      %106 = sbr.rel (0) target = $region93
    $region92: #{tpu_custom_call.1} parent=1 // pred_region
      %107 = dma.done [#allocation6], 16
    $region93: #{tpu_custom_call.1} parent=1 // pred_fallthru
      _
    // Predicated region
    $region94: #{tpu_custom_call.1} parent=1 // pred_check
      _
    $region95: #{tpu_custom_call.1} parent=1 // pred_check_branch
      %109 = sbr.rel (0) target = $region97
    $region96: #{tpu_custom_call.1} parent=1 // pred_region
      %110 = dma.done [#allocation6], 32
    $region97: #{tpu_custom_call.1} parent=1 // pred_fallthru
      _
    %v111 = vld [vmem:[%s1] sm:$0x3]
    %v112 = vld [vmem:[#allocation2] sm:$0xff]
    %v113 = vld [vmem:[#allocation2 + $0x8] sm:$0xff]
    %v114 = vld [vmem:[%s5] sm:$0x1]
    %v115 = vld [vmem:[#allocation5] sm:$0x1]
    %vm116 = vcmask 261120
    %v117 = vsel %vm116, %v112, 0.0
    %118 = vadd.xlane.f32.xlu0 %v117
    %v119 = vpop.xlane.xlu0 %118
    %v120 = vsel %vm116, %v113, 0.0
    %121 = vadd.xlane.f32.xlu0 %v120
    %v122 = vpop.xlane.xlu0 %121
    %v123 = vrcp.pop 32.0
    %v124 = vmul.f32 %v119, %v123
    %v125 = vmul.f32 %v122, %v123
    %v126 = vsub.f32 %v112, %v124
    %v127 = vsub.f32 %v113, %v125
    %v128 = vmul.f32 %v126, %v126
    %v129 = vmul.f32 %v127, %v127
    %v130 = vsel %vm116, %v128, 0.0
    %131 = vadd.xlane.f32.xlu0 %v130
    %v132 = vpop.xlane.xlu0 %131
    %v133 = vsel %vm116, %v129, 0.0
    %134 = vadd.xlane.f32.xlu0 %v133
    %v135 = vpop.xlane.xlu0 %134
    %v136 = vmul.f32 %v132, %v123
    %v137 = vmul.f32 %v135, %v123
    %v138 = vadd.f32 %v136, 1e-12
    %v139 = vadd.f32 %v137, 1e-12
    %v140 = vrsqrt.pop %v138
    %v141 = vrsqrt.pop %v139
    %v142 = vmul.f32 %v126, %v140
    %v143 = vmul.f32 %v127, %v141
    %v145 = vlaneseq
    %v146 = vshrl.u32 %v145, 7
    %v147 = vsub.s32 0, %v146
    %v148 = vrot.slane %v114, %v147
    %v150 = vmul.f32 %v142, %v148
    %v151 = vmul.f32 %v143, %v148
    %v153 = vlaneseq
    %v154 = vshrl.u32 %v153, 7
    %v155 = vsub.s32 0, %v154
    %v156 = vrot.slane %v115, %v155
    %v158 = vadd.f32 %v150, %v156
    %v159 = vadd.f32 %v151, %v156
    %v160 = vld [vmem:[%s7] sm:$0xff]
    %v161 = vld [vmem:[%s7 + $0x8] sm:$0xff]
    %v162 = vld [vmem:[%s7 + $0x10] sm:$0xff]
    %v163 = vld [vmem:[%s7 + $0x18] sm:$0xff]
    %v164 = vld [vmem:[%s8] sm:$0x1]
    %v166 = vlaneseq
    %v167 = vshrl.u32 %v166, 7
    %v168 = vsub.s32 0, %v167
    %v169 = vrot.slane %v164, %v168
    %v172 = vsel %vm116, %v158, 0
    %v175 = vsel %vm116, %v159, 0
    %177 = vmatprep.subr.mxu0 0.0
    %178 = vmatpush1.msra.mxu0 %v160
    %179 = vmatprep.subr.mxu0 0.0
    %180 = vmatpush1.msra.mxu0 %v161
    %181 = vmatprep.subr.mxu0 0.0
    %182 = vmatpush1.msra.mxu0 %v162
    %183 = vmatprep.subr.mxu0 0.0
    %184 = vmatpush1.msra.mxu0 %v163
    %185 = vmatprep.subr.mxu0 0.0
    %186 = vmatpush1.msra.mxu0 0.0
    %187 = vmatprep.subr.mxu0 0.0
    %188 = vmatpush1.msra.mxu0 0.0
    %189 = vmatprep.subr.mxu0 0.0
    %190 = vmatpush1.msra.mxu0 0.0
    %191 = vmatprep.subr.mxu0 0.0
    %192 = vmatpush1.msra.mxu0 0.0
    %193 = vmatprep.subr.mxu0 0.0
    %194 = vmatpush1.msra.mxu0 0.0
    %195 = vmatprep.subr.mxu0 0.0
    %196 = vmatpush1.msra.mxu0 0.0
    %197 = vmatprep.subr.mxu0 0.0
    %198 = vmatpush1.msra.mxu0 0.0
    %199 = vmatprep.subr.mxu0 0.0
    %200 = vmatpush1.msra.mxu0 0.0
    %201 = vmatprep.subr.mxu0 0.0
    %202 = vmatpush1.msra.mxu0 0.0
    %203 = vmatprep.subr.mxu0 0.0
    %204 = vmatpush1.msra.mxu0 0.0
    %205 = vmatprep.subr.mxu0 0.0
    %206 = vmatpush1.msra.mxu0 0.0
    %207 = vmatprep.subr.mxu0 0.0
    %208 = vmatpush1.msra.mxu0 0.0
    %209 = vmatprep.subr.mxu0 0.0
    %210 = vmatpush1.msra.mxu0 0.0
    %211 = vmatprep.subr.mxu0 0.0
    %212 = vmatpush1.msra.mxu0 0.0
    %213 = vmatprep.subr.mxu0 0.0
    %214 = vmatpush1.msra.mxu0 0.0
    %215 = vmatprep.subr.mxu0 0.0
    %216 = vmatpush1.msra.mxu0 0.0
    %217 = vmatprep.subr.mxu0 0.0
    %218 = vmatpush1.msra.mxu0 0.0
    %219 = vmatprep.subr.mxu0 0.0
    %220 = vmatpush1.msra.mxu0 0.0
    %221 = vmatprep.subr.mxu0 0.0
    %222 = vmatpush1.msra.mxu0 0.0
    %223 = vmatprep.subr.mxu0 0.0
    %224 = vmatpush1.msra.mxu0 0.0
    %225 = vmatprep.subr.mxu0 0.0
    %226 = vmatpush1.msra.mxu0 0.0
    %227 = vmatprep.subr.mxu0 0.0
    %228 = vmatpush1.msra.mxu0 0.0
    %229 = vmatprep.subr.mxu0 0.0
    %230 = vmatpush1.msra.mxu0 0.0
    %231 = vmatprep.subr.mxu0 0.0
    %232 = vmatpush1.msra.mxu0 0.0
    %233 = vmatprep.subr.mxu0 0.0
    %234 = vmatpush1.msra.mxu0 0.0
    %235 = vmatprep.subr.mxu0 0.0
    %236 = vmatpush1.msra.mxu0 0.0
    %237 = vmatprep.subr.mxu0 0.0
    %238 = vmatpush1.msra.mxu0 0.0
    %239 = vmatprep.subr.mxu0 0.0
    %240 = vmatpush1.msra.mxu0 0.0
    %241 = vmatprep.mubr.f32.mxu0 0.0
    %242 = vmatmul.mubr.f32.gmra.mrb[0].mxu0 %v172
    %v243 = vpop.f32.mrb[0].mxu0
    %v244 = vadd.f32 %v169, %v243
    %v245 = vpop.f32.mrb[0].mxu0
    %246 = vmatprep.mubr.f32.mxu0 0.0
    %247 = vmatmul.mubr.f32.gmra.mrb[0].mxu0 %v175
    %v248 = vpop.f32.mrb[0].mxu0
    %v249 = vadd.f32 %v169, %v248
    %v250 = vpop.f32.mrb[0].mxu0
    %251 = vdwg.mxu0
    %253 = vrot.lane.b32.xlu0 %v244, 96
    %v254 = vpop.permute.xlu0 %253
    %vm255 = vcmask 64512
    %v256 = vsel %vm255, %v244, 0
    %v258 = vsel %vm255, %v254, 0
    %260 = vmatprep.subr.mxu0 0.0
    %261 = vmatpush1.xpose.msra.mxu0 %v258
    %262 = vmatprep.subr.mxu0 0.0
    %263 = vmatpush1.xpose.msra.mxu0 0.0
    %264 = vmatprep.subr.mxu0 0.0
    %265 = vmatpush1.xpose.msra.mxu0 0.0
    %266 = vmatprep.subr.mxu0 0.0
    %267 = vmatpush1.xpose.msra.mxu0 0.0
    %268 = vmatprep.subr.mxu0 0.0
    %269 = vmatpush1.xpose.msra.mxu0 0.0
    %270 = vmatprep.subr.mxu0 0.0
    %271 = vmatpush1.xpose.msra.mxu0 0.0
    %272 = vmatprep.subr.mxu0 0.0
    %273 = vmatpush1.xpose.msra.mxu0 0.0
    %274 = vmatprep.subr.mxu0 0.0
    %275 = vmatpush1.xpose.msra.mxu0 0.0
    %276 = vmatprep.subr.mxu0 0.0
    %277 = vmatpush1.xpose.msra.mxu0 0.0
    %278 = vmatprep.subr.mxu0 0.0
    %279 = vmatpush1.xpose.msra.mxu0 0.0
    %280 = vmatprep.subr.mxu0 0.0
    %281 = vmatpush1.xpose.msra.mxu0 0.0
    %282 = vmatprep.subr.mxu0 0.0
    %283 = vmatpush1.xpose.msra.mxu0 0.0
    %284 = vmatprep.subr.mxu0 0.0
    %285 = vmatpush1.xpose.msra.mxu0 0.0
    %286 = vmatprep.subr.mxu0 0.0
    %287 = vmatpush1.xpose.msra.mxu0 0.0
    %288 = vmatprep.subr.mxu0 0.0
    %289 = vmatpush1.xpose.msra.mxu0 0.0
    %290 = vmatprep.subr.mxu0 0.0
    %291 = vmatpush1.xpose.msra.mxu0 0.0
    %292 = vmatprep.subr.mxu0 0.0
    %293 = vmatpush1.xpose.msra.mxu0 0.0
    %294 = vmatprep.subr.mxu0 0.0
    %295 = vmatpush1.xpose.msra.mxu0 0.0
    %296 = vmatprep.subr.mxu0 0.0
    %297 = vmatpush1.xpose.msra.mxu0 0.0
    %298 = vmatprep.subr.mxu0 0.0
    %299 = vmatpush1.xpose.msra.mxu0 0.0
    %300 = vmatprep.subr.mxu0 0.0
    %301 = vmatpush1.xpose.msra.mxu0 0.0
    %302 = vmatprep.subr.mxu0 0.0
    %303 = vmatpush1.xpose.msra.mxu0 0.0
    %304 = vmatprep.subr.mxu0 0.0
    %305 = vmatpush1.xpose.msra.mxu0 0.0
    %306 = vmatprep.subr.mxu0 0.0
    %307 = vmatpush1.xpose.msra.mxu0 0.0
    %308 = vmatprep.subr.mxu0 0.0
    %309 = vmatpush1.xpose.msra.mxu0 0.0
    %310 = vmatprep.subr.mxu0 0.0
    %311 = vmatpush1.xpose.msra.mxu0 0.0
    %312 = vmatprep.subr.mxu0 0.0
    %313 = vmatpush1.xpose.msra.mxu0 0.0
    %314 = vmatprep.subr.mxu0 0.0
    %315 = vmatpush1.xpose.msra.mxu0 0.0
    %316 = vmatprep.subr.mxu0 0.0
    %317 = vmatpush1.xpose.msra.mxu0 0.0
    %318 = vmatprep.subr.mxu0 0.0
    %319 = vmatpush1.xpose.msra.mxu0 0.0
    %320 = vmatprep.subr.mxu0 0.0
    %321 = vmatpush1.xpose.msra.mxu0 0.0
    %322 = vmatprep.subr.mxu0 0.0
    %323 = vmatpush1.xpose.msra.mxu0 0.0
    %324 = vmatprep.mubr.f32.mxu0 0.0
    %325 = vmatmul.mubr.f32.gmra.mrb[0].mxu0 %v256
    %v326 = vpop.f32.mrb[0].mxu0
    %v327 = vadd.f32 0.0, %v326
    %v328 = vpop.f32.mrb[0].mxu0
    %329 = vdwg.mxu0
    %v330 = vmul.f32 %v327, 0.35355338
    %v331 = vlaneseq
    %v332 = vshrl.u32 %v331, 7
    %v333 = vsub.s32 0, %v332
    %v334 = vrot.slane %v111, %v333
    %v335 = vadd.f32 %v330, %v334
    %v336 = vsel %vm255, %v335, -inf
    %337 = vmax.xlane.f32.xlu0 %v336
    %v338 = vpop.xlane.xlu0 %337
    %v339 = vsub.f32 %v335, %v338
    %v340 = vmul.f32 %v339, 1.442695
    %v341 = vpow.pop %v340
    %v342 = vsel %vm255, %v341, 0.0
    %343 = vadd.xlane.f32.xlu0 %v342
    %v344 = vpop.xlane.xlu0 %343
    %v345 = vrcp.pop %v344
    %v346 = vmul.f32 %v341, %v345
    %347 = vrot.lane.b32.xlu0 %v244, 64
    %v348 = vpop.permute.xlu0 %347
    %v351 = vsel %vm255, %v346, 0
    %353 = vmatprep.subr.mxu0 0.0
    %354 = vmatpush1.msra.mxu0 %v348
    %355 = vmatprep.subr.mxu0 0.0
    %356 = vmatpush1.msra.mxu0 0.0
    %357 = vmatprep.subr.mxu0 0.0
    %358 = vmatpush1.msra.mxu0 0.0
    %359 = vmatprep.subr.mxu0 0.0
    %360 = vmatpush1.msra.mxu0 0.0
    %361 = vmatprep.subr.mxu0 0.0
    %362 = vmatpush1.msra.mxu0 0.0
    %363 = vmatprep.subr.mxu0 0.0
    %364 = vmatpush1.msra.mxu0 0.0
    %365 = vmatprep.subr.mxu0 0.0
    %366 = vmatpush1.msra.mxu0 0.0
    %367 = vmatprep.subr.mxu0 0.0
    %368 = vmatpush1.msra.mxu0 0.0
    %369 = vmatprep.subr.mxu0 0.0
    %370 = vmatpush1.msra.mxu0 0.0
    %371 = vmatprep.subr.mxu0 0.0
    %372 = vmatpush1.msra.mxu0 0.0
    %373 = vmatprep.subr.mxu0 0.0
    %374 = vmatpush1.msra.mxu0 0.0
    %375 = vmatprep.subr.mxu0 0.0
    %376 = vmatpush1.msra.mxu0 0.0
    %377 = vmatprep.subr.mxu0 0.0
    %378 = vmatpush1.msra.mxu0 0.0
    %379 = vmatprep.subr.mxu0 0.0
    %380 = vmatpush1.msra.mxu0 0.0
    %381 = vmatprep.subr.mxu0 0.0
    %382 = vmatpush1.msra.mxu0 0.0
    %383 = vmatprep.subr.mxu0 0.0
    %384 = vmatpush1.msra.mxu0 0.0
    %385 = vmatprep.subr.mxu0 0.0
    %386 = vmatpush1.msra.mxu0 0.0
    %387 = vmatprep.subr.mxu0 0.0
    %388 = vmatpush1.msra.mxu0 0.0
    %389 = vmatprep.subr.mxu0 0.0
    %390 = vmatpush1.msra.mxu0 0.0
    %391 = vmatprep.subr.mxu0 0.0
    %392 = vmatpush1.msra.mxu0 0.0
    %393 = vmatprep.subr.mxu0 0.0
    %394 = vmatpush1.msra.mxu0 0.0
    %395 = vmatprep.subr.mxu0 0.0
    %396 = vmatpush1.msra.mxu0 0.0
    %397 = vmatprep.subr.mxu0 0.0
    %398 = vmatpush1.msra.mxu0 0.0
    %399 = vmatprep.subr.mxu0 0.0
    %400 = vmatpush1.msra.mxu0 0.0
    %401 = vmatprep.subr.mxu0 0.0
    %402 = vmatpush1.msra.mxu0 0.0
    %403 = vmatprep.subr.mxu0 0.0
    %404 = vmatpush1.msra.mxu0 0.0
    %405 = vmatprep.subr.mxu0 0.0
    %406 = vmatpush1.msra.mxu0 0.0
    %407 = vmatprep.subr.mxu0 0.0
    %408 = vmatpush1.msra.mxu0 0.0
    %409 = vmatprep.subr.mxu0 0.0
    %410 = vmatpush1.msra.mxu0 0.0
    %411 = vmatprep.subr.mxu0 0.0
    %412 = vmatpush1.msra.mxu0 0.0
    %413 = vmatprep.subr.mxu0 0.0
    %414 = vmatpush1.msra.mxu0 0.0
    %415 = vmatprep.subr.mxu0 0.0
    %416 = vmatpush1.msra.mxu0 0.0
    %417 = vmatprep.mubr.f32.mxu0 0.0
    %418 = vmatmul.mubr.f32.gmra.mrb[0].mxu0 %v351
    %v419 = vpop.f32.mrb[0].mxu0
    %v420 = vadd.f32 0.0, %v419
    %v421 = vpop.f32.mrb[0].mxu0
    %422 = vdwg.mxu0
    %423 = vrot.lane.b32.xlu0 %v244, 120
    %v424 = vpop.permute.xlu0 %423
    %425 = vrot.lane.b32.xlu0 %v244, 88
    %v426 = vpop.permute.xlu0 %425
    %v427 = vsel %vm255, %v424, 0
    %v429 = vsel %vm255, %v426, 0
    %431 = vmatprep.subr.mxu0 0.0
    %432 = vmatpush1.xpose.msra.mxu0 %v429
    %433 = vmatprep.subr.mxu0 0.0
    %434 = vmatpush1.xpose.msra.mxu0 0.0
    %435 = vmatprep.subr.mxu0 0.0
    %436 = vmatpush1.xpose.msra.mxu0 0.0
    %437 = vmatprep.subr.mxu0 0.0
    %438 = vmatpush1.xpose.msra.mxu0 0.0
    %439 = vmatprep.subr.mxu0 0.0
    %440 = vmatpush1.xpose.msra.mxu0 0.0
    %441 = vmatprep.subr.mxu0 0.0
    %442 = vmatpush1.xpose.msra.mxu0 0.0
    %443 = vmatprep.subr.mxu0 0.0
    %444 = vmatpush1.xpose.msra.mxu0 0.0
    %445 = vmatprep.subr.mxu0 0.0
    %446 = vmatpush1.xpose.msra.mxu0 0.0
    %447 = vmatprep.subr.mxu0 0.0
    %448 = vmatpush1.xpose.msra.mxu0 0.0
    %449 = vmatprep.subr.mxu0 0.0
    %450 = vmatpush1.xpose.msra.mxu0 0.0
    %451 = vmatprep.subr.mxu0 0.0
    %452 = vmatpush1.xpose.msra.mxu0 0.0
    %453 = vmatprep.subr.mxu0 0.0
    %454 = vmatpush1.xpose.msra.mxu0 0.0
    %455 = vmatprep.subr.mxu0 0.0
    %456 = vmatpush1.xpose.msra.mxu0 0.0
    %457 = vmatprep.subr.mxu0 0.0
    %458 = vmatpush1.xpose.msra.mxu0 0.0
    %459 = vmatprep.subr.mxu0 0.0
    %460 = vmatpush1.xpose.msra.mxu0 0.0
    %461 = vmatprep.subr.mxu0 0.0
    %462 = vmatpush1.xpose.msra.mxu0 0.0
    %463 = vmatprep.subr.mxu0 0.0
    %464 = vmatpush1.xpose.msra.mxu0 0.0
    %465 = vmatprep.subr.mxu0 0.0
    %466 = vmatpush1.xpose.msra.mxu0 0.0
    %467 = vmatprep.subr.mxu0 0.0
    %468 = vmatpush1.xpose.msra.mxu0 0.0
    %469 = vmatprep.subr.mxu0 0.0
    %470 = vmatpush1.xpose.msra.mxu0 0.0
    %471 = vmatprep.subr.mxu0 0.0
    %472 = vmatpush1.xpose.msra.mxu0 0.0
    %473 = vmatprep.subr.mxu0 0.0
    %474 = vmatpush1.xpose.msra.mxu0 0.0
    %475 = vmatprep.subr.mxu0 0.0
    %476 = vmatpush1.xpose.msra.mxu0 0.0
    %477 = vmatprep.subr.mxu0 0.0
    %478 = vmatpush1.xpose.msra.mxu0 0.0
    %479 = vmatprep.subr.mxu0 0.0
    %480 = vmatpush1.xpose.msra.mxu0 0.0
    %481 = vmatprep.subr.mxu0 0.0
    %482 = vmatpush1.xpose.msra.mxu0 0.0
    %483 = vmatprep.subr.mxu0 0.0
    %484 = vmatpush1.xpose.msra.mxu0 0.0
    %485 = vmatprep.subr.mxu0 0.0
    %486 = vmatpush1.xpose.msra.mxu0 0.0
    %487 = vmatprep.subr.mxu0 0.0
    %488 = vmatpush1.xpose.msra.mxu0 0.0
    %489 = vmatprep.subr.mxu0 0.0
    %490 = vmatpush1.xpose.msra.mxu0 0.0
    %491 = vmatprep.subr.mxu0 0.0
    %492 = vmatpush1.xpose.msra.mxu0 0.0
    %493 = vmatprep.subr.mxu0 0.0
    %494 = vmatpush1.xpose.msra.mxu0 0.0
    %495 = vmatprep.mubr.f32.mxu0 0.0
    %496 = vmatmul.mubr.f32.gmra.mrb[0].mxu0 %v427
    %v497 = vpop.f32.mrb[0].mxu0
    %v498 = vadd.f32 0.0, %v497
    %v499 = vpop.f32.mrb[0].mxu0
    %500 = vdwg.mxu0
    %v501 = vmul.f32 %v498, 0.35355338
    %v502 = vadd.f32 %v501, %v334
    %v503 = vsel %vm255, %v502, -inf
    %504 = vmax.xlane.f32.xlu0 %v503
    %v505 = vpop.xlane.xlu0 %504
    %v506 = vsub.f32 %v502, %v505
    %v507 = vmul.f32 %v506, 1.442695
    %v508 = vpow.pop %v507
    %v509 = vsel %vm255, %v508, 0.0
    %510 = vadd.xlane.f32.xlu0 %v509
    %v511 = vpop.xlane.xlu0 %510
    %v512 = vrcp.pop %v511
    %v513 = vmul.f32 %v508, %v512
    %514 = vrot.lane.b32.xlu0 %v244, 56
    %v515 = vpop.permute.xlu0 %514
    %v518 = vsel %vm255, %v513, 0
    %520 = vmatprep.subr.mxu0 0.0
    %521 = vmatpush1.msra.mxu0 %v515
    %522 = vmatprep.subr.mxu0 0.0
    %523 = vmatpush1.msra.mxu0 0.0
    %524 = vmatprep.subr.mxu0 0.0
    %525 = vmatpush1.msra.mxu0 0.0
    %526 = vmatprep.subr.mxu0 0.0
    %527 = vmatpush1.msra.mxu0 0.0
    %528 = vmatprep.subr.mxu0 0.0
    %529 = vmatpush1.msra.mxu0 0.0
    %530 = vmatprep.subr.mxu0 0.0
    %531 = vmatpush1.msra.mxu0 0.0
    %532 = vmatprep.subr.mxu0 0.0
    %533 = vmatpush1.msra.mxu0 0.0
    %534 = vmatprep.subr.mxu0 0.0
    %535 = vmatpush1.msra.mxu0 0.0
    %536 = vmatprep.subr.mxu0 0.0
    %537 = vmatpush1.msra.mxu0 0.0
    %538 = vmatprep.subr.mxu0 0.0
    %539 = vmatpush1.msra.mxu0 0.0
    %540 = vmatprep.subr.mxu0 0.0
    %541 = vmatpush1.msra.mxu0 0.0
    %542 = vmatprep.subr.mxu0 0.0
    %543 = vmatpush1.msra.mxu0 0.0
    %544 = vmatprep.subr.mxu0 0.0
    %545 = vmatpush1.msra.mxu0 0.0
    %546 = vmatprep.subr.mxu0 0.0
    %547 = vmatpush1.msra.mxu0 0.0
    %548 = vmatprep.subr.mxu0 0.0
    %549 = vmatpush1.msra.mxu0 0.0
    %550 = vmatprep.subr.mxu0 0.0
    %551 = vmatpush1.msra.mxu0 0.0
    %552 = vmatprep.subr.mxu0 0.0
    %553 = vmatpush1.msra.mxu0 0.0
    %554 = vmatprep.subr.mxu0 0.0
    %555 = vmatpush1.msra.mxu0 0.0
    %556 = vmatprep.subr.mxu0 0.0
    %557 = vmatpush1.msra.mxu0 0.0
    %558 = vmatprep.subr.mxu0 0.0
    %559 = vmatpush1.msra.mxu0 0.0
    %560 = vmatprep.subr.mxu0 0.0
    %561 = vmatpush1.msra.mxu0 0.0
    %562 = vmatprep.subr.mxu0 0.0
    %563 = vmatpush1.msra.mxu0 0.0
    %564 = vmatprep.subr.mxu0 0.0
    %565 = vmatpush1.msra.mxu0 0.0
    %566 = vmatprep.subr.mxu0 0.0
    %567 = vmatpush1.msra.mxu0 0.0
    %568 = vmatprep.subr.mxu0 0.0
    %569 = vmatpush1.msra.mxu0 0.0
    %570 = vmatprep.subr.mxu0 0.0
    %571 = vmatpush1.msra.mxu0 0.0
    %572 = vmatprep.subr.mxu0 0.0
    %573 = vmatpush1.msra.mxu0 0.0
    %574 = vmatprep.subr.mxu0 0.0
    %575 = vmatpush1.msra.mxu0 0.0
    %576 = vmatprep.subr.mxu0 0.0
    %577 = vmatpush1.msra.mxu0 0.0
    %578 = vmatprep.subr.mxu0 0.0
    %579 = vmatpush1.msra.mxu0 0.0
    %580 = vmatprep.subr.mxu0 0.0
    %581 = vmatpush1.msra.mxu0 0.0
    %582 = vmatprep.subr.mxu0 0.0
    %583 = vmatpush1.msra.mxu0 0.0
    %584 = vmatprep.mubr.f32.mxu0 0.0
    %585 = vmatmul.mubr.f32.gmra.mrb[0].mxu0 %v518
    %v586 = vpop.f32.mrb[0].mxu0
    %v587 = vadd.f32 0.0, %v586
    %v588 = vpop.f32.mrb[0].mxu0
    %589 = vdwg.mxu0
    %590 = vrot.lane.b32.xlu0 %v244, 112
    %v591 = vpop.permute.xlu0 %590
    %592 = vrot.lane.b32.xlu0 %v244, 80
    %v593 = vpop.permute.xlu0 %592
    %v594 = vsel %vm255, %v591, 0
    %v596 = vsel %vm255, %v593, 0
    %598 = vmatprep.subr.mxu0 0.0
    %599 = vmatpush1.xpose.msra.mxu0 %v596
    %600 = vmatprep.subr.mxu0 0.0
    %601 = vmatpush1.xpose.msra.mxu0 0.0
    %602 = vmatprep.subr.mxu0 0.0
    %603 = vmatpush1.xpose.msra.mxu0 0.0
    %604 = vmatprep.subr.mxu0 0.0
    %605 = vmatpush1.xpose.msra.mxu0 0.0
    %606 = vmatprep.subr.mxu0 0.0
    %607 = vmatpush1.xpose.msra.mxu0 0.0
    %608 = vmatprep.subr.mxu0 0.0
    %609 = vmatpush1.xpose.msra.mxu0 0.0
    %610 = vmatprep.subr.mxu0 0.0
    %611 = vmatpush1.xpose.msra.mxu0 0.0
    %612 = vmatprep.subr.mxu0 0.0
    %613 = vmatpush1.xpose.msra.mxu0 0.0
    %614 = vmatprep.subr.mxu0 0.0
    %615 = vmatpush1.xpose.msra.mxu0 0.0
    %616 = vmatprep.subr.mxu0 0.0
    %617 = vmatpush1.xpose.msra.mxu0 0.0
    %618 = vmatprep.subr.mxu0 0.0
    %619 = vmatpush1.xpose.msra.mxu0 0.0
    %620 = vmatprep.subr.mxu0 0.0
    %621 = vmatpush1.xpose.msra.mxu0 0.0
    %622 = vmatprep.subr.mxu0 0.0
    %623 = vmatpush1.xpose.msra.mxu0 0.0
    %624 = vmatprep.subr.mxu0 0.0
    %625 = vmatpush1.xpose.msra.mxu0 0.0
    %626 = vmatprep.subr.mxu0 0.0
    %627 = vmatpush1.xpose.msra.mxu0 0.0
    %628 = vmatprep.subr.mxu0 0.0
    %629 = vmatpush1.xpose.msra.mxu0 0.0
    %630 = vmatprep.subr.mxu0 0.0
    %631 = vmatpush1.xpose.msra.mxu0 0.0
    %632 = vmatprep.subr.mxu0 0.0
    %633 = vmatpush1.xpose.msra.mxu0 0.0
    %634 = vmatprep.subr.mxu0 0.0
    %635 = vmatpush1.xpose.msra.mxu0 0.0
    %636 = vmatprep.subr.mxu0 0.0
    %637 = vmatpush1.xpose.msra.mxu0 0.0
    %638 = vmatprep.subr.mxu0 0.0
    %639 = vmatpush1.xpose.msra.mxu0 0.0
    %640 = vmatprep.subr.mxu0 0.0
    %641 = vmatpush1.xpose.msra.mxu0 0.0
    %642 = vmatprep.subr.mxu0 0.0
    %643 = vmatpush1.xpose.msra.mxu0 0.0
    %644 = vmatprep.subr.mxu0 0.0
    %645 = vmatpush1.xpose.msra.mxu0 0.0
    %646 = vmatprep.subr.mxu0 0.0
    %647 = vmatpush1.xpose.msra.mxu0 0.0
    %648 = vmatprep.subr.mxu0 0.0
    %649 = vmatpush1.xpose.msra.mxu0 0.0
    %650 = vmatprep.subr.mxu0 0.0
    %651 = vmatpush1.xpose.msra.mxu0 0.0
    %652 = vmatprep.subr.mxu0 0.0
    %653 = vmatpush1.xpose.msra.mxu0 0.0
    %654 = vmatprep.subr.mxu0 0.0
    %655 = vmatpush1.xpose.msra.mxu0 0.0
    %656 = vmatprep.subr.mxu0 0.0
    %657 = vmatpush1.xpose.msra.mxu0 0.0
    %658 = vmatprep.subr.mxu0 0.0
    %659 = vmatpush1.xpose.msra.mxu0 0.0
    %660 = vmatprep.subr.mxu0 0.0
    %661 = vmatpush1.xpose.msra.mxu0 0.0
    %662 = vmatprep.mubr.f32.mxu0 0.0
    %663 = vmatmul.mubr.f32.gmra.mrb[0].mxu0 %v594
    %v664 = vpop.f32.mrb[0].mxu0
    %v665 = vadd.f32 0.0, %v664
    %v666 = vpop.f32.mrb[0].mxu0
    %667 = vdwg.mxu0
    %v668 = vmul.f32 %v665, 0.35355338
    %v669 = vadd.f32 %v668, %v334
    %v670 = vsel %vm255, %v669, -inf
    %671 = vmax.xlane.f32.xlu0 %v670
    %v672 = vpop.xlane.xlu0 %671
    %v673 = vsub.f32 %v669, %v672
    %v674 = vmul.f32 %v673, 1.442695
    %v675 = vpow.pop %v674
    %v676 = vsel %vm255, %v675, 0.0
    %677 = vadd.xlane.f32.xlu0 %v676
    %v678 = vpop.xlane.xlu0 %677
    %v679 = vrcp.pop %v678
    %v680 = vmul.f32 %v675, %v679
    %681 = vrot.lane.b32.xlu0 %v244, 48
    %v682 = vpop.permute.xlu0 %681
    %v685 = vsel %vm255, %v680, 0
    %687 = vmatprep.subr.mxu0 0.0
    %688 = vmatpush1.msra.mxu0 %v682
    %689 = vmatprep.subr.mxu0 0.0
    %690 = vmatpush1.msra.mxu0 0.0
    %691 = vmatprep.subr.mxu0 0.0
    %692 = vmatpush1.msra.mxu0 0.0
    %693 = vmatprep.subr.mxu0 0.0
    %694 = vmatpush1.msra.mxu0 0.0
    %695 = vmatprep.subr.mxu0 0.0
    %696 = vmatpush1.msra.mxu0 0.0
    %697 = vmatprep.subr.mxu0 0.0
    %698 = vmatpush1.msra.mxu0 0.0
    %699 = vmatprep.subr.mxu0 0.0
    %700 = vmatpush1.msra.mxu0 0.0
    %701 = vmatprep.subr.mxu0 0.0
    %702 = vmatpush1.msra.mxu0 0.0
    %703 = vmatprep.subr.mxu0 0.0
    %704 = vmatpush1.msra.mxu0 0.0
    %705 = vmatprep.subr.mxu0 0.0
    %706 = vmatpush1.msra.mxu0 0.0
    %707 = vmatprep.subr.mxu0 0.0
    %708 = vmatpush1.msra.mxu0 0.0
    %709 = vmatprep.subr.mxu0 0.0
    %710 = vmatpush1.msra.mxu0 0.0
    %711 = vmatprep.subr.mxu0 0.0
    %712 = vmatpush1.msra.mxu0 0.0
    %713 = vmatprep.subr.mxu0 0.0
    %714 = vmatpush1.msra.mxu0 0.0
    %715 = vmatprep.subr.mxu0 0.0
    %716 = vmatpush1.msra.mxu0 0.0
    %717 = vmatprep.subr.mxu0 0.0
    %718 = vmatpush1.msra.mxu0 0.0
    %719 = vmatprep.subr.mxu0 0.0
    %720 = vmatpush1.msra.mxu0 0.0
    %721 = vmatprep.subr.mxu0 0.0
    %722 = vmatpush1.msra.mxu0 0.0
    %723 = vmatprep.subr.mxu0 0.0
    %724 = vmatpush1.msra.mxu0 0.0
    %725 = vmatprep.subr.mxu0 0.0
    %726 = vmatpush1.msra.mxu0 0.0
    %727 = vmatprep.subr.mxu0 0.0
    %728 = vmatpush1.msra.mxu0 0.0
    %729 = vmatprep.subr.mxu0 0.0
    %730 = vmatpush1.msra.mxu0 0.0
    %731 = vmatprep.subr.mxu0 0.0
    %732 = vmatpush1.msra.mxu0 0.0
    %733 = vmatprep.subr.mxu0 0.0
    %734 = vmatpush1.msra.mxu0 0.0
    %735 = vmatprep.subr.mxu0 0.0
    %736 = vmatpush1.msra.mxu0 0.0
    %737 = vmatprep.subr.mxu0 0.0
    %738 = vmatpush1.msra.mxu0 0.0
    %739 = vmatprep.subr.mxu0 0.0
    %740 = vmatpush1.msra.mxu0 0.0
    %741 = vmatprep.subr.mxu0 0.0
    %742 = vmatpush1.msra.mxu0 0.0
    %743 = vmatprep.subr.mxu0 0.0
    %744 = vmatpush1.msra.mxu0 0.0
    %745 = vmatprep.subr.mxu0 0.0
    %746 = vmatpush1.msra.mxu0 0.0
    %747 = vmatprep.subr.mxu0 0.0
    %748 = vmatpush1.msra.mxu0 0.0
    %749 = vmatprep.subr.mxu0 0.0
    %750 = vmatpush1.msra.mxu0 0.0
    %751 = vmatprep.mubr.f32.mxu0 0.0
    %752 = vmatmul.mubr.f32.gmra.mrb[0].mxu0 %v685
    %v753 = vpop.f32.mrb[0].mxu0
    %v754 = vadd.f32 0.0, %v753
    %v755 = vpop.f32.mrb[0].mxu0
    %756 = vdwg.mxu0
    %757 = vrot.lane.b32.xlu0 %v244, 104
    %v758 = vpop.permute.xlu0 %757
    %759 = vrot.lane.b32.xlu0 %v244, 72
    %v760 = vpop.permute.xlu0 %759
    %v761 = vsel %vm255, %v758, 0
    %v763 = vsel %vm255, %v760, 0
    %765 = vmatprep.subr.mxu0 0.0
    %766 = vmatpush1.xpose.msra.mxu0 %v763
    %767 = vmatprep.subr.mxu0 0.0
    %768 = vmatpush1.xpose.msra.mxu0 0.0
    %769 = vmatprep.subr.mxu0 0.0
    %770 = vmatpush1.xpose.msra.mxu0 0.0
    %771 = vmatprep.subr.mxu0 0.0
    %772 = vmatpush1.xpose.msra.mxu0 0.0
    %773 = vmatprep.subr.mxu0 0.0
    %774 = vmatpush1.xpose.msra.mxu0 0.0
    %775 = vmatprep.subr.mxu0 0.0
    %776 = vmatpush1.xpose.msra.mxu0 0.0
    %777 = vmatprep.subr.mxu0 0.0
    %778 = vmatpush1.xpose.msra.mxu0 0.0
    %779 = vmatprep.subr.mxu0 0.0
    %780 = vmatpush1.xpose.msra.mxu0 0.0
    %781 = vmatprep.subr.mxu0 0.0
    %782 = vmatpush1.xpose.msra.mxu0 0.0
    %783 = vmatprep.subr.mxu0 0.0
    %784 = vmatpush1.xpose.msra.mxu0 0.0
    %785 = vmatprep.subr.mxu0 0.0
    %786 = vmatpush1.xpose.msra.mxu0 0.0
    %787 = vmatprep.subr.mxu0 0.0
    %788 = vmatpush1.xpose.msra.mxu0 0.0
    %789 = vmatprep.subr.mxu0 0.0
    %790 = vmatpush1.xpose.msra.mxu0 0.0
    %791 = vmatprep.subr.mxu0 0.0
    %792 = vmatpush1.xpose.msra.mxu0 0.0
    %793 = vmatprep.subr.mxu0 0.0
    %794 = vmatpush1.xpose.msra.mxu0 0.0
    %795 = vmatprep.subr.mxu0 0.0
    %796 = vmatpush1.xpose.msra.mxu0 0.0
    %797 = vmatprep.subr.mxu0 0.0
    %798 = vmatpush1.xpose.msra.mxu0 0.0
    %799 = vmatprep.subr.mxu0 0.0
    %800 = vmatpush1.xpose.msra.mxu0 0.0
    %801 = vmatprep.subr.mxu0 0.0
    %802 = vmatpush1.xpose.msra.mxu0 0.0
    %803 = vmatprep.subr.mxu0 0.0
    %804 = vmatpush1.xpose.msra.mxu0 0.0
    %805 = vmatprep.subr.mxu0 0.0
    %806 = vmatpush1.xpose.msra.mxu0 0.0
    %807 = vmatprep.subr.mxu0 0.0
    %808 = vmatpush1.xpose.msra.mxu0 0.0
    %809 = vmatprep.subr.mxu0 0.0
    %810 = vmatpush1.xpose.msra.mxu0 0.0
    %811 = vmatprep.subr.mxu0 0.0
    %812 = vmatpush1.xpose.msra.mxu0 0.0
    %813 = vmatprep.subr.mxu0 0.0
    %814 = vmatpush1.xpose.msra.mxu0 0.0
    %815 = vmatprep.subr.mxu0 0.0
    %816 = vmatpush1.xpose.msra.mxu0 0.0
    %817 = vmatprep.subr.mxu0 0.0
    %818 = vmatpush1.xpose.msra.mxu0 0.0
    %819 = vmatprep.subr.mxu0 0.0
    %820 = vmatpush1.xpose.msra.mxu0 0.0
    %821 = vmatprep.subr.mxu0 0.0
    %822 = vmatpush1.xpose.msra.mxu0 0.0
    %823 = vmatprep.subr.mxu0 0.0
    %824 = vmatpush1.xpose.msra.mxu0 0.0
    %825 = vmatprep.subr.mxu0 0.0
    %826 = vmatpush1.xpose.msra.mxu0 0.0
    %827 = vmatprep.subr.mxu0 0.0
    %828 = vmatpush1.xpose.msra.mxu0 0.0
    %829 = vmatprep.mubr.f32.mxu0 0.0
    %830 = vmatmul.mubr.f32.gmra.mrb[0].mxu0 %v761
    %v831 = vpop.f32.mrb[0].mxu0
    %v832 = vadd.f32 0.0, %v831
    %v833 = vpop.f32.mrb[0].mxu0
    %834 = vdwg.mxu0
    %v835 = vmul.f32 %v832, 0.35355338
    %v836 = vadd.f32 %v835, %v334
    %v837 = vsel %vm255, %v836, -inf
    %838 = vmax.xlane.f32.xlu0 %v837
    %v839 = vpop.xlane.xlu0 %838
    %v840 = vsub.f32 %v836, %v839
    %v841 = vmul.f32 %v840, 1.442695
    %v842 = vpow.pop %v841
    %v843 = vsel %vm255, %v842, 0.0
    %844 = vadd.xlane.f32.xlu0 %v843
    %v845 = vpop.xlane.xlu0 %844
    %v846 = vrcp.pop %v845
    %v847 = vmul.f32 %v842, %v846
    %848 = vrot.lane.b32.xlu0 %v244, 40
    %v849 = vpop.permute.xlu0 %848
    %v852 = vsel %vm255, %v847, 0
    %854 = vmatprep.subr.mxu0 0.0
    %855 = vmatpush1.msra.mxu0 %v849
    %856 = vmatprep.subr.mxu0 0.0
    %857 = vmatpush1.msra.mxu0 0.0
    %858 = vmatprep.subr.mxu0 0.0
    %859 = vmatpush1.msra.mxu0 0.0
    %860 = vmatprep.subr.mxu0 0.0
    %861 = vmatpush1.msra.mxu0 0.0
    %862 = vmatprep.subr.mxu0 0.0
    %863 = vmatpush1.msra.mxu0 0.0
    %864 = vmatprep.subr.mxu0 0.0
    %865 = vmatpush1.msra.mxu0 0.0
    %866 = vmatprep.subr.mxu0 0.0
    %867 = vmatpush1.msra.mxu0 0.0
    %868 = vmatprep.subr.mxu0 0.0
    %869 = vmatpush1.msra.mxu0 0.0
    %870 = vmatprep.subr.mxu0 0.0
    %871 = vmatpush1.msra.mxu0 0.0
    %872 = vmatprep.subr.mxu0 0.0
    %873 = vmatpush1.msra.mxu0 0.0
    %874 = vmatprep.subr.mxu0 0.0
    %875 = vmatpush1.msra.mxu0 0.0
    %876 = vmatprep.subr.mxu0 0.0
    %877 = vmatpush1.msra.mxu0 0.0
    %878 = vmatprep.subr.mxu0 0.0
    %879 = vmatpush1.msra.mxu0 0.0
    %880 = vmatprep.subr.mxu0 0.0
    %881 = vmatpush1.msra.mxu0 0.0
    %882 = vmatprep.subr.mxu0 0.0
    %883 = vmatpush1.msra.mxu0 0.0
    %884 = vmatprep.subr.mxu0 0.0
    %885 = vmatpush1.msra.mxu0 0.0
    %886 = vmatprep.subr.mxu0 0.0
    %887 = vmatpush1.msra.mxu0 0.0
    %888 = vmatprep.subr.mxu0 0.0
    %889 = vmatpush1.msra.mxu0 0.0
    %890 = vmatprep.subr.mxu0 0.0
    %891 = vmatpush1.msra.mxu0 0.0
    %892 = vmatprep.subr.mxu0 0.0
    %893 = vmatpush1.msra.mxu0 0.0
    %894 = vmatprep.subr.mxu0 0.0
    %895 = vmatpush1.msra.mxu0 0.0
    %896 = vmatprep.subr.mxu0 0.0
    %897 = vmatpush1.msra.mxu0 0.0
    %898 = vmatprep.subr.mxu0 0.0
    %899 = vmatpush1.msra.mxu0 0.0
    %900 = vmatprep.subr.mxu0 0.0
    %901 = vmatpush1.msra.mxu0 0.0
    %902 = vmatprep.subr.mxu0 0.0
    %903 = vmatpush1.msra.mxu0 0.0
    %904 = vmatprep.subr.mxu0 0.0
    %905 = vmatpush1.msra.mxu0 0.0
    %906 = vmatprep.subr.mxu0 0.0
    %907 = vmatpush1.msra.mxu0 0.0
    %908 = vmatprep.subr.mxu0 0.0
    %909 = vmatpush1.msra.mxu0 0.0
    %910 = vmatprep.subr.mxu0 0.0
    %911 = vmatpush1.msra.mxu0 0.0
    %912 = vmatprep.subr.mxu0 0.0
    %913 = vmatpush1.msra.mxu0 0.0
    %914 = vmatprep.subr.mxu0 0.0
    %915 = vmatpush1.msra.mxu0 0.0
    %916 = vmatprep.subr.mxu0 0.0
    %917 = vmatpush1.msra.mxu0 0.0
    %918 = vmatprep.mubr.f32.mxu0 0.0
    %919 = vmatmul.mubr.f32.gmra.mrb[0].mxu0 %v852
    %v920 = vpop.f32.mrb[0].mxu0
    %v921 = vadd.f32 0.0, %v920
    %v922 = vpop.f32.mrb[0].mxu0
    %923 = vdwg.mxu0
    %925 = vrot.lane.b32.xlu0 %v587, 8
    %v926 = vpop.permute.xlu0 %925
    %929 = vrot.lane.b32.xlu0 %v754, 16
    %v930 = vpop.permute.xlu0 %929
    %933 = vrot.lane.b32.xlu0 %v921, 24
    %v934 = vpop.permute.xlu0 %933
    %v936 = vsel %vm255, %v420, %v926
    %vm937 = vcmask 130048
    %v938 = vsel %vm937, %v936, %v930
    %vm939 = vcmask 195584
    %v940 = vsel %vm939, %v938, %v934
    %942 = vrot.lane.b32.xlu0 %v249, 96
    %v943 = vpop.permute.xlu0 %942
    %v944 = vsel %vm255, %v249, 0
    %v946 = vsel %vm255, %v943, 0
    %948 = vmatprep.subr.mxu0 0.0
    %949 = vmatpush1.xpose.msra.mxu0 %v946
    %950 = vmatprep.subr.mxu0 0.0
    %951 = vmatpush1.xpose.msra.mxu0 0.0
    %952 = vmatprep.subr.mxu0 0.0
    %953 = vmatpush1.xpose.msra.mxu0 0.0
    %954 = vmatprep.subr.mxu0 0.0
    %955 = vmatpush1.xpose.msra.mxu0 0.0
    %956 = vmatprep.subr.mxu0 0.0
    %957 = vmatpush1.xpose.msra.mxu0 0.0
    %958 = vmatprep.subr.mxu0 0.0
    %959 = vmatpush1.xpose.msra.mxu0 0.0
    %960 = vmatprep.subr.mxu0 0.0
    %961 = vmatpush1.xpose.msra.mxu0 0.0
    %962 = vmatprep.subr.mxu0 0.0
    %963 = vmatpush1.xpose.msra.mxu0 0.0
    %964 = vmatprep.subr.mxu0 0.0
    %965 = vmatpush1.xpose.msra.mxu0 0.0
    %966 = vmatprep.subr.mxu0 0.0
    %967 = vmatpush1.xpose.msra.mxu0 0.0
    %968 = vmatprep.subr.mxu0 0.0
    %969 = vmatpush1.xpose.msra.mxu0 0.0
    %970 = vmatprep.subr.mxu0 0.0
    %971 = vmatpush1.xpose.msra.mxu0 0.0
    %972 = vmatprep.subr.mxu0 0.0
    %973 = vmatpush1.xpose.msra.mxu0 0.0
    %974 = vmatprep.subr.mxu0 0.0
    %975 = vmatpush1.xpose.msra.mxu0 0.0
    %976 = vmatprep.subr.mxu0 0.0
    %977 = vmatpush1.xpose.msra.mxu0 0.0
    %978 = vmatprep.subr.mxu0 0.0
    %979 = vmatpush1.xpose.msra.mxu0 0.0
    %980 = vmatprep.subr.mxu0 0.0
    %981 = vmatpush1.xpose.msra.mxu0 0.0
    %982 = vmatprep.subr.mxu0 0.0
    %983 = vmatpush1.xpose.msra.mxu0 0.0
    %984 = vmatprep.subr.mxu0 0.0
    %985 = vmatpush1.xpose.msra.mxu0 0.0
    %986 = vmatprep.subr.mxu0 0.0
    %987 = vmatpush1.xpose.msra.mxu0 0.0
    %988 = vmatprep.subr.mxu0 0.0
    %989 = vmatpush1.xpose.msra.mxu0 0.0
    %990 = vmatprep.subr.mxu0 0.0
    %991 = vmatpush1.xpose.msra.mxu0 0.0
    %992 = vmatprep.subr.mxu0 0.0
    %993 = vmatpush1.xpose.msra.mxu0 0.0
    %994 = vmatprep.subr.mxu0 0.0
    %995 = vmatpush1.xpose.msra.mxu0 0.0
    %996 = vmatprep.subr.mxu0 0.0
    %997 = vmatpush1.xpose.msra.mxu0 0.0
    %998 = vmatprep.subr.mxu0 0.0
    %999 = vmatpush1.xpose.msra.mxu0 0.0
    %1000 = vmatprep.subr.mxu0 0.0
    %1001 = vmatpush1.xpose.msra.mxu0 0.0
    %1002 = vmatprep.subr.mxu0 0.0
    %1003 = vmatpush1.xpose.msra.mxu0 0.0
    %1004 = vmatprep.subr.mxu0 0.0
    %1005 = vmatpush1.xpose.msra.mxu0 0.0
    %1006 = vmatprep.subr.mxu0 0.0
    %1007 = vmatpush1.xpose.msra.mxu0 0.0
    %1008 = vmatprep.subr.mxu0 0.0
    %1009 = vmatpush1.xpose.msra.mxu0 0.0
    %1010 = vmatprep.subr.mxu0 0.0
    %1011 = vmatpush1.xpose.msra.mxu0 0.0
    %1012 = vmatprep.mubr.f32.mxu0 0.0
    %1013 = vmatmul.mubr.f32.gmra.mrb[0].mxu0 %v944
    %v1014 = vpop.f32.mrb[0].mxu0
    %v1015 = vadd.f32 0.0, %v1014
    %v1016 = vpop.f32.mrb[0].mxu0
    %1017 = vdwg.mxu0
    %v1018 = vmul.f32 %v1015, 0.35355338
    %v1019 = vlaneseq
    %v1020 = vshrl.u32 %v1019, 7
    %v1021 = vsub.s32 1, %v1020
    %v1022 = vrot.slane %v111, %v1021
    %v1023 = vadd.f32 %v1018, %v1022
    %v1024 = vsel %vm255, %v1023, -inf
    %1025 = vmax.xlane.f32.xlu0 %v1024
    %v1026 = vpop.xlane.xlu0 %1025
    %v1027 = vsub.f32 %v1023, %v1026
    %v1028 = vmul.f32 %v1027, 1.442695
    %v1029 = vpow.pop %v1028
    %v1030 = vsel %vm255, %v1029, 0.0
    %1031 = vadd.xlane.f32.xlu0 %v1030
    %v1032 = vpop.xlane.xlu0 %1031
    %v1033 = vrcp.pop %v1032
    %v1034 = vmul.f32 %v1029, %v1033
    %1035 = vrot.lane.b32.xlu0 %v249, 64
    %v1036 = vpop.permute.xlu0 %1035
    %v1039 = vsel %vm255, %v1034, 0
    %1041 = vmatprep.subr.mxu0 0.0
    %1042 = vmatpush1.msra.mxu0 %v1036
    %1043 = vmatprep.subr.mxu0 0.0
    %1044 = vmatpush1.msra.mxu0 0.0
    %1045 = vmatprep.subr.mxu0 0.0
    %1046 = vmatpush1.msra.mxu0 0.0
    %1047 = vmatprep.subr.mxu0 0.0
    %1048 = vmatpush1.msra.mxu0 0.0
    %1049 = vmatprep.subr.mxu0 0.0
    %1050 = vmatpush1.msra.mxu0 0.0
    %1051 = vmatprep.subr.mxu0 0.0
    %1052 = vmatpush1.msra.mxu0 0.0
    %1053 = vmatprep.subr.mxu0 0.0
    %1054 = vmatpush1.msra.mxu0 0.0
    %1055 = vmatprep.subr.mxu0 0.0
    %1056 = vmatpush1.msra.mxu0 0.0
    %1057 = vmatprep.subr.mxu0 0.0
    %1058 = vmatpush1.msra.mxu0 0.0
    %1059 = vmatprep.subr.mxu0 0.0
    %1060 = vmatpush1.msra.mxu0 0.0
    %1061 = vmatprep.subr.mxu0 0.0
    %1062 = vmatpush1.msra.mxu0 0.0
    %1063 = vmatprep.subr.mxu0 0.0
    %1064 = vmatpush1.msra.mxu0 0.0
    %1065 = vmatprep.subr.mxu0 0.0
    %1066 = vmatpush1.msra.mxu0 0.0
    %1067 = vmatprep.subr.mxu0 0.0
    %1068 = vmatpush1.msra.mxu0 0.0
    %1069 = vmatprep.subr.mxu0 0.0
    %1070 = vmatpush1.msra.mxu0 0.0
    %1071 = vmatprep.subr.mxu0 0.0
    %1072 = vmatpush1.msra.mxu0 0.0
    %1073 = vmatprep.subr.mxu0 0.0
    %1074 = vmatpush1.msra.mxu0 0.0
    %1075 = vmatprep.subr.mxu0 0.0
    %1076 = vmatpush1.msra.mxu0 0.0
    %1077 = vmatprep.subr.mxu0 0.0
    %1078 = vmatpush1.msra.mxu0 0.0
    %1079 = vmatprep.subr.mxu0 0.0
    %1080 = vmatpush1.msra.mxu0 0.0
    %1081 = vmatprep.subr.mxu0 0.0
    %1082 = vmatpush1.msra.mxu0 0.0
    %1083 = vmatprep.subr.mxu0 0.0
    %1084 = vmatpush1.msra.mxu0 0.0
    %1085 = vmatprep.subr.mxu0 0.0
    %1086 = vmatpush1.msra.mxu0 0.0
    %1087 = vmatprep.subr.mxu0 0.0
    %1088 = vmatpush1.msra.mxu0 0.0
    %1089 = vmatprep.subr.mxu0 0.0
    %1090 = vmatpush1.msra.mxu0 0.0
    %1091 = vmatprep.subr.mxu0 0.0
    %1092 = vmatpush1.msra.mxu0 0.0
    %1093 = vmatprep.subr.mxu0 0.0
    %1094 = vmatpush1.msra.mxu0 0.0
    %1095 = vmatprep.subr.mxu0 0.0
    %1096 = vmatpush1.msra.mxu0 0.0
    %1097 = vmatprep.subr.mxu0 0.0
    %1098 = vmatpush1.msra.mxu0 0.0
    %1099 = vmatprep.subr.mxu0 0.0
    %1100 = vmatpush1.msra.mxu0 0.0
    %1101 = vmatprep.subr.mxu0 0.0
    %1102 = vmatpush1.msra.mxu0 0.0
    %1103 = vmatprep.subr.mxu0 0.0
    %1104 = vmatpush1.msra.mxu0 0.0
    %1105 = vmatprep.mubr.f32.mxu0 0.0
    %1106 = vmatmul.mubr.f32.gmra.mrb[0].mxu0 %v1039
    %v1107 = vpop.f32.mrb[0].mxu0
    %v1108 = vadd.f32 0.0, %v1107
    %v1109 = vpop.f32.mrb[0].mxu0
    %1110 = vdwg.mxu0
    %1111 = vrot.lane.b32.xlu0 %v249, 120
    %v1112 = vpop.permute.xlu0 %1111
    %1113 = vrot.lane.b32.xlu0 %v249, 88
    %v1114 = vpop.permute.xlu0 %1113
    %v1115 = vsel %vm255, %v1112, 0
    %v1117 = vsel %vm255, %v1114, 0
    %1119 = vmatprep.subr.mxu0 0.0
    %1120 = vmatpush1.xpose.msra.mxu0 %v1117
    %1121 = vmatprep.subr.mxu0 0.0
    %1122 = vmatpush1.xpose.msra.mxu0 0.0
    %1123 = vmatprep.subr.mxu0 0.0
    %1124 = vmatpush1.xpose.msra.mxu0 0.0
    %1125 = vmatprep.subr.mxu0 0.0
    %1126 = vmatpush1.xpose.msra.mxu0 0.0
    %1127 = vmatprep.subr.mxu0 0.0
    %1128 = vmatpush1.xpose.msra.mxu0 0.0
    %1129 = vmatprep.subr.mxu0 0.0
    %1130 = vmatpush1.xpose.msra.mxu0 0.0
    %1131 = vmatprep.subr.mxu0 0.0
    %1132 = vmatpush1.xpose.msra.mxu0 0.0
    %1133 = vmatprep.subr.mxu0 0.0
    %1134 = vmatpush1.xpose.msra.mxu0 0.0
    %1135 = vmatprep.subr.mxu0 0.0
    %1136 = vmatpush1.xpose.msra.mxu0 0.0
    %1137 = vmatprep.subr.mxu0 0.0
    %1138 = vmatpush1.xpose.msra.mxu0 0.0
    %1139 = vmatprep.subr.mxu0 0.0
    %1140 = vmatpush1.xpose.msra.mxu0 0.0
    %1141 = vmatprep.subr.mxu0 0.0
    %1142 = vmatpush1.xpose.msra.mxu0 0.0
    %1143 = vmatprep.subr.mxu0 0.0
    %1144 = vmatpush1.xpose.msra.mxu0 0.0
    %1145 = vmatprep.subr.mxu0 0.0
    %1146 = vmatpush1.xpose.msra.mxu0 0.0
    %1147 = vmatprep.subr.mxu0 0.0
    %1148 = vmatpush1.xpose.msra.mxu0 0.0
    %1149 = vmatprep.subr.mxu0 0.0
    %1150 = vmatpush1.xpose.msra.mxu0 0.0
    %1151 = vmatprep.subr.mxu0 0.0
    %1152 = vmatpush1.xpose.msra.mxu0 0.0
    %1153 = vmatprep.subr.mxu0 0.0
    %1154 = vmatpush1.xpose.msra.mxu0 0.0
    %1155 = vmatprep.subr.mxu0 0.0
    %1156 = vmatpush1.xpose.msra.mxu0 0.0
    %1157 = vmatprep.subr.mxu0 0.0
    %1158 = vmatpush1.xpose.msra.mxu0 0.0
    %1159 = vmatprep.subr.mxu0 0.0
    %1160 = vmatpush1.xpose.msra.mxu0 0.0
    %1161 = vmatprep.subr.mxu0 0.0
    %1162 = vmatpush1.xpose.msra.mxu0 0.0
    %1163 = vmatprep.subr.mxu0 0.0
    %1164 = vmatpush1.xpose.msra.mxu0 0.0
    %1165 = vmatprep.subr.mxu0 0.0
    %1166 = vmatpush1.xpose.msra.mxu0 0.0
    %1167 = vmatprep.subr.mxu0 0.0
    %1168 = vmatpush1.xpose.msra.mxu0 0.0
    %1169 = vmatprep.subr.mxu0 0.0
    %1170 = vmatpush1.xpose.msra.mxu0 0.0
    %1171 = vmatprep.subr.mxu0 0.0
    %1172 = vmatpush1.xpose.msra.mxu0 0.0
    %1173 = vmatprep.subr.mxu0 0.0
    %1174 = vmatpush1.xpose.msra.mxu0 0.0
    %1175 = vmatprep.subr.mxu0 0.0
    %1176 = vmatpush1.xpose.msra.mxu0 0.0
    %1177 = vmatprep.subr.mxu0 0.0
    %1178 = vmatpush1.xpose.msra.mxu0 0.0
    %1179 = vmatprep.subr.mxu0 0.0
    %1180 = vmatpush1.xpose.msra.mxu0 0.0
    %1181 = vmatprep.subr.mxu0 0.0
    %1182 = vmatpush1.xpose.msra.mxu0 0.0
    %1183 = vmatprep.mubr.f32.mxu0 0.0
    %1184 = vmatmul.mubr.f32.gmra.mrb[0].mxu0 %v1115
    %v1185 = vpop.f32.mrb[0].mxu0
    %v1186 = vadd.f32 0.0, %v1185
    %v1187 = vpop.f32.mrb[0].mxu0
    %1188 = vdwg.mxu0
    %v1189 = vmul.f32 %v1186, 0.35355338
    %v1190 = vadd.f32 %v1189, %v1022
    %v1191 = vsel %vm255, %v1190, -inf
    %1192 = vmax.xlane.f32.xlu0 %v1191
    %v1193 = vpop.xlane.xlu0 %1192
    %v1194 = vsub.f32 %v1190, %v1193
    %v1195 = vmul.f32 %v1194, 1.442695
    %v1196 = vpow.pop %v1195
    %v1197 = vsel %vm255, %v1196, 0.0
    %1198 = vadd.xlane.f32.xlu0 %v1197
    %v1199 = vpop.xlane.xlu0 %1198
    %v1200 = vrcp.pop %v1199
    %v1201 = vmul.f32 %v1196, %v1200
    %1202 = vrot.lane.b32.xlu0 %v249, 56
    %v1203 = vpop.permute.xlu0 %1202
    %v1206 = vsel %vm255, %v1201, 0
    %1208 = vmatprep.subr.mxu0 0.0
    %1209 = vmatpush1.msra.mxu0 %v1203
    %1210 = vmatprep.subr.mxu0 0.0
    %1211 = vmatpush1.msra.mxu0 0.0
    %1212 = vmatprep.subr.mxu0 0.0
    %1213 = vmatpush1.msra.mxu0 0.0
    %1214 = vmatprep.subr.mxu0 0.0
    %1215 = vmatpush1.msra.mxu0 0.0
    %1216 = vmatprep.subr.mxu0 0.0
    %1217 = vmatpush1.msra.mxu0 0.0
    %1218 = vmatprep.subr.mxu0 0.0
    %1219 = vmatpush1.msra.mxu0 0.0
    %1220 = vmatprep.subr.mxu0 0.0
    %1221 = vmatpush1.msra.mxu0 0.0
    %1222 = vmatprep.subr.mxu0 0.0
    %1223 = vmatpush1.msra.mxu0 0.0
    %1224 = vmatprep.subr.mxu0 0.0
    %1225 = vmatpush1.msra.mxu0 0.0
    %1226 = vmatprep.subr.mxu0 0.0
    %1227 = vmatpush1.msra.mxu0 0.0
    %1228 = vmatprep.subr.mxu0 0.0
    %1229 = vmatpush1.msra.mxu0 0.0
    %1230 = vmatprep.subr.mxu0 0.0
    %1231 = vmatpush1.msra.mxu0 0.0
    %1232 = vmatprep.subr.mxu0 0.0
    %1233 = vmatpush1.msra.mxu0 0.0
    %1234 = vmatprep.subr.mxu0 0.0
    %1235 = vmatpush1.msra.mxu0 0.0
    %1236 = vmatprep.subr.mxu0 0.0
    %1237 = vmatpush1.msra.mxu0 0.0
    %1238 = vmatprep.subr.mxu0 0.0
    %1239 = vmatpush1.msra.mxu0 0.0
    %1240 = vmatprep.subr.mxu0 0.0
    %1241 = vmatpush1.msra.mxu0 0.0
    %1242 = vmatprep.subr.mxu0 0.0
    %1243 = vmatpush1.msra.mxu0 0.0
    %1244 = vmatprep.subr.mxu0 0.0
    %1245 = vmatpush1.msra.mxu0 0.0
    %1246 = vmatprep.subr.mxu0 0.0
    %1247 = vmatpush1.msra.mxu0 0.0
    %1248 = vmatprep.subr.mxu0 0.0
    %1249 = vmatpush1.msra.mxu0 0.0
    %1250 = vmatprep.subr.mxu0 0.0
    %1251 = vmatpush1.msra.mxu0 0.0
    %1252 = vmatprep.subr.mxu0 0.0
    %1253 = vmatpush1.msra.mxu0 0.0
    %1254 = vmatprep.subr.mxu0 0.0
    %1255 = vmatpush1.msra.mxu0 0.0
    %1256 = vmatprep.subr.mxu0 0.0
    %1257 = vmatpush1.msra.mxu0 0.0
    %1258 = vmatprep.subr.mxu0 0.0
    %1259 = vmatpush1.msra.mxu0 0.0
    %1260 = vmatprep.subr.mxu0 0.0
    %1261 = vmatpush1.msra.mxu0 0.0
    %1262 = vmatprep.subr.mxu0 0.0
    %1263 = vmatpush1.msra.mxu0 0.0
    %1264 = vmatprep.subr.mxu0 0.0
    %1265 = vmatpush1.msra.mxu0 0.0
    %1266 = vmatprep.subr.mxu0 0.0
    %1267 = vmatpush1.msra.mxu0 0.0
    %1268 = vmatprep.subr.mxu0 0.0
    %1269 = vmatpush1.msra.mxu0 0.0
    %1270 = vmatprep.subr.mxu0 0.0
    %1271 = vmatpush1.msra.mxu0 0.0
    %1272 = vmatprep.mubr.f32.mxu0 0.0
    %1273 = vmatmul.mubr.f32.gmra.mrb[0].mxu0 %v1206
    %v1274 = vpop.f32.mrb[0].mxu0
    %v1275 = vadd.f32 0.0, %v1274
    %v1276 = vpop.f32.mrb[0].mxu0
    %1277 = vdwg.mxu0
    %1278 = vrot.lane.b32.xlu0 %v249, 112
    %v1279 = vpop.permute.xlu0 %1278
    %1280 = vrot.lane.b32.xlu0 %v249, 80
    %v1281 = vpop.permute.xlu0 %1280
    %v1282 = vsel %vm255, %v1279, 0
    %v1284 = vsel %vm255, %v1281, 0
    %1286 = vmatprep.subr.mxu0 0.0
    %1287 = vmatpush1.xpose.msra.mxu0 %v1284
    %1288 = vmatprep.subr.mxu0 0.0
    %1289 = vmatpush1.xpose.msra.mxu0 0.0
    %1290 = vmatprep.subr.mxu0 0.0
    %1291 = vmatpush1.xpose.msra.mxu0 0.0
    %1292 = vmatprep.subr.mxu0 0.0
    %1293 = vmatpush1.xpose.msra.mxu0 0.0
    %1294 = vmatprep.subr.mxu0 0.0
    %1295 = vmatpush1.xpose.msra.mxu0 0.0
    %1296 = vmatprep.subr.mxu0 0.0
    %1297 = vmatpush1.xpose.msra.mxu0 0.0
    %1298 = vmatprep.subr.mxu0 0.0
    %1299 = vmatpush1.xpose.msra.mxu0 0.0
    %1300 = vmatprep.subr.mxu0 0.0
    %1301 = vmatpush1.xpose.msra.mxu0 0.0
    %1302 = vmatprep.subr.mxu0 0.0
    %1303 = vmatpush1.xpose.msra.mxu0 0.0
    %1304 = vmatprep.subr.mxu0 0.0
    %1305 = vmatpush1.xpose.msra.mxu0 0.0
    %1306 = vmatprep.subr.mxu0 0.0
    %1307 = vmatpush1.xpose.msra.mxu0 0.0
    %1308 = vmatprep.subr.mxu0 0.0
    %1309 = vmatpush1.xpose.msra.mxu0 0.0
    %1310 = vmatprep.subr.mxu0 0.0
    %1311 = vmatpush1.xpose.msra.mxu0 0.0
    %1312 = vmatprep.subr.mxu0 0.0
    %1313 = vmatpush1.xpose.msra.mxu0 0.0
    %1314 = vmatprep.subr.mxu0 0.0
    %1315 = vmatpush1.xpose.msra.mxu0 0.0
    %1316 = vmatprep.subr.mxu0 0.0
    %1317 = vmatpush1.xpose.msra.mxu0 0.0
    %1318 = vmatprep.subr.mxu0 0.0
    %1319 = vmatpush1.xpose.msra.mxu0 0.0
    %1320 = vmatprep.subr.mxu0 0.0
    %1321 = vmatpush1.xpose.msra.mxu0 0.0
    %1322 = vmatprep.subr.mxu0 0.0
    %1323 = vmatpush1.xpose.msra.mxu0 0.0
    %1324 = vmatprep.subr.mxu0 0.0
    %1325 = vmatpush1.xpose.msra.mxu0 0.0
    %1326 = vmatprep.subr.mxu0 0.0
    %1327 = vmatpush1.xpose.msra.mxu0 0.0
    %1328 = vmatprep.subr.mxu0 0.0
    %1329 = vmatpush1.xpose.msra.mxu0 0.0
    %1330 = vmatprep.subr.mxu0 0.0
    %1331 = vmatpush1.xpose.msra.mxu0 0.0
    %1332 = vmatprep.subr.mxu0 0.0
    %1333 = vmatpush1.xpose.msra.mxu0 0.0
    %1334 = vmatprep.subr.mxu0 0.0
    %1335 = vmatpush1.xpose.msra.mxu0 0.0
    %1336 = vmatprep.subr.mxu0 0.0
    %1337 = vmatpush1.xpose.msra.mxu0 0.0
    %1338 = vmatprep.subr.mxu0 0.0
    %1339 = vmatpush1.xpose.msra.mxu0 0.0
    %1340 = vmatprep.subr.mxu0 0.0
    %1341 = vmatpush1.xpose.msra.mxu0 0.0
    %1342 = vmatprep.subr.mxu0 0.0
    %1343 = vmatpush1.xpose.msra.mxu0 0.0
    %1344 = vmatprep.subr.mxu0 0.0
    %1345 = vmatpush1.xpose.msra.mxu0 0.0
    %1346 = vmatprep.subr.mxu0 0.0
    %1347 = vmatpush1.xpose.msra.mxu0 0.0
    %1348 = vmatprep.subr.mxu0 0.0
    %1349 = vmatpush1.xpose.msra.mxu0 0.0
    %1350 = vmatprep.mubr.f32.mxu0 0.0
    %1351 = vmatmul.mubr.f32.gmra.mrb[0].mxu0 %v1282
    %v1352 = vpop.f32.mrb[0].mxu0
    %v1353 = vadd.f32 0.0, %v1352
    %v1354 = vpop.f32.mrb[0].mxu0
    %1355 = vdwg.mxu0
    %v1356 = vmul.f32 %v1353, 0.35355338
    %v1357 = vadd.f32 %v1356, %v1022
    %v1358 = vsel %vm255, %v1357, -inf
    %1359 = vmax.xlane.f32.xlu0 %v1358
    %v1360 = vpop.xlane.xlu0 %1359
    %v1361 = vsub.f32 %v1357, %v1360
    %v1362 = vmul.f32 %v1361, 1.442695
    %v1363 = vpow.pop %v1362
    %v1364 = vsel %vm255, %v1363, 0.0
    %1365 = vadd.xlane.f32.xlu0 %v1364
    %v1366 = vpop.xlane.xlu0 %1365
    %v1367 = vrcp.pop %v1366
    %v1368 = vmul.f32 %v1363, %v1367
    %1369 = vrot.lane.b32.xlu0 %v249, 48
    %v1370 = vpop.permute.xlu0 %1369
    %v1373 = vsel %vm255, %v1368, 0
    %1375 = vmatprep.subr.mxu0 0.0
    %1376 = vmatpush1.msra.mxu0 %v1370
    %1377 = vmatprep.subr.mxu0 0.0
    %1378 = vmatpush1.msra.mxu0 0.0
    %1379 = vmatprep.subr.mxu0 0.0
    %1380 = vmatpush1.msra.mxu0 0.0
    %1381 = vmatprep.subr.mxu0 0.0
    %1382 = vmatpush1.msra.mxu0 0.0
    %1383 = vmatprep.subr.mxu0 0.0
    %1384 = vmatpush1.msra.mxu0 0.0
    %1385 = vmatprep.subr.mxu0 0.0
    %1386 = vmatpush1.msra.mxu0 0.0
    %1387 = vmatprep.subr.mxu0 0.0
    %1388 = vmatpush1.msra.mxu0 0.0
    %1389 = vmatprep.subr.mxu0 0.0
    %1390 = vmatpush1.msra.mxu0 0.0
    %1391 = vmatprep.subr.mxu0 0.0
    %1392 = vmatpush1.msra.mxu0 0.0
    %1393 = vmatprep.subr.mxu0 0.0
    %1394 = vmatpush1.msra.mxu0 0.0
    %1395 = vmatprep.subr.mxu0 0.0
    %1396 = vmatpush1.msra.mxu0 0.0
    %1397 = vmatprep.subr.mxu0 0.0
    %1398 = vmatpush1.msra.mxu0 0.0
    %1399 = vmatprep.subr.mxu0 0.0
    %1400 = vmatpush1.msra.mxu0 0.0
    %1401 = vmatprep.subr.mxu0 0.0
    %1402 = vmatpush1.msra.mxu0 0.0
    %1403 = vmatprep.subr.mxu0 0.0
    %1404 = vmatpush1.msra.mxu0 0.0
    %1405 = vmatprep.subr.mxu0 0.0
    %1406 = vmatpush1.msra.mxu0 0.0
    %1407 = vmatprep.subr.mxu0 0.0
    %1408 = vmatpush1.msra.mxu0 0.0
    %1409 = vmatprep.subr.mxu0 0.0
    %1410 = vmatpush1.msra.mxu0 0.0
    %1411 = vmatprep.subr.mxu0 0.0
    %1412 = vmatpush1.msra.mxu0 0.0
    %1413 = vmatprep.subr.mxu0 0.0
    %1414 = vmatpush1.msra.mxu0 0.0
    %1415 = vmatprep.subr.mxu0 0.0
    %1416 = vmatpush1.msra.mxu0 0.0
    %1417 = vmatprep.subr.mxu0 0.0
    %1418 = vmatpush1.msra.mxu0 0.0
    %1419 = vmatprep.subr.mxu0 0.0
    %1420 = vmatpush1.msra.mxu0 0.0
    %1421 = vmatprep.subr.mxu0 0.0
    %1422 = vmatpush1.msra.mxu0 0.0
    %1423 = vmatprep.subr.mxu0 0.0
    %1424 = vmatpush1.msra.mxu0 0.0
    %1425 = vmatprep.subr.mxu0 0.0
    %1426 = vmatpush1.msra.mxu0 0.0
    %1427 = vmatprep.subr.mxu0 0.0
    %1428 = vmatpush1.msra.mxu0 0.0
    %1429 = vmatprep.subr.mxu0 0.0
    %1430 = vmatpush1.msra.mxu0 0.0
    %1431 = vmatprep.subr.mxu0 0.0
    %1432 = vmatpush1.msra.mxu0 0.0
    %1433 = vmatprep.subr.mxu0 0.0
    %1434 = vmatpush1.msra.mxu0 0.0
    %1435 = vmatprep.subr.mxu0 0.0
    %1436 = vmatpush1.msra.mxu0 0.0
    %1437 = vmatprep.subr.mxu0 0.0
    %1438 = vmatpush1.msra.mxu0 0.0
    %1439 = vmatprep.mubr.f32.mxu0 0.0
    %1440 = vmatmul.mubr.f32.gmra.mrb[0].mxu0 %v1373
    %v1441 = vpop.f32.mrb[0].mxu0
    %v1442 = vadd.f32 0.0, %v1441
    %v1443 = vpop.f32.mrb[0].mxu0
    %1444 = vdwg.mxu0
    %1445 = vrot.lane.b32.xlu0 %v249, 104
    %v1446 = vpop.permute.xlu0 %1445
    %1447 = vrot.lane.b32.xlu0 %v249, 72
    %v1448 = vpop.permute.xlu0 %1447
    %v1449 = vsel %vm255, %v1446, 0
    %v1451 = vsel %vm255, %v1448, 0
    %1453 = vmatprep.subr.mxu0 0.0
    %1454 = vmatpush1.xpose.msra.mxu0 %v1451
    %1455 = vmatprep.subr.mxu0 0.0
    %1456 = vmatpush1.xpose.msra.mxu0 0.0
    %1457 = vmatprep.subr.mxu0 0.0
    %1458 = vmatpush1.xpose.msra.mxu0 0.0
    %1459 = vmatprep.subr.mxu0 0.0
    %1460 = vmatpush1.xpose.msra.mxu0 0.0
    %1461 = vmatprep.subr.mxu0 0.0
    %1462 = vmatpush1.xpose.msra.mxu0 0.0
    %1463 = vmatprep.subr.mxu0 0.0
    %1464 = vmatpush1.xpose.msra.mxu0 0.0
    %1465 = vmatprep.subr.mxu0 0.0
    %1466 = vmatpush1.xpose.msra.mxu0 0.0
    %1467 = vmatprep.subr.mxu0 0.0
    %1468 = vmatpush1.xpose.msra.mxu0 0.0
    %1469 = vmatprep.subr.mxu0 0.0
    %1470 = vmatpush1.xpose.msra.mxu0 0.0
    %1471 = vmatprep.subr.mxu0 0.0
    %1472 = vmatpush1.xpose.msra.mxu0 0.0
    %1473 = vmatprep.subr.mxu0 0.0
    %1474 = vmatpush1.xpose.msra.mxu0 0.0
    %1475 = vmatprep.subr.mxu0 0.0
    %1476 = vmatpush1.xpose.msra.mxu0 0.0
    %1477 = vmatprep.subr.mxu0 0.0
    %1478 = vmatpush1.xpose.msra.mxu0 0.0
    %1479 = vmatprep.subr.mxu0 0.0
    %1480 = vmatpush1.xpose.msra.mxu0 0.0
    %1481 = vmatprep.subr.mxu0 0.0
    %1482 = vmatpush1.xpose.msra.mxu0 0.0
    %1483 = vmatprep.subr.mxu0 0.0
    %1484 = vmatpush1.xpose.msra.mxu0 0.0
    %1485 = vmatprep.subr.mxu0 0.0
    %1486 = vmatpush1.xpose.msra.mxu0 0.0
    %1487 = vmatprep.subr.mxu0 0.0
    %1488 = vmatpush1.xpose.msra.mxu0 0.0
    %1489 = vmatprep.subr.mxu0 0.0
    %1490 = vmatpush1.xpose.msra.mxu0 0.0
    %1491 = vmatprep.subr.mxu0 0.0
    %1492 = vmatpush1.xpose.msra.mxu0 0.0
    %1493 = vmatprep.subr.mxu0 0.0
    %1494 = vmatpush1.xpose.msra.mxu0 0.0
    %1495 = vmatprep.subr.mxu0 0.0
    %1496 = vmatpush1.xpose.msra.mxu0 0.0
    %1497 = vmatprep.subr.mxu0 0.0
    %1498 = vmatpush1.xpose.msra.mxu0 0.0
    %1499 = vmatprep.subr.mxu0 0.0
    %1500 = vmatpush1.xpose.msra.mxu0 0.0
    %1501 = vmatprep.subr.mxu0 0.0
    %1502 = vmatpush1.xpose.msra.mxu0 0.0
    %1503 = vmatprep.subr.mxu0 0.0
    %1504 = vmatpush1.xpose.msra.mxu0 0.0
    %1505 = vmatprep.subr.mxu0 0.0
    %1506 = vmatpush1.xpose.msra.mxu0 0.0
    %1507 = vmatprep.subr.mxu0 0.0
    %1508 = vmatpush1.xpose.msra.mxu0 0.0
    %1509 = vmatprep.subr.mxu0 0.0
    %1510 = vmatpush1.xpose.msra.mxu0 0.0
    %1511 = vmatprep.subr.mxu0 0.0
    %1512 = vmatpush1.xpose.msra.mxu0 0.0
    %1513 = vmatprep.subr.mxu0 0.0
    %1514 = vmatpush1.xpose.msra.mxu0 0.0
    %1515 = vmatprep.subr.mxu0 0.0
    %1516 = vmatpush1.xpose.msra.mxu0 0.0
    %1517 = vmatprep.mubr.f32.mxu0 0.0
    %1518 = vmatmul.mubr.f32.gmra.mrb[0].mxu0 %v1449
    %v1519 = vpop.f32.mrb[0].mxu0
    %v1520 = vadd.f32 0.0, %v1519
    %v1521 = vpop.f32.mrb[0].mxu0
    %1522 = vdwg.mxu0
    %v1523 = vmul.f32 %v1520, 0.35355338
    %v1524 = vadd.f32 %v1523, %v1022
    %v1525 = vsel %vm255, %v1524, -inf
    %1526 = vmax.xlane.f32.xlu0 %v1525
    %v1527 = vpop.xlane.xlu0 %1526
    %v1528 = vsub.f32 %v1524, %v1527
    %v1529 = vmul.f32 %v1528, 1.442695
    %v1530 = vpow.pop %v1529
    %v1531 = vsel %vm255, %v1530, 0.0
    %1532 = vadd.xlane.f32.xlu0 %v1531
    %v1533 = vpop.xlane.xlu0 %1532
    %v1534 = vrcp.pop %v1533
    %v1535 = vmul.f32 %v1530, %v1534
    %1536 = vrot.lane.b32.xlu0 %v249, 40
    %v1537 = vpop.permute.xlu0 %1536
    %v1540 = vsel %vm255, %v1535, 0
    %1542 = vmatprep.subr.mxu0 0.0
    %1543 = vmatpush1.msra.mxu0 %v1537
    %1544 = vmatprep.subr.mxu0 0.0
    %1545 = vmatpush1.msra.mxu0 0.0
    %1546 = vmatprep.subr.mxu0 0.0
    %1547 = vmatpush1.msra.mxu0 0.0
    %1548 = vmatprep.subr.mxu0 0.0
    %1549 = vmatpush1.msra.mxu0 0.0
    %1550 = vmatprep.subr.mxu0 0.0
    %1551 = vmatpush1.msra.mxu0 0.0
    %1552 = vmatprep.subr.mxu0 0.0
    %1553 = vmatpush1.msra.mxu0 0.0
    %1554 = vmatprep.subr.mxu0 0.0
    %1555 = vmatpush1.msra.mxu0 0.0
    %1556 = vmatprep.subr.mxu0 0.0
    %1557 = vmatpush1.msra.mxu0 0.0
    %1558 = vmatprep.subr.mxu0 0.0
    %1559 = vmatpush1.msra.mxu0 0.0
    %1560 = vmatprep.subr.mxu0 0.0
    %1561 = vmatpush1.msra.mxu0 0.0
    %1562 = vmatprep.subr.mxu0 0.0
    %1563 = vmatpush1.msra.mxu0 0.0
    %1564 = vmatprep.subr.mxu0 0.0
    %1565 = vmatpush1.msra.mxu0 0.0
    %1566 = vmatprep.subr.mxu0 0.0
    %1567 = vmatpush1.msra.mxu0 0.0
    %1568 = vmatprep.subr.mxu0 0.0
    %1569 = vmatpush1.msra.mxu0 0.0
    %1570 = vmatprep.subr.mxu0 0.0
    %1571 = vmatpush1.msra.mxu0 0.0
    %1572 = vmatprep.subr.mxu0 0.0
    %1573 = vmatpush1.msra.mxu0 0.0
    %1574 = vmatprep.subr.mxu0 0.0
    %1575 = vmatpush1.msra.mxu0 0.0
    %1576 = vmatprep.subr.mxu0 0.0
    %1577 = vmatpush1.msra.mxu0 0.0
    %1578 = vmatprep.subr.mxu0 0.0
    %1579 = vmatpush1.msra.mxu0 0.0
    %1580 = vmatprep.subr.mxu0 0.0
    %1581 = vmatpush1.msra.mxu0 0.0
    %1582 = vmatprep.subr.mxu0 0.0
    %1583 = vmatpush1.msra.mxu0 0.0
    %1584 = vmatprep.subr.mxu0 0.0
    %1585 = vmatpush1.msra.mxu0 0.0
    %1586 = vmatprep.subr.mxu0 0.0
    %1587 = vmatpush1.msra.mxu0 0.0
    %1588 = vmatprep.subr.mxu0 0.0
    %1589 = vmatpush1.msra.mxu0 0.0
    %1590 = vmatprep.subr.mxu0 0.0
    %1591 = vmatpush1.msra.mxu0 0.0
    %1592 = vmatprep.subr.mxu0 0.0
    %1593 = vmatpush1.msra.mxu0 0.0
    %1594 = vmatprep.subr.mxu0 0.0
    %1595 = vmatpush1.msra.mxu0 0.0
    %1596 = vmatprep.subr.mxu0 0.0
    %1597 = vmatpush1.msra.mxu0 0.0
    %1598 = vmatprep.subr.mxu0 0.0
    %1599 = vmatpush1.msra.mxu0 0.0
    %1600 = vmatprep.subr.mxu0 0.0
    %1601 = vmatpush1.msra.mxu0 0.0
    %1602 = vmatprep.subr.mxu0 0.0
    %1603 = vmatpush1.msra.mxu0 0.0
    %1604 = vmatprep.subr.mxu0 0.0
    %1605 = vmatpush1.msra.mxu0 0.0
    %1606 = vmatprep.mubr.f32.mxu0 0.0
    %1607 = vmatmul.mubr.f32.gmra.mrb[0].mxu0 %v1540
    %v1608 = vpop.f32.mrb[0].mxu0
    %v1609 = vadd.f32 0.0, %v1608
    %v1610 = vpop.f32.mrb[0].mxu0
    %1611 = vdwg.mxu0
    %1613 = vrot.lane.b32.xlu0 %v1275, 8
    %v1614 = vpop.permute.xlu0 %1613
    %1617 = vrot.lane.b32.xlu0 %v1442, 16
    %v1618 = vpop.permute.xlu0 %1617
    %1621 = vrot.lane.b32.xlu0 %v1609, 24
    %v1622 = vpop.permute.xlu0 %1621
    %v1624 = vsel %vm255, %v1108, %v1614
    %v1625 = vsel %vm937, %v1624, %v1618
    %v1626 = vsel %vm939, %v1625, %v1622
    %v1627 = vld [vmem:[%s9] sm:$0xff]
    %v1628 = vld [vmem:[%s9 + $0x8] sm:$0xff]
    %v1629 = vld [vmem:[%s9 + $0x10] sm:$0xff]
    %v1630 = vld [vmem:[%s9 + $0x18] sm:$0xff]
    %v1631 = vld [vmem:[%s10] sm:$0x1]
    %v1633 = vlaneseq
    %v1634 = vshrl.u32 %v1633, 7
    %v1635 = vsub.s32 0, %v1634
    %v1636 = vrot.slane %v1631, %v1635
    %v1639 = vsel %vm116, %v940, 0
    %v1642 = vsel %vm116, %v1626, 0
    %1644 = vmatprep.subr.mxu0 0.0
    %1645 = vmatpush1.msra.mxu0 %v1627
    %1646 = vmatprep.subr.mxu0 0.0
    %1647 = vmatpush1.msra.mxu0 %v1628
    %1648 = vmatprep.subr.mxu0 0.0
    %1649 = vmatpush1.msra.mxu0 %v1629
    %1650 = vmatprep.subr.mxu0 0.0
    %1651 = vmatpush1.msra.mxu0 %v1630
    %1652 = vmatprep.subr.mxu0 0.0
    %1653 = vmatpush1.msra.mxu0 0.0
    %1654 = vmatprep.subr.mxu0 0.0
    %1655 = vmatpush1.msra.mxu0 0.0
    %1656 = vmatprep.subr.mxu0 0.0
    %1657 = vmatpush1.msra.mxu0 0.0
    %1658 = vmatprep.subr.mxu0 0.0
    %1659 = vmatpush1.msra.mxu0 0.0
    %1660 = vmatprep.subr.mxu0 0.0
    %1661 = vmatpush1.msra.mxu0 0.0
    %1662 = vmatprep.subr.mxu0 0.0
    %1663 = vmatpush1.msra.mxu0 0.0
    %1664 = vmatprep.subr.mxu0 0.0
    %1665 = vmatpush1.msra.mxu0 0.0
    %1666 = vmatprep.subr.mxu0 0.0
    %1667 = vmatpush1.msra.mxu0 0.0
    %1668 = vmatprep.subr.mxu0 0.0
    %1669 = vmatpush1.msra.mxu0 0.0
    %1670 = vmatprep.subr.mxu0 0.0
    %1671 = vmatpush1.msra.mxu0 0.0
    %1672 = vmatprep.subr.mxu0 0.0
    %1673 = vmatpush1.msra.mxu0 0.0
    %1674 = vmatprep.subr.mxu0 0.0
    %1675 = vmatpush1.msra.mxu0 0.0
    %1676 = vmatprep.subr.mxu0 0.0
    %1677 = vmatpush1.msra.mxu0 0.0
    %1678 = vmatprep.subr.mxu0 0.0
    %1679 = vmatpush1.msra.mxu0 0.0
    %1680 = vmatprep.subr.mxu0 0.0
    %1681 = vmatpush1.msra.mxu0 0.0
    %1682 = vmatprep.subr.mxu0 0.0
    %1683 = vmatpush1.msra.mxu0 0.0
    %1684 = vmatprep.subr.mxu0 0.0
    %1685 = vmatpush1.msra.mxu0 0.0
    %1686 = vmatprep.subr.mxu0 0.0
    %1687 = vmatpush1.msra.mxu0 0.0
    %1688 = vmatprep.subr.mxu0 0.0
    %1689 = vmatpush1.msra.mxu0 0.0
    %1690 = vmatprep.subr.mxu0 0.0
    %1691 = vmatpush1.msra.mxu0 0.0
    %1692 = vmatprep.subr.mxu0 0.0
    %1693 = vmatpush1.msra.mxu0 0.0
    %1694 = vmatprep.subr.mxu0 0.0
    %1695 = vmatpush1.msra.mxu0 0.0
    %1696 = vmatprep.subr.mxu0 0.0
    %1697 = vmatpush1.msra.mxu0 0.0
    %1698 = vmatprep.subr.mxu0 0.0
    %1699 = vmatpush1.msra.mxu0 0.0
    %1700 = vmatprep.subr.mxu0 0.0
    %1701 = vmatpush1.msra.mxu0 0.0
    %1702 = vmatprep.subr.mxu0 0.0
    %1703 = vmatpush1.msra.mxu0 0.0
    %1704 = vmatprep.subr.mxu0 0.0
    %1705 = vmatpush1.msra.mxu0 0.0
    %1706 = vmatprep.subr.mxu0 0.0
    %1707 = vmatpush1.msra.mxu0 0.0
    %1708 = vmatprep.mubr.f32.mxu0 0.0
    %1709 = vmatmul.mubr.f32.gmra.mrb[0].mxu0 %v1639
    %v1710 = vpop.f32.mrb[0].mxu0
    %v1711 = vadd.f32 %v1636, %v1710
    %v1712 = vpop.f32.mrb[0].mxu0
    %1713 = vmatprep.mubr.f32.mxu0 0.0
    %1714 = vmatmul.mubr.f32.gmra.mrb[0].mxu0 %v1642
    %v1715 = vpop.f32.mrb[0].mxu0
    %v1716 = vadd.f32 %v1636, %v1715
    %v1717 = vpop.f32.mrb[0].mxu0
    %1718 = vdwg.mxu0
    %v1719 = vadd.f32 %v1711, %v158
    %v1720 = vadd.f32 %v1716, %v159
    %v1721 = vld [vmem:[%s11] sm:$0x1]
    %v1722 = vld [vmem:[%s12] sm:$0x1]
    %v1723 = vsel %vm116, %v1719, 0.0
    %1724 = vadd.xlane.f32.xlu0 %v1723
    %v1725 = vpop.xlane.xlu0 %1724
    %v1726 = vsel %vm116, %v1720, 0.0
    %1727 = vadd.xlane.f32.xlu0 %v1726
    %v1728 = vpop.xlane.xlu0 %1727
    %v1729 = vmul.f32 %v1725, %v123
    %v1730 = vmul.f32 %v1728, %v123
    %v1731 = vsub.f32 %v1719, %v1729
    %v1732 = vsub.f32 %v1720, %v1730
    %v1733 = vmul.f32 %v1731, %v1731
    %v1734 = vmul.f32 %v1732, %v1732
    %v1735 = vsel %vm116, %v1733, 0.0
    %1736 = vadd.xlane.f32.xlu0 %v1735
    %v1737 = vpop.xlane.xlu0 %1736
    %v1738 = vsel %vm116, %v1734, 0.0
    %1739 = vadd.xlane.f32.xlu0 %v1738
    %v1740 = vpop.xlane.xlu0 %1739
    %v1741 = vmul.f32 %v1737, %v123
    %v1742 = vmul.f32 %v1740, %v123
    %v1743 = vadd.f32 %v1741, 1e-12
    %v1744 = vadd.f32 %v1742, 1e-12
    %v1745 = vrsqrt.pop %v1743
    %v1746 = vrsqrt.pop %v1744
    %v1747 = vmul.f32 %v1731, %v1745
    %v1748 = vmul.f32 %v1732, %v1746
    %v1750 = vlaneseq
    %v1751 = vshrl.u32 %v1750, 7
    %v1752 = vsub.s32 0, %v1751
    %v1753 = vrot.slane %v1721, %v1752
    %v1755 = vmul.f32 %v1747, %v1753
    %v1756 = vmul.f32 %v1748, %v1753
    %v1758 = vlaneseq
    %v1759 = vshrl.u32 %v1758, 7
    %v1760 = vsub.s32 0, %v1759
    %v1761 = vrot.slane %v1722, %v1760
    %v1763 = vadd.f32 %v1755, %v1761
    %v1764 = vadd.f32 %v1756, %v1761
    %v1765 = vld [vmem:[%s13] sm:$0xff]
    %v1766 = vld [vmem:[%s13 + $0x8] sm:$0xff]
    %v1767 = vld [vmem:[%s13 + $0x10] sm:$0xff]
    %v1768 = vld [vmem:[%s13 + $0x18] sm:$0xff]
    %v1769 = vld [vmem:[#allocation7] sm:$0x1]
    %v1771 = vlaneseq
    %v1772 = vshrl.u32 %v1771, 7
    %v1773 = vsub.s32 0, %v1772
    %v1774 = vrot.slane %v1769, %v1773
    %v1777 = vsel %vm116, %v1763, 0
    %v1780 = vsel %vm116, %v1764, 0
    %1782 = vmatprep.subr.mxu0 0.0
    %1783 = vmatpush1.msra.mxu0 %v1765
    %1784 = vmatprep.subr.mxu0 0.0
    %1785 = vmatpush1.msra.mxu0 %v1766
    %1786 = vmatprep.subr.mxu0 0.0
    %1787 = vmatpush1.msra.mxu0 %v1767
    %1788 = vmatprep.subr.mxu0 0.0
    %1789 = vmatpush1.msra.mxu0 %v1768
    %1790 = vmatprep.subr.mxu0 0.0
    %1791 = vmatpush1.msra.mxu0 0.0
    %1792 = vmatprep.subr.mxu0 0.0
    %1793 = vmatpush1.msra.mxu0 0.0
    %1794 = vmatprep.subr.mxu0 0.0
    %1795 = vmatpush1.msra.mxu0 0.0
    %1796 = vmatprep.subr.mxu0 0.0
    %1797 = vmatpush1.msra.mxu0 0.0
    %1798 = vmatprep.subr.mxu0 0.0
    %1799 = vmatpush1.msra.mxu0 0.0
    %1800 = vmatprep.subr.mxu0 0.0
    %1801 = vmatpush1.msra.mxu0 0.0
    %1802 = vmatprep.subr.mxu0 0.0
    %1803 = vmatpush1.msra.mxu0 0.0
    %1804 = vmatprep.subr.mxu0 0.0
    %1805 = vmatpush1.msra.mxu0 0.0
    %1806 = vmatprep.subr.mxu0 0.0
    %1807 = vmatpush1.msra.mxu0 0.0
    %1808 = vmatprep.subr.mxu0 0.0
    %1809 = vmatpush1.msra.mxu0 0.0
    %1810 = vmatprep.subr.mxu0 0.0
    %1811 = vmatpush1.msra.mxu0 0.0
    %1812 = vmatprep.subr.mxu0 0.0
    %1813 = vmatpush1.msra.mxu0 0.0
    %1814 = vmatprep.subr.mxu0 0.0
    %1815 = vmatpush1.msra.mxu0 0.0
    %1816 = vmatprep.subr.mxu0 0.0
    %1817 = vmatpush1.msra.mxu0 0.0
    %1818 = vmatprep.subr.mxu0 0.0
    %1819 = vmatpush1.msra.mxu0 0.0
    %1820 = vmatprep.subr.mxu0 0.0
    %1821 = vmatpush1.msra.mxu0 0.0
    %1822 = vmatprep.subr.mxu0 0.0
    %1823 = vmatpush1.msra.mxu0 0.0
    %1824 = vmatprep.subr.mxu0 0.0
    %1825 = vmatpush1.msra.mxu0 0.0
    %1826 = vmatprep.subr.mxu0 0.0
    %1827 = vmatpush1.msra.mxu0 0.0
    %1828 = vmatprep.subr.mxu0 0.0
    %1829 = vmatpush1.msra.mxu0 0.0
    %1830 = vmatprep.subr.mxu0 0.0
    %1831 = vmatpush1.msra.mxu0 0.0
    %1832 = vmatprep.subr.mxu0 0.0
    %1833 = vmatpush1.msra.mxu0 0.0
    %1834 = vmatprep.subr.mxu0 0.0
    %1835 = vmatpush1.msra.mxu0 0.0
    %1836 = vmatprep.subr.mxu0 0.0
    %1837 = vmatpush1.msra.mxu0 0.0
    %1838 = vmatprep.subr.mxu0 0.0
    %1839 = vmatpush1.msra.mxu0 0.0
    %1840 = vmatprep.subr.mxu0 0.0
    %1841 = vmatpush1.msra.mxu0 0.0
    %1842 = vmatprep.subr.mxu0 0.0
    %1843 = vmatpush1.msra.mxu0 0.0
    %1844 = vmatprep.subr.mxu0 0.0
    %1845 = vmatpush1.msra.mxu0 0.0
    %1846 = vmatprep.mubr.f32.mxu0 0.0
    %1847 = vmatmul.mubr.f32.gmra.mrb[0].mxu0 %v1777
    %v1848 = vpop.f32.mrb[0].mxu0
    %v1849 = vadd.f32 %v1774, %v1848
    %v1850 = vpop.f32.mrb[0].mxu0
    %1851 = vmatprep.mubr.f32.mxu0 0.0
    %1852 = vmatmul.mubr.f32.gmra.mrb[0].mxu0 %v1780
    %v1853 = vpop.f32.mrb[0].mxu0
    %v1854 = vadd.f32 %v1774, %v1853
    %v1855 = vpop.f32.mrb[0].mxu0
    %1856 = vdwg.mxu0
    %v1857 = vmul.f32 %v1849, 0.70710677
    %v1858 = vmul.f32 %v1854, 0.70710677
    %v1859 = vand.u32 2147483647, %v1857
    %v1860 = vand.u32 2147483647, %v1858
    %v1861 = vmul.f32 %v1859, 0.3275911
    %v1862 = vmul.f32 %v1860, 0.3275911
    %v1863 = vadd.f32 %v1861, 1.0
    %v1864 = vadd.f32 %v1862, 1.0
    %v1865 = vrcp.pop %v1863
    %v1866 = vmul.f32 1.0, %v1865
    %v1867 = vrcp.pop %v1864
    %v1868 = vmul.f32 1.0, %v1867
    %v1869 = vmul.f32 %v1866, 1.0614054
    %v1870 = vmul.f32 %v1868, 1.0614054
    %v1871 = vadd.f32 %v1869, -1.4531521
    %v1872 = vadd.f32 %v1870, -1.4531521
    %v1873 = vmul.f32 %v1866, %v1871
    %v1874 = vmul.f32 %v1868, %v1872
    %v1875 = vadd.f32 %v1873, 1.4214138
    %v1876 = vadd.f32 %v1874, 1.4214138
    %v1877 = vmul.f32 %v1866, %v1875
    %v1878 = vmul.f32 %v1868, %v1876
    %v1879 = vadd.f32 %v1877, -0.28449672
    %v1880 = vadd.f32 %v1878, -0.28449672
    %v1881 = vmul.f32 %v1866, %v1879
    %v1882 = vmul.f32 %v1868, %v1880
    %v1883 = vadd.f32 %v1881, 0.2548296
    %v1884 = vadd.f32 %v1882, 0.2548296
    %v1885 = vmul.f32 %v1866, %v1883
    %v1886 = vmul.f32 %v1868, %v1884
    %v1887 = vsub.f32 0.0, %v1859
    %v1888 = vsub.f32 0.0, %v1860
    %v1889 = vmul.f32 %v1887, %v1859
    %v1890 = vmul.f32 %v1888, %v1860
    %v1891 = vmul.f32 %v1889, 1.442695
    %v1892 = vpow.pop %v1891
    %v1893 = vmul.f32 %v1890, 1.442695
    %v1894 = vpow.pop %v1893
    %v1895 = vmul.f32 %v1885, %v1892
    %v1896 = vmul.f32 %v1886, %v1894
    %v1897 = vsub.f32 1.0, %v1895
    %v1898 = vsub.f32 1.0, %v1896
    %vm1899 = vcmp.ge.f32.partialorder %v1857, 0.0
    %vm1900 = vcmp.ge.f32.partialorder %v1858, 0.0
    %v1901 = vsub.f32 0.0, %v1897
    %v1902 = vsub.f32 0.0, %v1898
    %v1903 = vsel %vm1899, %v1897, %v1901
    %v1904 = vsel %vm1900, %v1898, %v1902
    %v1905 = vmul.f32 %v1849, 0.5
    %v1906 = vmul.f32 %v1854, 0.5
    %v1907 = vadd.f32 %v1903, 1.0
    %v1908 = vadd.f32 %v1904, 1.0
    %v1909 = vmul.f32 %v1905, %v1907
    %v1910 = vmul.f32 %v1906, %v1908
    %v1911 = vld [vmem:[%s15] sm:$0xff]
    %v1912 = vld [vmem:[%s15 + $0x8] sm:$0xff]
    %v1913 = vld [vmem:[%s15 + $0x10] sm:$0xff]
    %v1914 = vld [vmem:[%s15 + $0x18] sm:$0xff]
    %v1915 = vld [vmem:[%s15 + $0x20] sm:$0xff]
    %v1916 = vld [vmem:[%s15 + $0x28] sm:$0xff]
    %v1917 = vld [vmem:[%s15 + $0x30] sm:$0xff]
    %v1918 = vld [vmem:[%s15 + $0x38] sm:$0xff]
    %v1919 = vld [vmem:[%s16] sm:$0x1]
    %v1921 = vlaneseq
    %v1922 = vshrl.u32 %v1921, 7
    %v1923 = vsub.s32 0, %v1922
    %v1924 = vrot.slane %v1919, %v1923
    %vm1926 = vcmask 523264
    %v1928 = vsel %vm1926, %v1909, 0
    %v1931 = vsel %vm1926, %v1910, 0
    %1933 = vmatprep.subr.mxu0 0.0
    %1934 = vmatpush1.msra.mxu0 %v1911
    %1935 = vmatprep.subr.mxu0 0.0
    %1936 = vmatpush1.msra.mxu0 %v1912
    %1937 = vmatprep.subr.mxu0 0.0
    %1938 = vmatpush1.msra.mxu0 %v1913
    %1939 = vmatprep.subr.mxu0 0.0
    %1940 = vmatpush1.msra.mxu0 %v1914
    %1941 = vmatprep.subr.mxu0 0.0
    %1942 = vmatpush1.msra.mxu0 %v1915
    %1943 = vmatprep.subr.mxu0 0.0
    %1944 = vmatpush1.msra.mxu0 %v1916
    %1945 = vmatprep.subr.mxu0 0.0
    %1946 = vmatpush1.msra.mxu0 %v1917
    %1947 = vmatprep.subr.mxu0 0.0
    %1948 = vmatpush1.msra.mxu0 %v1918
    %1949 = vmatprep.subr.mxu0 0.0
    %1950 = vmatpush1.msra.mxu0 0.0
    %1951 = vmatprep.subr.mxu0 0.0
    %1952 = vmatpush1.msra.mxu0 0.0
    %1953 = vmatprep.subr.mxu0 0.0
    %1954 = vmatpush1.msra.mxu0 0.0
    %1955 = vmatprep.subr.mxu0 0.0
    %1956 = vmatpush1.msra.mxu0 0.0
    %1957 = vmatprep.subr.mxu0 0.0
    %1958 = vmatpush1.msra.mxu0 0.0
    %1959 = vmatprep.subr.mxu0 0.0
    %1960 = vmatpush1.msra.mxu0 0.0
    %1961 = vmatprep.subr.mxu0 0.0
    %1962 = vmatpush1.msra.mxu0 0.0
    %1963 = vmatprep.subr.mxu0 0.0
    %1964 = vmatpush1.msra.mxu0 0.0
    %1965 = vmatprep.subr.mxu0 0.0
    %1966 = vmatpush1.msra.mxu0 0.0
    %1967 = vmatprep.subr.mxu0 0.0
    %1968 = vmatpush1.msra.mxu0 0.0
    %1969 = vmatprep.subr.mxu0 0.0
    %1970 = vmatpush1.msra.mxu0 0.0
    %1971 = vmatprep.subr.mxu0 0.0
    %1972 = vmatpush1.msra.mxu0 0.0
    %1973 = vmatprep.subr.mxu0 0.0
    %1974 = vmatpush1.msra.mxu0 0.0
    %1975 = vmatprep.subr.mxu0 0.0
    %1976 = vmatpush1.msra.mxu0 0.0
    %1977 = vmatprep.subr.mxu0 0.0
    %1978 = vmatpush1.msra.mxu0 0.0
    %1979 = vmatprep.subr.mxu0 0.0
    %1980 = vmatpush1.msra.mxu0 0.0
    %1981 = vmatprep.subr.mxu0 0.0
    %1982 = vmatpush1.msra.mxu0 0.0
    %1983 = vmatprep.subr.mxu0 0.0
    %1984 = vmatpush1.msra.mxu0 0.0
    %1985 = vmatprep.subr.mxu0 0.0
    %1986 = vmatpush1.msra.mxu0 0.0
    %1987 = vmatprep.subr.mxu0 0.0
    %1988 = vmatpush1.msra.mxu0 0.0
    %1989 = vmatprep.subr.mxu0 0.0
    %1990 = vmatpush1.msra.mxu0 0.0
    %1991 = vmatprep.subr.mxu0 0.0
    %1992 = vmatpush1.msra.mxu0 0.0
    %1993 = vmatprep.subr.mxu0 0.0
    %1994 = vmatpush1.msra.mxu0 0.0
    %1995 = vmatprep.subr.mxu0 0.0
    %1996 = vmatpush1.msra.mxu0 0.0
    %1997 = vmatprep.mubr.f32.mxu0 0.0
    %1998 = vmatmul.mubr.f32.gmra.mrb[0].mxu0 %v1928
    %v1999 = vpop.f32.mrb[0].mxu0
    %v2000 = vadd.f32 %v1924, %v1999
    %v2001 = vpop.f32.mrb[0].mxu0
    %2002 = vmatprep.mubr.f32.mxu0 0.0
    %2003 = vmatmul.mubr.f32.gmra.mrb[0].mxu0 %v1931
    %v2004 = vpop.f32.mrb[0].mxu0
    %v2005 = vadd.f32 %v1924, %v2004
    %v2006 = vpop.f32.mrb[0].mxu0
    %2007 = vdwg.mxu0
    %v2008 = vadd.f32 %v2000, %v1763
    %v2009 = vadd.f32 %v2005, %v1764
    %v2010 = vld [vmem:[%s17] sm:$0x1]
    %v2011 = vld [vmem:[%s18] sm:$0x1]
    %v2012 = vsel %vm116, %v2008, 0.0
    %2013 = vadd.xlane.f32.xlu0 %v2012
    %v2014 = vpop.xlane.xlu0 %2013
    %v2015 = vsel %vm116, %v2009, 0.0
    %2016 = vadd.xlane.f32.xlu0 %v2015
    %v2017 = vpop.xlane.xlu0 %2016
    %v2018 = vmul.f32 %v2014, %v123
    %v2019 = vmul.f32 %v2017, %v123
    %v2020 = vsub.f32 %v2008, %v2018
    %v2021 = vsub.f32 %v2009, %v2019
    %v2022 = vmul.f32 %v2020, %v2020
    %v2023 = vmul.f32 %v2021, %v2021
    %v2024 = vsel %vm116, %v2022, 0.0
    %2025 = vadd.xlane.f32.xlu0 %v2024
    %v2026 = vpop.xlane.xlu0 %2025
    %v2027 = vsel %vm116, %v2023, 0.0
    %2028 = vadd.xlane.f32.xlu0 %v2027
    %v2029 = vpop.xlane.xlu0 %2028
    %v2030 = vmul.f32 %v2026, %v123
    %v2031 = vmul.f32 %v2029, %v123
    %v2032 = vadd.f32 %v2030, 1e-12
    %v2033 = vadd.f32 %v2031, 1e-12
    %v2034 = vrsqrt.pop %v2032
    %v2035 = vrsqrt.pop %v2033
    %v2036 = vmul.f32 %v2020, %v2034
    %v2037 = vmul.f32 %v2021, %v2035
    %v2039 = vlaneseq
    %v2040 = vshrl.u32 %v2039, 7
    %v2041 = vsub.s32 0, %v2040
    %v2042 = vrot.slane %v2010, %v2041
    %v2044 = vmul.f32 %v2036, %v2042
    %v2045 = vmul.f32 %v2037, %v2042
    %v2047 = vlaneseq
    %v2048 = vshrl.u32 %v2047, 7
    %v2049 = vsub.s32 0, %v2048
    %v2050 = vrot.slane %v2011, %v2049
    %v2052 = vadd.f32 %v2044, %v2050
    %v2053 = vadd.f32 %v2045, %v2050
    %s2054 = scalar_lea.vmem %s7, 32
    %v2055 = vld [vmem:[%s2054] sm:$0xff]
    %v2056 = vld [vmem:[%s2054 + $0x8] sm:$0xff]
    %v2057 = vld [vmem:[%s2054 + $0x10] sm:$0xff]
    %v2058 = vld [vmem:[%s2054 + $0x18] sm:$0xff]
    %s2059 = scalar_lea.vmem %s8, 1
    %v2060 = vld [vmem:[%s2059] sm:$0x1]
    %v2062 = vlaneseq
    %v2063 = vshrl.u32 %v2062, 7
    %v2064 = vsub.s32 0, %v2063
    %v2065 = vrot.slane %v2060, %v2064
    %v2068 = vsel %vm116, %v2052, 0
    %v2071 = vsel %vm116, %v2053, 0
    %2073 = vmatprep.subr.mxu0 0.0
    %2074 = vmatpush1.msra.mxu0 %v2055
    %2075 = vmatprep.subr.mxu0 0.0
    %2076 = vmatpush1.msra.mxu0 %v2056
    %2077 = vmatprep.subr.mxu0 0.0
    %2078 = vmatpush1.msra.mxu0 %v2057
    %2079 = vmatprep.subr.mxu0 0.0
    %2080 = vmatpush1.msra.mxu0 %v2058
    %2081 = vmatprep.subr.mxu0 0.0
    %2082 = vmatpush1.msra.mxu0 0.0
    %2083 = vmatprep.subr.mxu0 0.0
    %2084 = vmatpush1.msra.mxu0 0.0
    %2085 = vmatprep.subr.mxu0 0.0
    %2086 = vmatpush1.msra.mxu0 0.0
    %2087 = vmatprep.subr.mxu0 0.0
    %2088 = vmatpush1.msra.mxu0 0.0
    %2089 = vmatprep.subr.mxu0 0.0
    %2090 = vmatpush1.msra.mxu0 0.0
    %2091 = vmatprep.subr.mxu0 0.0
    %2092 = vmatpush1.msra.mxu0 0.0
    %2093 = vmatprep.subr.mxu0 0.0
    %2094 = vmatpush1.msra.mxu0 0.0
    %2095 = vmatprep.subr.mxu0 0.0
    %2096 = vmatpush1.msra.mxu0 0.0
    %2097 = vmatprep.subr.mxu0 0.0
    %2098 = vmatpush1.msra.mxu0 0.0
    %2099 = vmatprep.subr.mxu0 0.0
    %2100 = vmatpush1.msra.mxu0 0.0
    %2101 = vmatprep.subr.mxu0 0.0
    %2102 = vmatpush1.msra.mxu0 0.0
    %2103 = vmatprep.subr.mxu0 0.0
    %2104 = vmatpush1.msra.mxu0 0.0
    %2105 = vmatprep.subr.mxu0 0.0
    %2106 = vmatpush1.msra.mxu0 0.0
    %2107 = vmatprep.subr.mxu0 0.0
    %2108 = vmatpush1.msra.mxu0 0.0
    %2109 = vmatprep.subr.mxu0 0.0
    %2110 = vmatpush1.msra.mxu0 0.0
    %2111 = vmatprep.subr.mxu0 0.0
    %2112 = vmatpush1.msra.mxu0 0.0
    %2113 = vmatprep.subr.mxu0 0.0
    %2114 = vmatpush1.msra.mxu0 0.0
    %2115 = vmatprep.subr.mxu0 0.0
    %2116 = vmatpush1.msra.mxu0 0.0
    %2117 = vmatprep.subr.mxu0 0.0
    %2118 = vmatpush1.msra.mxu0 0.0
    %2119 = vmatprep.subr.mxu0 0.0
    %2120 = vmatpush1.msra.mxu0 0.0
    %2121 = vmatprep.subr.mxu0 0.0
    %2122 = vmatpush1.msra.mxu0 0.0
    %2123 = vmatprep.subr.mxu0 0.0
    %2124 = vmatpush1.msra.mxu0 0.0
    %2125 = vmatprep.subr.mxu0 0.0
    %2126 = vmatpush1.msra.mxu0 0.0
    %2127 = vmatprep.subr.mxu0 0.0
    %2128 = vmatpush1.msra.mxu0 0.0
    %2129 = vmatprep.subr.mxu0 0.0
    %2130 = vmatpush1.msra.mxu0 0.0
    %2131 = vmatprep.subr.mxu0 0.0
    %2132 = vmatpush1.msra.mxu0 0.0
    %2133 = vmatprep.subr.mxu0 0.0
    %2134 = vmatpush1.msra.mxu0 0.0
    %2135 = vmatprep.subr.mxu0 0.0
    %2136 = vmatpush1.msra.mxu0 0.0
    %2137 = vmatprep.mubr.f32.mxu0 0.0
    %2138 = vmatmul.mubr.f32.gmra.mrb[0].mxu0 %v2068
    %v2139 = vpop.f32.mrb[0].mxu0
    %v2140 = vadd.f32 %v2065, %v2139
    %v2141 = vpop.f32.mrb[0].mxu0
    %2142 = vmatprep.mubr.f32.mxu0 0.0
    %2143 = vmatmul.mubr.f32.gmra.mrb[0].mxu0 %v2071
    %v2144 = vpop.f32.mrb[0].mxu0
    %v2145 = vadd.f32 %v2065, %v2144
    %v2146 = vpop.f32.mrb[0].mxu0
    %2147 = vdwg.mxu0
    %2149 = vrot.lane.b32.xlu0 %v2140, 96
    %v2150 = vpop.permute.xlu0 %2149
    %v2151 = vsel %vm255, %v2140, 0
    %v2153 = vsel %vm255, %v2150, 0
    %2155 = vmatprep.subr.mxu0 0.0
    %2156 = vmatpush1.xpose.msra.mxu0 %v2153
    %2157 = vmatprep.subr.mxu0 0.0
    %2158 = vmatpush1.xpose.msra.mxu0 0.0
    %2159 = vmatprep.subr.mxu0 0.0
    %2160 = vmatpush1.xpose.msra.mxu0 0.0
    %2161 = vmatprep.subr.mxu0 0.0
    %2162 = vmatpush1.xpose.msra.mxu0 0.0
    %2163 = vmatprep.subr.mxu0 0.0
    %2164 = vmatpush1.xpose.msra.mxu0 0.0
    %2165 = vmatprep.subr.mxu0 0.0
    %2166 = vmatpush1.xpose.msra.mxu0 0.0
    %2167 = vmatprep.subr.mxu0 0.0
    %2168 = vmatpush1.xpose.msra.mxu0 0.0
    %2169 = vmatprep.subr.mxu0 0.0
    %2170 = vmatpush1.xpose.msra.mxu0 0.0
    %2171 = vmatprep.subr.mxu0 0.0
    %2172 = vmatpush1.xpose.msra.mxu0 0.0
    %2173 = vmatprep.subr.mxu0 0.0
    %2174 = vmatpush1.xpose.msra.mxu0 0.0
    %2175 = vmatprep.subr.mxu0 0.0
    %2176 = vmatpush1.xpose.msra.mxu0 0.0
    %2177 = vmatprep.subr.mxu0 0.0
    %2178 = vmatpush1.xpose.msra.mxu0 0.0
    %2179 = vmatprep.subr.mxu0 0.0
    %2180 = vmatpush1.xpose.msra.mxu0 0.0
    %2181 = vmatprep.subr.mxu0 0.0
    %2182 = vmatpush1.xpose.msra.mxu0 0.0
    %2183 = vmatprep.subr.mxu0 0.0
    %2184 = vmatpush1.xpose.msra.mxu0 0.0
    %2185 = vmatprep.subr.mxu0 0.0
    %2186 = vmatpush1.xpose.msra.mxu0 0.0
    %2187 = vmatprep.subr.mxu0 0.0
    %2188 = vmatpush1.xpose.msra.mxu0 0.0
    %2189 = vmatprep.subr.mxu0 0.0
    %2190 = vmatpush1.xpose.msra.mxu0 0.0
    %2191 = vmatprep.subr.mxu0 0.0
    %2192 = vmatpush1.xpose.msra.mxu0 0.0
    %2193 = vmatprep.subr.mxu0 0.0
    %2194 = vmatpush1.xpose.msra.mxu0 0.0
    %2195 = vmatprep.subr.mxu0 0.0
    %2196 = vmatpush1.xpose.msra.mxu0 0.0
    %2197 = vmatprep.subr.mxu0 0.0
    %2198 = vmatpush1.xpose.msra.mxu0 0.0
    %2199 = vmatprep.subr.mxu0 0.0
    %2200 = vmatpush1.xpose.msra.mxu0 0.0
    %2201 = vmatprep.subr.mxu0 0.0
    %2202 = vmatpush1.xpose.msra.mxu0 0.0
    %2203 = vmatprep.subr.mxu0 0.0
    %2204 = vmatpush1.xpose.msra.mxu0 0.0
    %2205 = vmatprep.subr.mxu0 0.0
    %2206 = vmatpush1.xpose.msra.mxu0 0.0
    %2207 = vmatprep.subr.mxu0 0.0
    %2208 = vmatpush1.xpose.msra.mxu0 0.0
    %2209 = vmatprep.subr.mxu0 0.0
    %2210 = vmatpush1.xpose.msra.mxu0 0.0
    %2211 = vmatprep.subr.mxu0 0.0
    %2212 = vmatpush1.xpose.msra.mxu0 0.0
    %2213 = vmatprep.subr.mxu0 0.0
    %2214 = vmatpush1.xpose.msra.mxu0 0.0
    %2215 = vmatprep.subr.mxu0 0.0
    %2216 = vmatpush1.xpose.msra.mxu0 0.0
    %2217 = vmatprep.subr.mxu0 0.0
    %2218 = vmatpush1.xpose.msra.mxu0 0.0
    %2219 = vmatprep.mubr.f32.mxu0 0.0
    %2220 = vmatmul.mubr.f32.gmra.mrb[0].mxu0 %v2151
    %v2221 = vpop.f32.mrb[0].mxu0
    %v2222 = vadd.f32 0.0, %v2221
    %v2223 = vpop.f32.mrb[0].mxu0
    %2224 = vdwg.mxu0
    %v2225 = vmul.f32 %v2222, 0.35355338
    %v2226 = vadd.f32 %v2225, %v334
    %v2227 = vsel %vm255, %v2226, -inf
    %2228 = vmax.xlane.f32.xlu0 %v2227
    %v2229 = vpop.xlane.xlu0 %2228
    %v2230 = vsub.f32 %v2226, %v2229
    %v2231 = vmul.f32 %v2230, 1.442695
    %v2232 = vpow.pop %v2231
    %v2233 = vsel %vm255, %v2232, 0.0
    %2234 = vadd.xlane.f32.xlu0 %v2233
    %v2235 = vpop.xlane.xlu0 %2234
    %v2236 = vrcp.pop %v2235
    %v2237 = vmul.f32 %v2232, %v2236
    %2238 = vrot.lane.b32.xlu0 %v2140, 64
    %v2239 = vpop.permute.xlu0 %2238
    %v2242 = vsel %vm255, %v2237, 0
    %2244 = vmatprep.subr.mxu0 0.0
    %2245 = vmatpush1.msra.mxu0 %v2239
    %2246 = vmatprep.subr.mxu0 0.0
    %2247 = vmatpush1.msra.mxu0 0.0
    %2248 = vmatprep.subr.mxu0 0.0
    %2249 = vmatpush1.msra.mxu0 0.0
    %2250 = vmatprep.subr.mxu0 0.0
    %2251 = vmatpush1.msra.mxu0 0.0
    %2252 = vmatprep.subr.mxu0 0.0
    %2253 = vmatpush1.msra.mxu0 0.0
    %2254 = vmatprep.subr.mxu0 0.0
    %2255 = vmatpush1.msra.mxu0 0.0
    %2256 = vmatprep.subr.mxu0 0.0
    %2257 = vmatpush1.msra.mxu0 0.0
    %2258 = vmatprep.subr.mxu0 0.0
    %2259 = vmatpush1.msra.mxu0 0.0
    %2260 = vmatprep.subr.mxu0 0.0
    %2261 = vmatpush1.msra.mxu0 0.0
    %2262 = vmatprep.subr.mxu0 0.0
    %2263 = vmatpush1.msra.mxu0 0.0
    %2264 = vmatprep.subr.mxu0 0.0
    %2265 = vmatpush1.msra.mxu0 0.0
    %2266 = vmatprep.subr.mxu0 0.0
    %2267 = vmatpush1.msra.mxu0 0.0
    %2268 = vmatprep.subr.mxu0 0.0
    %2269 = vmatpush1.msra.mxu0 0.0
    %2270 = vmatprep.subr.mxu0 0.0
    %2271 = vmatpush1.msra.mxu0 0.0
    %2272 = vmatprep.subr.mxu0 0.0
    %2273 = vmatpush1.msra.mxu0 0.0
    %2274 = vmatprep.subr.mxu0 0.0
    %2275 = vmatpush1.msra.mxu0 0.0
    %2276 = vmatprep.subr.mxu0 0.0
    %2277 = vmatpush1.msra.mxu0 0.0
    %2278 = vmatprep.subr.mxu0 0.0
    %2279 = vmatpush1.msra.mxu0 0.0
    %2280 = vmatprep.subr.mxu0 0.0
    %2281 = vmatpush1.msra.mxu0 0.0
    %2282 = vmatprep.subr.mxu0 0.0
    %2283 = vmatpush1.msra.mxu0 0.0
    %2284 = vmatprep.subr.mxu0 0.0
    %2285 = vmatpush1.msra.mxu0 0.0
    %2286 = vmatprep.subr.mxu0 0.0
    %2287 = vmatpush1.msra.mxu0 0.0
    %2288 = vmatprep.subr.mxu0 0.0
    %2289 = vmatpush1.msra.mxu0 0.0
    %2290 = vmatprep.subr.mxu0 0.0
    %2291 = vmatpush1.msra.mxu0 0.0
    %2292 = vmatprep.subr.mxu0 0.0
    %2293 = vmatpush1.msra.mxu0 0.0
    %2294 = vmatprep.subr.mxu0 0.0
    %2295 = vmatpush1.msra.mxu0 0.0
    %2296 = vmatprep.subr.mxu0 0.0
    %2297 = vmatpush1.msra.mxu0 0.0
    %2298 = vmatprep.subr.mxu0 0.0
    %2299 = vmatpush1.msra.mxu0 0.0
    %2300 = vmatprep.subr.mxu0 0.0
    %2301 = vmatpush1.msra.mxu0 0.0
    %2302 = vmatprep.subr.mxu0 0.0
    %2303 = vmatpush1.msra.mxu0 0.0
    %2304 = vmatprep.subr.mxu0 0.0
    %2305 = vmatpush1.msra.mxu0 0.0
    %2306 = vmatprep.subr.mxu0 0.0
    %2307 = vmatpush1.msra.mxu0 0.0
    %2308 = vmatprep.mubr.f32.mxu0 0.0
    %2309 = vmatmul.mubr.f32.gmra.mrb[0].mxu0 %v2242
    %v2310 = vpop.f32.mrb[0].mxu0
    %v2311 = vadd.f32 0.0, %v2310
    %v2312 = vpop.f32.mrb[0].mxu0
    %2313 = vdwg.mxu0
    %2314 = vrot.lane.b32.xlu0 %v2140, 120
    %v2315 = vpop.permute.xlu0 %2314
    %2316 = vrot.lane.b32.xlu0 %v2140, 88
    %v2317 = vpop.permute.xlu0 %2316
    %v2318 = vsel %vm255, %v2315, 0
    %v2320 = vsel %vm255, %v2317, 0
    %2322 = vmatprep.subr.mxu0 0.0
    %2323 = vmatpush1.xpose.msra.mxu0 %v2320
    %2324 = vmatprep.subr.mxu0 0.0
    %2325 = vmatpush1.xpose.msra.mxu0 0.0
    %2326 = vmatprep.subr.mxu0 0.0
    %2327 = vmatpush1.xpose.msra.mxu0 0.0
    %2328 = vmatprep.subr.mxu0 0.0
    %2329 = vmatpush1.xpose.msra.mxu0 0.0
    %2330 = vmatprep.subr.mxu0 0.0
    %2331 = vmatpush1.xpose.msra.mxu0 0.0
    %2332 = vmatprep.subr.mxu0 0.0
    %2333 = vmatpush1.xpose.msra.mxu0 0.0
    %2334 = vmatprep.subr.mxu0 0.0
    %2335 = vmatpush1.xpose.msra.mxu0 0.0
    %2336 = vmatprep.subr.mxu0 0.0
    %2337 = vmatpush1.xpose.msra.mxu0 0.0
    %2338 = vmatprep.subr.mxu0 0.0
    %2339 = vmatpush1.xpose.msra.mxu0 0.0
    %2340 = vmatprep.subr.mxu0 0.0
    %2341 = vmatpush1.xpose.msra.mxu0 0.0
    %2342 = vmatprep.subr.mxu0 0.0
    %2343 = vmatpush1.xpose.msra.mxu0 0.0
    %2344 = vmatprep.subr.mxu0 0.0
    %2345 = vmatpush1.xpose.msra.mxu0 0.0
    %2346 = vmatprep.subr.mxu0 0.0
    %2347 = vmatpush1.xpose.msra.mxu0 0.0
    %2348 = vmatprep.subr.mxu0 0.0
    %2349 = vmatpush1.xpose.msra.mxu0 0.0
    %2350 = vmatprep.subr.mxu0 0.0
    %2351 = vmatpush1.xpose.msra.mxu0 0.0
    %2352 = vmatprep.subr.mxu0 0.0
    %2353 = vmatpush1.xpose.msra.mxu0 0.0
    %2354 = vmatprep.subr.mxu0 0.0
    %2355 = vmatpush1.xpose.msra.mxu0 0.0
    %2356 = vmatprep.subr.mxu0 0.0
    %2357 = vmatpush1.xpose.msra.mxu0 0.0
    %2358 = vmatprep.subr.mxu0 0.0
    %2359 = vmatpush1.xpose.msra.mxu0 0.0
    %2360 = vmatprep.subr.mxu0 0.0
    %2361 = vmatpush1.xpose.msra.mxu0 0.0
    %2362 = vmatprep.subr.mxu0 0.0
    %2363 = vmatpush1.xpose.msra.mxu0 0.0
    %2364 = vmatprep.subr.mxu0 0.0
    %2365 = vmatpush1.xpose.msra.mxu0 0.0
    %2366 = vmatprep.subr.mxu0 0.0
    %2367 = vmatpush1.xpose.msra.mxu0 0.0
    %2368 = vmatprep.subr.mxu0 0.0
    %2369 = vmatpush1.xpose.msra.mxu0 0.0
    %2370 = vmatprep.subr.mxu0 0.0
    %2371 = vmatpush1.xpose.msra.mxu0 0.0
    %2372 = vmatprep.subr.mxu0 0.0
    %2373 = vmatpush1.xpose.msra.mxu0 0.0
    %2374 = vmatprep.subr.mxu0 0.0
    %2375 = vmatpush1.xpose.msra.mxu0 0.0
    %2376 = vmatprep.subr.mxu0 0.0
    %2377 = vmatpush1.xpose.msra.mxu0 0.0
    %2378 = vmatprep.subr.mxu0 0.0
    %2379 = vmatpush1.xpose.msra.mxu0 0.0
    %2380 = vmatprep.subr.mxu0 0.0
    %2381 = vmatpush1.xpose.msra.mxu0 0.0
    %2382 = vmatprep.subr.mxu0 0.0
    %2383 = vmatpush1.xpose.msra.mxu0 0.0
    %2384 = vmatprep.subr.mxu0 0.0
    %2385 = vmatpush1.xpose.msra.mxu0 0.0
    %2386 = vmatprep.mubr.f32.mxu0 0.0
    %2387 = vmatmul.mubr.f32.gmra.mrb[0].mxu0 %v2318
    %v2388 = vpop.f32.mrb[0].mxu0
    %v2389 = vadd.f32 0.0, %v2388
    %v2390 = vpop.f32.mrb[0].mxu0
    %2391 = vdwg.mxu0
    %v2392 = vmul.f32 %v2389, 0.35355338
    %v2393 = vadd.f32 %v2392, %v334
    %v2394 = vsel %vm255, %v2393, -inf
    %2395 = vmax.xlane.f32.xlu0 %v2394
    %v2396 = vpop.xlane.xlu0 %2395
    %v2397 = vsub.f32 %v2393, %v2396
    %v2398 = vmul.f32 %v2397, 1.442695
    %v2399 = vpow.pop %v2398
    %v2400 = vsel %vm255, %v2399, 0.0
    %2401 = vadd.xlane.f32.xlu0 %v2400
    %v2402 = vpop.xlane.xlu0 %2401
    %v2403 = vrcp.pop %v2402
    %v2404 = vmul.f32 %v2399, %v2403
    %2405 = vrot.lane.b32.xlu0 %v2140, 56
    %v2406 = vpop.permute.xlu0 %2405
    %v2409 = vsel %vm255, %v2404, 0
    %2411 = vmatprep.subr.mxu0 0.0
    %2412 = vmatpush1.msra.mxu0 %v2406
    %2413 = vmatprep.subr.mxu0 0.0
    %2414 = vmatpush1.msra.mxu0 0.0
    %2415 = vmatprep.subr.mxu0 0.0
    %2416 = vmatpush1.msra.mxu0 0.0
    %2417 = vmatprep.subr.mxu0 0.0
    %2418 = vmatpush1.msra.mxu0 0.0
    %2419 = vmatprep.subr.mxu0 0.0
    %2420 = vmatpush1.msra.mxu0 0.0
    %2421 = vmatprep.subr.mxu0 0.0
    %2422 = vmatpush1.msra.mxu0 0.0
    %2423 = vmatprep.subr.mxu0 0.0
    %2424 = vmatpush1.msra.mxu0 0.0
    %2425 = vmatprep.subr.mxu0 0.0
    %2426 = vmatpush1.msra.mxu0 0.0
    %2427 = vmatprep.subr.mxu0 0.0
    %2428 = vmatpush1.msra.mxu0 0.0
    %2429 = vmatprep.subr.mxu0 0.0
    %2430 = vmatpush1.msra.mxu0 0.0
    %2431 = vmatprep.subr.mxu0 0.0
    %2432 = vmatpush1.msra.mxu0 0.0
    %2433 = vmatprep.subr.mxu0 0.0
    %2434 = vmatpush1.msra.mxu0 0.0
    %2435 = vmatprep.subr.mxu0 0.0
    %2436 = vmatpush1.msra.mxu0 0.0
    %2437 = vmatprep.subr.mxu0 0.0
    %2438 = vmatpush1.msra.mxu0 0.0
    %2439 = vmatprep.subr.mxu0 0.0
    %2440 = vmatpush1.msra.mxu0 0.0
    %2441 = vmatprep.subr.mxu0 0.0
    %2442 = vmatpush1.msra.mxu0 0.0
    %2443 = vmatprep.subr.mxu0 0.0
    %2444 = vmatpush1.msra.mxu0 0.0
    %2445 = vmatprep.subr.mxu0 0.0
    %2446 = vmatpush1.msra.mxu0 0.0
    %2447 = vmatprep.subr.mxu0 0.0
    %2448 = vmatpush1.msra.mxu0 0.0
    %2449 = vmatprep.subr.mxu0 0.0
    %2450 = vmatpush1.msra.mxu0 0.0
    %2451 = vmatprep.subr.mxu0 0.0
    %2452 = vmatpush1.msra.mxu0 0.0
    %2453 = vmatprep.subr.mxu0 0.0
    %2454 = vmatpush1.msra.mxu0 0.0
    %2455 = vmatprep.subr.mxu0 0.0
    %2456 = vmatpush1.msra.mxu0 0.0
    %2457 = vmatprep.subr.mxu0 0.0
    %2458 = vmatpush1.msra.mxu0 0.0
    %2459 = vmatprep.subr.mxu0 0.0
    %2460 = vmatpush1.msra.mxu0 0.0
    %2461 = vmatprep.subr.mxu0 0.0
    %2462 = vmatpush1.msra.mxu0 0.0
    %2463 = vmatprep.subr.mxu0 0.0
    %2464 = vmatpush1.msra.mxu0 0.0
    %2465 = vmatprep.subr.mxu0 0.0
    %2466 = vmatpush1.msra.mxu0 0.0
    %2467 = vmatprep.subr.mxu0 0.0
    %2468 = vmatpush1.msra.mxu0 0.0
    %2469 = vmatprep.subr.mxu0 0.0
    %2470 = vmatpush1.msra.mxu0 0.0
    %2471 = vmatprep.subr.mxu0 0.0
    %2472 = vmatpush1.msra.mxu0 0.0
    %2473 = vmatprep.subr.mxu0 0.0
    %2474 = vmatpush1.msra.mxu0 0.0
    %2475 = vmatprep.mubr.f32.mxu0 0.0
    %2476 = vmatmul.mubr.f32.gmra.mrb[0].mxu0 %v2409
    %v2477 = vpop.f32.mrb[0].mxu0
    %v2478 = vadd.f32 0.0, %v2477
    %v2479 = vpop.f32.mrb[0].mxu0
    %2480 = vdwg.mxu0
    %2481 = vrot.lane.b32.xlu0 %v2140, 112
    %v2482 = vpop.permute.xlu0 %2481
    %2483 = vrot.lane.b32.xlu0 %v2140, 80
    %v2484 = vpop.permute.xlu0 %2483
    %v2485 = vsel %vm255, %v2482, 0
    %v2487 = vsel %vm255, %v2484, 0
    %2489 = vmatprep.subr.mxu0 0.0
    %2490 = vmatpush1.xpose.msra.mxu0 %v2487
    %2491 = vmatprep.subr.mxu0 0.0
    %2492 = vmatpush1.xpose.msra.mxu0 0.0
    %2493 = vmatprep.subr.mxu0 0.0
    %2494 = vmatpush1.xpose.msra.mxu0 0.0
    %2495 = vmatprep.subr.mxu0 0.0
    %2496 = vmatpush1.xpose.msra.mxu0 0.0
    %2497 = vmatprep.subr.mxu0 0.0
    %2498 = vmatpush1.xpose.msra.mxu0 0.0
    %2499 = vmatprep.subr.mxu0 0.0
    %2500 = vmatpush1.xpose.msra.mxu0 0.0
    %2501 = vmatprep.subr.mxu0 0.0
    %2502 = vmatpush1.xpose.msra.mxu0 0.0
    %2503 = vmatprep.subr.mxu0 0.0
    %2504 = vmatpush1.xpose.msra.mxu0 0.0
    %2505 = vmatprep.subr.mxu0 0.0
    %2506 = vmatpush1.xpose.msra.mxu0 0.0
    %2507 = vmatprep.subr.mxu0 0.0
    %2508 = vmatpush1.xpose.msra.mxu0 0.0
    %2509 = vmatprep.subr.mxu0 0.0
    %2510 = vmatpush1.xpose.msra.mxu0 0.0
    %2511 = vmatprep.subr.mxu0 0.0
    %2512 = vmatpush1.xpose.msra.mxu0 0.0
    %2513 = vmatprep.subr.mxu0 0.0
    %2514 = vmatpush1.xpose.msra.mxu0 0.0
    %2515 = vmatprep.subr.mxu0 0.0
    %2516 = vmatpush1.xpose.msra.mxu0 0.0
    %2517 = vmatprep.subr.mxu0 0.0
    %2518 = vmatpush1.xpose.msra.mxu0 0.0
    %2519 = vmatprep.subr.mxu0 0.0
    %2520 = vmatpush1.xpose.msra.mxu0 0.0
    %2521 = vmatprep.subr.mxu0 0.0
    %2522 = vmatpush1.xpose.msra.mxu0 0.0
    %2523 = vmatprep.subr.mxu0 0.0
    %2524 = vmatpush1.xpose.msra.mxu0 0.0
    %2525 = vmatprep.subr.mxu0 0.0
    %2526 = vmatpush1.xpose.msra.mxu0 0.0
    %2527 = vmatprep.subr.mxu0 0.0
    %2528 = vmatpush1.xpose.msra.mxu0 0.0
    %2529 = vmatprep.subr.mxu0 0.0
    %2530 = vmatpush1.xpose.msra.mxu0 0.0
    %2531 = vmatprep.subr.mxu0 0.0
    %2532 = vmatpush1.xpose.msra.mxu0 0.0
    %2533 = vmatprep.subr.mxu0 0.0
    %2534 = vmatpush1.xpose.msra.mxu0 0.0
    %2535 = vmatprep.subr.mxu0 0.0
    %2536 = vmatpush1.xpose.msra.mxu0 0.0
    %2537 = vmatprep.subr.mxu0 0.0
    %2538 = vmatpush1.xpose.msra.mxu0 0.0
    %2539 = vmatprep.subr.mxu0 0.0
    %2540 = vmatpush1.xpose.msra.mxu0 0.0
    %2541 = vmatprep.subr.mxu0 0.0
    %2542 = vmatpush1.xpose.msra.mxu0 0.0
    %2543 = vmatprep.subr.mxu0 0.0
    %2544 = vmatpush1.xpose.msra.mxu0 0.0
    %2545 = vmatprep.subr.mxu0 0.0
    %2546 = vmatpush1.xpose.msra.mxu0 0.0
    %2547 = vmatprep.subr.mxu0 0.0
    %2548 = vmatpush1.xpose.msra.mxu0 0.0
    %2549 = vmatprep.subr.mxu0 0.0
    %2550 = vmatpush1.xpose.msra.mxu0 0.0
    %2551 = vmatprep.subr.mxu0 0.0
    %2552 = vmatpush1.xpose.msra.mxu0 0.0
    %2553 = vmatprep.mubr.f32.mxu0 0.0
    %2554 = vmatmul.mubr.f32.gmra.mrb[0].mxu0 %v2485
    %v2555 = vpop.f32.mrb[0].mxu0
    %v2556 = vadd.f32 0.0, %v2555
    %v2557 = vpop.f32.mrb[0].mxu0
    %2558 = vdwg.mxu0
    %v2559 = vmul.f32 %v2556, 0.35355338
    %v2560 = vadd.f32 %v2559, %v334
    %v2561 = vsel %vm255, %v2560, -inf
    %2562 = vmax.xlane.f32.xlu0 %v2561
    %v2563 = vpop.xlane.xlu0 %2562
    %v2564 = vsub.f32 %v2560, %v2563
    %v2565 = vmul.f32 %v2564, 1.442695
    %v2566 = vpow.pop %v2565
    %v2567 = vsel %vm255, %v2566, 0.0
    %2568 = vadd.xlane.f32.xlu0 %v2567
    %v2569 = vpop.xlane.xlu0 %2568
    %v2570 = vrcp.pop %v2569
    %v2571 = vmul.f32 %v2566, %v2570
    %2572 = vrot.lane.b32.xlu0 %v2140, 48
    %v2573 = vpop.permute.xlu0 %2572
    %v2576 = vsel %vm255, %v2571, 0
    %2578 = vmatprep.subr.mxu0 0.0
    %2579 = vmatpush1.msra.mxu0 %v2573
    %2580 = vmatprep.subr.mxu0 0.0
    %2581 = vmatpush1.msra.mxu0 0.0
    %2582 = vmatprep.subr.mxu0 0.0
    %2583 = vmatpush1.msra.mxu0 0.0
    %2584 = vmatprep.subr.mxu0 0.0
    %2585 = vmatpush1.msra.mxu0 0.0
    %2586 = vmatprep.subr.mxu0 0.0
    %2587 = vmatpush1.msra.mxu0 0.0
    %2588 = vmatprep.subr.mxu0 0.0
    %2589 = vmatpush1.msra.mxu0 0.0
    %2590 = vmatprep.subr.mxu0 0.0
    %2591 = vmatpush1.msra.mxu0 0.0
    %2592 = vmatprep.subr.mxu0 0.0
    %2593 = vmatpush1.msra.mxu0 0.0
    %2594 = vmatprep.subr.mxu0 0.0
    %2595 = vmatpush1.msra.mxu0 0.0
    %2596 = vmatprep.subr.mxu0 0.0
    %2597 = vmatpush1.msra.mxu0 0.0
    %2598 = vmatprep.subr.mxu0 0.0
    %2599 = vmatpush1.msra.mxu0 0.0
    %2600 = vmatprep.subr.mxu0 0.0
    %2601 = vmatpush1.msra.mxu0 0.0
    %2602 = vmatprep.subr.mxu0 0.0
    %2603 = vmatpush1.msra.mxu0 0.0
    %2604 = vmatprep.subr.mxu0 0.0
    %2605 = vmatpush1.msra.mxu0 0.0
    %2606 = vmatprep.subr.mxu0 0.0
    %2607 = vmatpush1.msra.mxu0 0.0
    %2608 = vmatprep.subr.mxu0 0.0
    %2609 = vmatpush1.msra.mxu0 0.0
    %2610 = vmatprep.subr.mxu0 0.0
    %2611 = vmatpush1.msra.mxu0 0.0
    %2612 = vmatprep.subr.mxu0 0.0
    %2613 = vmatpush1.msra.mxu0 0.0
    %2614 = vmatprep.subr.mxu0 0.0
    %2615 = vmatpush1.msra.mxu0 0.0
    %2616 = vmatprep.subr.mxu0 0.0
    %2617 = vmatpush1.msra.mxu0 0.0
    %2618 = vmatprep.subr.mxu0 0.0
    %2619 = vmatpush1.msra.mxu0 0.0
    %2620 = vmatprep.subr.mxu0 0.0
    %2621 = vmatpush1.msra.mxu0 0.0
    %2622 = vmatprep.subr.mxu0 0.0
    %2623 = vmatpush1.msra.mxu0 0.0
    %2624 = vmatprep.subr.mxu0 0.0
    %2625 = vmatpush1.msra.mxu0 0.0
    %2626 = vmatprep.subr.mxu0 0.0
    %2627 = vmatpush1.msra.mxu0 0.0
    %2628 = vmatprep.subr.mxu0 0.0
    %2629 = vmatpush1.msra.mxu0 0.0
    %2630 = vmatprep.subr.mxu0 0.0
    %2631 = vmatpush1.msra.mxu0 0.0
    %2632 = vmatprep.subr.mxu0 0.0
    %2633 = vmatpush1.msra.mxu0 0.0
    %2634 = vmatprep.subr.mxu0 0.0
    %2635 = vmatpush1.msra.mxu0 0.0
    %2636 = vmatprep.subr.mxu0 0.0
    %2637 = vmatpush1.msra.mxu0 0.0
    %2638 = vmatprep.subr.mxu0 0.0
    %2639 = vmatpush1.msra.mxu0 0.0
    %2640 = vmatprep.subr.mxu0 0.0
    %2641 = vmatpush1.msra.mxu0 0.0
    %2642 = vmatprep.mubr.f32.mxu0 0.0
    %2643 = vmatmul.mubr.f32.gmra.mrb[0].mxu0 %v2576
    %v2644 = vpop.f32.mrb[0].mxu0
    %v2645 = vadd.f32 0.0, %v2644
    %v2646 = vpop.f32.mrb[0].mxu0
    %2647 = vdwg.mxu0
    %2648 = vrot.lane.b32.xlu0 %v2140, 104
    %v2649 = vpop.permute.xlu0 %2648
    %2650 = vrot.lane.b32.xlu0 %v2140, 72
    %v2651 = vpop.permute.xlu0 %2650
    %v2652 = vsel %vm255, %v2649, 0
    %v2654 = vsel %vm255, %v2651, 0
    %2656 = vmatprep.subr.mxu0 0.0
    %2657 = vmatpush1.xpose.msra.mxu0 %v2654
    %2658 = vmatprep.subr.mxu0 0.0
    %2659 = vmatpush1.xpose.msra.mxu0 0.0
    %2660 = vmatprep.subr.mxu0 0.0
    %2661 = vmatpush1.xpose.msra.mxu0 0.0
    %2662 = vmatprep.subr.mxu0 0.0
    %2663 = vmatpush1.xpose.msra.mxu0 0.0
    %2664 = vmatprep.subr.mxu0 0.0
    %2665 = vmatpush1.xpose.msra.mxu0 0.0
    %2666 = vmatprep.subr.mxu0 0.0
    %2667 = vmatpush1.xpose.msra.mxu0 0.0
    %2668 = vmatprep.subr.mxu0 0.0
    %2669 = vmatpush1.xpose.msra.mxu0 0.0
    %2670 = vmatprep.subr.mxu0 0.0
    %2671 = vmatpush1.xpose.msra.mxu0 0.0
    %2672 = vmatprep.subr.mxu0 0.0
    %2673 = vmatpush1.xpose.msra.mxu0 0.0
    %2674 = vmatprep.subr.mxu0 0.0
    %2675 = vmatpush1.xpose.msra.mxu0 0.0
    %2676 = vmatprep.subr.mxu0 0.0
    %2677 = vmatpush1.xpose.msra.mxu0 0.0
    %2678 = vmatprep.subr.mxu0 0.0
    %2679 = vmatpush1.xpose.msra.mxu0 0.0
    %2680 = vmatprep.subr.mxu0 0.0
    %2681 = vmatpush1.xpose.msra.mxu0 0.0
    %2682 = vmatprep.subr.mxu0 0.0
    %2683 = vmatpush1.xpose.msra.mxu0 0.0
    %2684 = vmatprep.subr.mxu0 0.0
    %2685 = vmatpush1.xpose.msra.mxu0 0.0
    %2686 = vmatprep.subr.mxu0 0.0
    %2687 = vmatpush1.xpose.msra.mxu0 0.0
    %2688 = vmatprep.subr.mxu0 0.0
    %2689 = vmatpush1.xpose.msra.mxu0 0.0
    %2690 = vmatprep.subr.mxu0 0.0
    %2691 = vmatpush1.xpose.msra.mxu0 0.0
    %2692 = vmatprep.subr.mxu0 0.0
    %2693 = vmatpush1.xpose.msra.mxu0 0.0
    %2694 = vmatprep.subr.mxu0 0.0
    %2695 = vmatpush1.xpose.msra.mxu0 0.0
    %2696 = vmatprep.subr.mxu0 0.0
    %2697 = vmatpush1.xpose.msra.mxu0 0.0
    %2698 = vmatprep.subr.mxu0 0.0
    %2699 = vmatpush1.xpose.msra.mxu0 0.0
    %2700 = vmatprep.subr.mxu0 0.0
    %2701 = vmatpush1.xpose.msra.mxu0 0.0
    %2702 = vmatprep.subr.mxu0 0.0
    %2703 = vmatpush1.xpose.msra.mxu0 0.0
    %2704 = vmatprep.subr.mxu0 0.0
    %2705 = vmatpush1.xpose.msra.mxu0 0.0
    %2706 = vmatprep.subr.mxu0 0.0
    %2707 = vmatpush1.xpose.msra.mxu0 0.0
    %2708 = vmatprep.subr.mxu0 0.0
    %2709 = vmatpush1.xpose.msra.mxu0 0.0
    %2710 = vmatprep.subr.mxu0 0.0
    %2711 = vmatpush1.xpose.msra.mxu0 0.0
    %2712 = vmatprep.subr.mxu0 0.0
    %2713 = vmatpush1.xpose.msra.mxu0 0.0
    %2714 = vmatprep.subr.mxu0 0.0
    %2715 = vmatpush1.xpose.msra.mxu0 0.0
    %2716 = vmatprep.subr.mxu0 0.0
    %2717 = vmatpush1.xpose.msra.mxu0 0.0
    %2718 = vmatprep.subr.mxu0 0.0
    %2719 = vmatpush1.xpose.msra.mxu0 0.0
    %2720 = vmatprep.mubr.f32.mxu0 0.0
    %2721 = vmatmul.mubr.f32.gmra.mrb[0].mxu0 %v2652
    %v2722 = vpop.f32.mrb[0].mxu0
    %v2723 = vadd.f32 0.0, %v2722
    %v2724 = vpop.f32.mrb[0].mxu0
    %2725 = vdwg.mxu0
    %v2726 = vmul.f32 %v2723, 0.35355338
    %v2727 = vadd.f32 %v2726, %v334
    %v2728 = vsel %vm255, %v2727, -inf
    %2729 = vmax.xlane.f32.xlu0 %v2728
    %v2730 = vpop.xlane.xlu0 %2729
    %v2731 = vsub.f32 %v2727, %v2730
    %v2732 = vmul.f32 %v2731, 1.442695
    %v2733 = vpow.pop %v2732
    %v2734 = vsel %vm255, %v2733, 0.0
    %2735 = vadd.xlane.f32.xlu0 %v2734
    %v2736 = vpop.xlane.xlu0 %2735
    %v2737 = vrcp.pop %v2736
    %v2738 = vmul.f32 %v2733, %v2737
    %2739 = vrot.lane.b32.xlu0 %v2140, 40
    %v2740 = vpop.permute.xlu0 %2739
    %v2743 = vsel %vm255, %v2738, 0
    %2745 = vmatprep.subr.mxu0 0.0
    %2746 = vmatpush1.msra.mxu0 %v2740
    %2747 = vmatprep.subr.mxu0 0.0
    %2748 = vmatpush1.msra.mxu0 0.0
    %2749 = vmatprep.subr.mxu0 0.0
    %2750 = vmatpush1.msra.mxu0 0.0
    %2751 = vmatprep.subr.mxu0 0.0
    %2752 = vmatpush1.msra.mxu0 0.0
    %2753 = vmatprep.subr.mxu0 0.0
    %2754 = vmatpush1.msra.mxu0 0.0
    %2755 = vmatprep.subr.mxu0 0.0
    %2756 = vmatpush1.msra.mxu0 0.0
    %2757 = vmatprep.subr.mxu0 0.0
    %2758 = vmatpush1.msra.mxu0 0.0
    %2759 = vmatprep.subr.mxu0 0.0
    %2760 = vmatpush1.msra.mxu0 0.0
    %2761 = vmatprep.subr.mxu0 0.0
    %2762 = vmatpush1.msra.mxu0 0.0
    %2763 = vmatprep.subr.mxu0 0.0
    %2764 = vmatpush1.msra.mxu0 0.0
    %2765 = vmatprep.subr.mxu0 0.0
    %2766 = vmatpush1.msra.mxu0 0.0
    %2767 = vmatprep.subr.mxu0 0.0
    %2768 = vmatpush1.msra.mxu0 0.0
    %2769 = vmatprep.subr.mxu0 0.0
    %2770 = vmatpush1.msra.mxu0 0.0
    %2771 = vmatprep.subr.mxu0 0.0
    %2772 = vmatpush1.msra.mxu0 0.0
    %2773 = vmatprep.subr.mxu0 0.0
    %2774 = vmatpush1.msra.mxu0 0.0
    %2775 = vmatprep.subr.mxu0 0.0
    %2776 = vmatpush1.msra.mxu0 0.0
    %2777 = vmatprep.subr.mxu0 0.0
    %2778 = vmatpush1.msra.mxu0 0.0
    %2779 = vmatprep.subr.mxu0 0.0
    %2780 = vmatpush1.msra.mxu0 0.0
    %2781 = vmatprep.subr.mxu0 0.0
    %2782 = vmatpush1.msra.mxu0 0.0
    %2783 = vmatprep.subr.mxu0 0.0
    %2784 = vmatpush1.msra.mxu0 0.0
    %2785 = vmatprep.subr.mxu0 0.0
    %2786 = vmatpush1.msra.mxu0 0.0
    %2787 = vmatprep.subr.mxu0 0.0
    %2788 = vmatpush1.msra.mxu0 0.0
    %2789 = vmatprep.subr.mxu0 0.0
    %2790 = vmatpush1.msra.mxu0 0.0
    %2791 = vmatprep.subr.mxu0 0.0
    %2792 = vmatpush1.msra.mxu0 0.0
    %2793 = vmatprep.subr.mxu0 0.0
    %2794 = vmatpush1.msra.mxu0 0.0
    %2795 = vmatprep.subr.mxu0 0.0
    %2796 = vmatpush1.msra.mxu0 0.0
    %2797 = vmatprep.subr.mxu0 0.0
    %2798 = vmatpush1.msra.mxu0 0.0
    %2799 = vmatprep.subr.mxu0 0.0
    %2800 = vmatpush1.msra.mxu0 0.0
    %2801 = vmatprep.subr.mxu0 0.0
    %2802 = vmatpush1.msra.mxu0 0.0
    %2803 = vmatprep.subr.mxu0 0.0
    %2804 = vmatpush1.msra.mxu0 0.0
    %2805 = vmatprep.subr.mxu0 0.0
    %2806 = vmatpush1.msra.mxu0 0.0
    %2807 = vmatprep.subr.mxu0 0.0
    %2808 = vmatpush1.msra.mxu0 0.0
    %2809 = vmatprep.mubr.f32.mxu0 0.0
    %2810 = vmatmul.mubr.f32.gmra.mrb[0].mxu0 %v2743
    %v2811 = vpop.f32.mrb[0].mxu0
    %v2812 = vadd.f32 0.0, %v2811
    %v2813 = vpop.f32.mrb[0].mxu0
    %2814 = vdwg.mxu0
    %2816 = vrot.lane.b32.xlu0 %v2478, 8
    %v2817 = vpop.permute.xlu0 %2816
    %2820 = vrot.lane.b32.xlu0 %v2645, 16
    %v2821 = vpop.permute.xlu0 %2820
    %2824 = vrot.lane.b32.xlu0 %v2812, 24
    %v2825 = vpop.permute.xlu0 %2824
    %v2827 = vsel %vm255, %v2311, %v2817
    %v2828 = vsel %vm937, %v2827, %v2821
    %v2829 = vsel %vm939, %v2828, %v2825
    %2831 = vrot.lane.b32.xlu0 %v2145, 96
    %v2832 = vpop.permute.xlu0 %2831
    %v2833 = vsel %vm255, %v2145, 0
    %v2835 = vsel %vm255, %v2832, 0
    %2837 = vmatprep.subr.mxu0 0.0
    %2838 = vmatpush1.xpose.msra.mxu0 %v2835
    %2839 = vmatprep.subr.mxu0 0.0
    %2840 = vmatpush1.xpose.msra.mxu0 0.0
    %2841 = vmatprep.subr.mxu0 0.0
    %2842 = vmatpush1.xpose.msra.mxu0 0.0
    %2843 = vmatprep.subr.mxu0 0.0
    %2844 = vmatpush1.xpose.msra.mxu0 0.0
    %2845 = vmatprep.subr.mxu0 0.0
    %2846 = vmatpush1.xpose.msra.mxu0 0.0
    %2847 = vmatprep.subr.mxu0 0.0
    %2848 = vmatpush1.xpose.msra.mxu0 0.0
    %2849 = vmatprep.subr.mxu0 0.0
    %2850 = vmatpush1.xpose.msra.mxu0 0.0
    %2851 = vmatprep.subr.mxu0 0.0
    %2852 = vmatpush1.xpose.msra.mxu0 0.0
    %2853 = vmatprep.subr.mxu0 0.0
    %2854 = vmatpush1.xpose.msra.mxu0 0.0
    %2855 = vmatprep.subr.mxu0 0.0
    %2856 = vmatpush1.xpose.msra.mxu0 0.0
    %2857 = vmatprep.subr.mxu0 0.0
    %2858 = vmatpush1.xpose.msra.mxu0 0.0
    %2859 = vmatprep.subr.mxu0 0.0
    %2860 = vmatpush1.xpose.msra.mxu0 0.0
    %2861 = vmatprep.subr.mxu0 0.0
    %2862 = vmatpush1.xpose.msra.mxu0 0.0
    %2863 = vmatprep.subr.mxu0 0.0
    %2864 = vmatpush1.xpose.msra.mxu0 0.0
    %2865 = vmatprep.subr.mxu0 0.0
    %2866 = vmatpush1.xpose.msra.mxu0 0.0
    %2867 = vmatprep.subr.mxu0 0.0
    %2868 = vmatpush1.xpose.msra.mxu0 0.0
    %2869 = vmatprep.subr.mxu0 0.0
    %2870 = vmatpush1.xpose.msra.mxu0 0.0
    %2871 = vmatprep.subr.mxu0 0.0
    %2872 = vmatpush1.xpose.msra.mxu0 0.0
    %2873 = vmatprep.subr.mxu0 0.0
    %2874 = vmatpush1.xpose.msra.mxu0 0.0
    %2875 = vmatprep.subr.mxu0 0.0
    %2876 = vmatpush1.xpose.msra.mxu0 0.0
    %2877 = vmatprep.subr.mxu0 0.0
    %2878 = vmatpush1.xpose.msra.mxu0 0.0
    %2879 = vmatprep.subr.mxu0 0.0
    %2880 = vmatpush1.xpose.msra.mxu0 0.0
    %2881 = vmatprep.subr.mxu0 0.0
    %2882 = vmatpush1.xpose.msra.mxu0 0.0
    %2883 = vmatprep.subr.mxu0 0.0
    %2884 = vmatpush1.xpose.msra.mxu0 0.0
    %2885 = vmatprep.subr.mxu0 0.0
    %2886 = vmatpush1.xpose.msra.mxu0 0.0
    %2887 = vmatprep.subr.mxu0 0.0
    %2888 = vmatpush1.xpose.msra.mxu0 0.0
    %2889 = vmatprep.subr.mxu0 0.0
    %2890 = vmatpush1.xpose.msra.mxu0 0.0
    %2891 = vmatprep.subr.mxu0 0.0
    %2892 = vmatpush1.xpose.msra.mxu0 0.0
    %2893 = vmatprep.subr.mxu0 0.0
    %2894 = vmatpush1.xpose.msra.mxu0 0.0
    %2895 = vmatprep.subr.mxu0 0.0
    %2896 = vmatpush1.xpose.msra.mxu0 0.0
    %2897 = vmatprep.subr.mxu0 0.0
    %2898 = vmatpush1.xpose.msra.mxu0 0.0
    %2899 = vmatprep.subr.mxu0 0.0
    %2900 = vmatpush1.xpose.msra.mxu0 0.0
    %2901 = vmatprep.mubr.f32.mxu0 0.0
    %2902 = vmatmul.mubr.f32.gmra.mrb[0].mxu0 %v2833
    %v2903 = vpop.f32.mrb[0].mxu0
    %v2904 = vadd.f32 0.0, %v2903
    %v2905 = vpop.f32.mrb[0].mxu0
    %2906 = vdwg.mxu0
    %v2907 = vmul.f32 %v2904, 0.35355338
    %v2908 = vadd.f32 %v2907, %v1022
    %v2909 = vsel %vm255, %v2908, -inf
    %2910 = vmax.xlane.f32.xlu0 %v2909
    %v2911 = vpop.xlane.xlu0 %2910
    %v2912 = vsub.f32 %v2908, %v2911
    %v2913 = vmul.f32 %v2912, 1.442695
    %v2914 = vpow.pop %v2913
    %v2915 = vsel %vm255, %v2914, 0.0
    %2916 = vadd.xlane.f32.xlu0 %v2915
    %v2917 = vpop.xlane.xlu0 %2916
    %v2918 = vrcp.pop %v2917
    %v2919 = vmul.f32 %v2914, %v2918
    %2920 = vrot.lane.b32.xlu0 %v2145, 64
    %v2921 = vpop.permute.xlu0 %2920
    %v2924 = vsel %vm255, %v2919, 0
    %2926 = vmatprep.subr.mxu0 0.0
    %2927 = vmatpush1.msra.mxu0 %v2921
    %2928 = vmatprep.subr.mxu0 0.0
    %2929 = vmatpush1.msra.mxu0 0.0
    %2930 = vmatprep.subr.mxu0 0.0
    %2931 = vmatpush1.msra.mxu0 0.0
    %2932 = vmatprep.subr.mxu0 0.0
    %2933 = vmatpush1.msra.mxu0 0.0
    %2934 = vmatprep.subr.mxu0 0.0
    %2935 = vmatpush1.msra.mxu0 0.0
    %2936 = vmatprep.subr.mxu0 0.0
    %2937 = vmatpush1.msra.mxu0 0.0
    %2938 = vmatprep.subr.mxu0 0.0
    %2939 = vmatpush1.msra.mxu0 0.0
    %2940 = vmatprep.subr.mxu0 0.0
    %2941 = vmatpush1.msra.mxu0 0.0
    %2942 = vmatprep.subr.mxu0 0.0
    %2943 = vmatpush1.msra.mxu0 0.0
    %2944 = vmatprep.subr.mxu0 0.0
    %2945 = vmatpush1.msra.mxu0 0.0
    %2946 = vmatprep.subr.mxu0 0.0
    %2947 = vmatpush1.msra.mxu0 0.0
    %2948 = vmatprep.subr.mxu0 0.0
    %2949 = vmatpush1.msra.mxu0 0.0
    %2950 = vmatprep.subr.mxu0 0.0
    %2951 = vmatpush1.msra.mxu0 0.0
    %2952 = vmatprep.subr.mxu0 0.0
    %2953 = vmatpush1.msra.mxu0 0.0
    %2954 = vmatprep.subr.mxu0 0.0
    %2955 = vmatpush1.msra.mxu0 0.0
    %2956 = vmatprep.subr.mxu0 0.0
    %2957 = vmatpush1.msra.mxu0 0.0
    %2958 = vmatprep.subr.mxu0 0.0
    %2959 = vmatpush1.msra.mxu0 0.0
    %2960 = vmatprep.subr.mxu0 0.0
    %2961 = vmatpush1.msra.mxu0 0.0
    %2962 = vmatprep.subr.mxu0 0.0
    %2963 = vmatpush1.msra.mxu0 0.0
    %2964 = vmatprep.subr.mxu0 0.0
    %2965 = vmatpush1.msra.mxu0 0.0
    %2966 = vmatprep.subr.mxu0 0.0
    %2967 = vmatpush1.msra.mxu0 0.0
    %2968 = vmatprep.subr.mxu0 0.0
    %2969 = vmatpush1.msra.mxu0 0.0
    %2970 = vmatprep.subr.mxu0 0.0
    %2971 = vmatpush1.msra.mxu0 0.0
    %2972 = vmatprep.subr.mxu0 0.0
    %2973 = vmatpush1.msra.mxu0 0.0
    %2974 = vmatprep.subr.mxu0 0.0
    %2975 = vmatpush1.msra.mxu0 0.0
    %2976 = vmatprep.subr.mxu0 0.0
    %2977 = vmatpush1.msra.mxu0 0.0
    %2978 = vmatprep.subr.mxu0 0.0
    %2979 = vmatpush1.msra.mxu0 0.0
    %2980 = vmatprep.subr.mxu0 0.0
    %2981 = vmatpush1.msra.mxu0 0.0
    %2982 = vmatprep.subr.mxu0 0.0
    %2983 = vmatpush1.msra.mxu0 0.0
    %2984 = vmatprep.subr.mxu0 0.0
    %2985 = vmatpush1.msra.mxu0 0.0
    %2986 = vmatprep.subr.mxu0 0.0
    %2987 = vmatpush1.msra.mxu0 0.0
    %2988 = vmatprep.subr.mxu0 0.0
    %2989 = vmatpush1.msra.mxu0 0.0
    %2990 = vmatprep.mubr.f32.mxu0 0.0
    %2991 = vmatmul.mubr.f32.gmra.mrb[0].mxu0 %v2924
    %v2992 = vpop.f32.mrb[0].mxu0
    %v2993 = vadd.f32 0.0, %v2992
    %v2994 = vpop.f32.mrb[0].mxu0
    %2995 = vdwg.mxu0
    %2996 = vrot.lane.b32.xlu0 %v2145, 120
    %v2997 = vpop.permute.xlu0 %2996
    %2998 = vrot.lane.b32.xlu0 %v2145, 88
    %v2999 = vpop.permute.xlu0 %2998
    %v3000 = vsel %vm255, %v2997, 0
    %v3002 = vsel %vm255, %v2999, 0
    %3004 = vmatprep.subr.mxu0 0.0
    %3005 = vmatpush1.xpose.msra.mxu0 %v3002
    %3006 = vmatprep.subr.mxu0 0.0
    %3007 = vmatpush1.xpose.msra.mxu0 0.0
    %3008 = vmatprep.subr.mxu0 0.0
    %3009 = vmatpush1.xpose.msra.mxu0 0.0
    %3010 = vmatprep.subr.mxu0 0.0
    %3011 = vmatpush1.xpose.msra.mxu0 0.0
    %3012 = vmatprep.subr.mxu0 0.0
    %3013 = vmatpush1.xpose.msra.mxu0 0.0
    %3014 = vmatprep.subr.mxu0 0.0
    %3015 = vmatpush1.xpose.msra.mxu0 0.0
    %3016 = vmatprep.subr.mxu0 0.0
    %3017 = vmatpush1.xpose.msra.mxu0 0.0
    %3018 = vmatprep.subr.mxu0 0.0
    %3019 = vmatpush1.xpose.msra.mxu0 0.0
    %3020 = vmatprep.subr.mxu0 0.0
    %3021 = vmatpush1.xpose.msra.mxu0 0.0
    %3022 = vmatprep.subr.mxu0 0.0
    %3023 = vmatpush1.xpose.msra.mxu0 0.0
    %3024 = vmatprep.subr.mxu0 0.0
    %3025 = vmatpush1.xpose.msra.mxu0 0.0
    %3026 = vmatprep.subr.mxu0 0.0
    %3027 = vmatpush1.xpose.msra.mxu0 0.0
    %3028 = vmatprep.subr.mxu0 0.0
    %3029 = vmatpush1.xpose.msra.mxu0 0.0
    %3030 = vmatprep.subr.mxu0 0.0
    %3031 = vmatpush1.xpose.msra.mxu0 0.0
    %3032 = vmatprep.subr.mxu0 0.0
    %3033 = vmatpush1.xpose.msra.mxu0 0.0
    %3034 = vmatprep.subr.mxu0 0.0
    %3035 = vmatpush1.xpose.msra.mxu0 0.0
    %3036 = vmatprep.subr.mxu0 0.0
    %3037 = vmatpush1.xpose.msra.mxu0 0.0
    %3038 = vmatprep.subr.mxu0 0.0
    %3039 = vmatpush1.xpose.msra.mxu0 0.0
    %3040 = vmatprep.subr.mxu0 0.0
    %3041 = vmatpush1.xpose.msra.mxu0 0.0
    %3042 = vmatprep.subr.mxu0 0.0
    %3043 = vmatpush1.xpose.msra.mxu0 0.0
    %3044 = vmatprep.subr.mxu0 0.0
    %3045 = vmatpush1.xpose.msra.mxu0 0.0
    %3046 = vmatprep.subr.mxu0 0.0
    %3047 = vmatpush1.xpose.msra.mxu0 0.0
    %3048 = vmatprep.subr.mxu0 0.0
    %3049 = vmatpush1.xpose.msra.mxu0 0.0
    %3050 = vmatprep.subr.mxu0 0.0
    %3051 = vmatpush1.xpose.msra.mxu0 0.0
    %3052 = vmatprep.subr.mxu0 0.0
    %3053 = vmatpush1.xpose.msra.mxu0 0.0
    %3054 = vmatprep.subr.mxu0 0.0
    %3055 = vmatpush1.xpose.msra.mxu0 0.0
    %3056 = vmatprep.subr.mxu0 0.0
    %3057 = vmatpush1.xpose.msra.mxu0 0.0
    %3058 = vmatprep.subr.mxu0 0.0
    %3059 = vmatpush1.xpose.msra.mxu0 0.0
    %3060 = vmatprep.subr.mxu0 0.0
    %3061 = vmatpush1.xpose.msra.mxu0 0.0
    %3062 = vmatprep.subr.mxu0 0.0
    %3063 = vmatpush1.xpose.msra.mxu0 0.0
    %3064 = vmatprep.subr.mxu0 0.0
    %3065 = vmatpush1.xpose.msra.mxu0 0.0
    %3066 = vmatprep.subr.mxu0 0.0
    %3067 = vmatpush1.xpose.msra.mxu0 0.0
    %3068 = vmatprep.mubr.f32.mxu0 0.0
    %3069 = vmatmul.mubr.f32.gmra.mrb[0].mxu0 %v3000
    %v3070 = vpop.f32.mrb[0].mxu0
    %v3071 = vadd.f32 0.0, %v3070
    %v3072 = vpop.f32.mrb[0].mxu0
    %3073 = vdwg.mxu0
    %v3074 = vmul.f32 %v3071, 0.35355338
    %v3075 = vadd.f32 %v3074, %v1022
    %v3076 = vsel %vm255, %v3075, -inf
    %3077 = vmax.xlane.f32.xlu0 %v3076
    %v3078 = vpop.xlane.xlu0 %3077
    %v3079 = vsub.f32 %v3075, %v3078
    %v3080 = vmul.f32 %v3079, 1.442695
    %v3081 = vpow.pop %v3080
    %v3082 = vsel %vm255, %v3081, 0.0
    %3083 = vadd.xlane.f32.xlu0 %v3082
    %v3084 = vpop.xlane.xlu0 %3083
    %v3085 = vrcp.pop %v3084
    %v3086 = vmul.f32 %v3081, %v3085
    %3087 = vrot.lane.b32.xlu0 %v2145, 56
    %v3088 = vpop.permute.xlu0 %3087
    %v3091 = vsel %vm255, %v3086, 0
    %3093 = vmatprep.subr.mxu0 0.0
    %3094 = vmatpush1.msra.mxu0 %v3088
    %3095 = vmatprep.subr.mxu0 0.0
    %3096 = vmatpush1.msra.mxu0 0.0
    %3097 = vmatprep.subr.mxu0 0.0
    %3098 = vmatpush1.msra.mxu0 0.0
    %3099 = vmatprep.subr.mxu0 0.0
    %3100 = vmatpush1.msra.mxu0 0.0
    %3101 = vmatprep.subr.mxu0 0.0
    %3102 = vmatpush1.msra.mxu0 0.0
    %3103 = vmatprep.subr.mxu0 0.0
    %3104 = vmatpush1.msra.mxu0 0.0
    %3105 = vmatprep.subr.mxu0 0.0
    %3106 = vmatpush1.msra.mxu0 0.0
    %3107 = vmatprep.subr.mxu0 0.0
    %3108 = vmatpush1.msra.mxu0 0.0
    %3109 = vmatprep.subr.mxu0 0.0
    %3110 = vmatpush1.msra.mxu0 0.0
    %3111 = vmatprep.subr.mxu0 0.0
    %3112 = vmatpush1.msra.mxu0 0.0
    %3113 = vmatprep.subr.mxu0 0.0
    %3114 = vmatpush1.msra.mxu0 0.0
    %3115 = vmatprep.subr.mxu0 0.0
    %3116 = vmatpush1.msra.mxu0 0.0
    %3117 = vmatprep.subr.mxu0 0.0
    %3118 = vmatpush1.msra.mxu0 0.0
    %3119 = vmatprep.subr.mxu0 0.0
    %3120 = vmatpush1.msra.mxu0 0.0
    %3121 = vmatprep.subr.mxu0 0.0
    %3122 = vmatpush1.msra.mxu0 0.0
    %3123 = vmatprep.subr.mxu0 0.0
    %3124 = vmatpush1.msra.mxu0 0.0
    %3125 = vmatprep.subr.mxu0 0.0
    %3126 = vmatpush1.msra.mxu0 0.0
    %3127 = vmatprep.subr.mxu0 0.0
    %3128 = vmatpush1.msra.mxu0 0.0
    %3129 = vmatprep.subr.mxu0 0.0
    %3130 = vmatpush1.msra.mxu0 0.0
    %3131 = vmatprep.subr.mxu0 0.0
    %3132 = vmatpush1.msra.mxu0 0.0
    %3133 = vmatprep.subr.mxu0 0.0
    %3134 = vmatpush1.msra.mxu0 0.0
    %3135 = vmatprep.subr.mxu0 0.0
    %3136 = vmatpush1.msra.mxu0 0.0
    %3137 = vmatprep.subr.mxu0 0.0
    %3138 = vmatpush1.msra.mxu0 0.0
    %3139 = vmatprep.subr.mxu0 0.0
    %3140 = vmatpush1.msra.mxu0 0.0
    %3141 = vmatprep.subr.mxu0 0.0
    %3142 = vmatpush1.msra.mxu0 0.0
    %3143 = vmatprep.subr.mxu0 0.0
    %3144 = vmatpush1.msra.mxu0 0.0
    %3145 = vmatprep.subr.mxu0 0.0
    %3146 = vmatpush1.msra.mxu0 0.0
    %3147 = vmatprep.subr.mxu0 0.0
    %3148 = vmatpush1.msra.mxu0 0.0
    %3149 = vmatprep.subr.mxu0 0.0
    %3150 = vmatpush1.msra.mxu0 0.0
    %3151 = vmatprep.subr.mxu0 0.0
    %3152 = vmatpush1.msra.mxu0 0.0
    %3153 = vmatprep.subr.mxu0 0.0
    %3154 = vmatpush1.msra.mxu0 0.0
    %3155 = vmatprep.subr.mxu0 0.0
    %3156 = vmatpush1.msra.mxu0 0.0
    %3157 = vmatprep.mubr.f32.mxu0 0.0
    %3158 = vmatmul.mubr.f32.gmra.mrb[0].mxu0 %v3091
    %v3159 = vpop.f32.mrb[0].mxu0
    %v3160 = vadd.f32 0.0, %v3159
    %v3161 = vpop.f32.mrb[0].mxu0
    %3162 = vdwg.mxu0
    %3163 = vrot.lane.b32.xlu0 %v2145, 112
    %v3164 = vpop.permute.xlu0 %3163
    %3165 = vrot.lane.b32.xlu0 %v2145, 80
    %v3166 = vpop.permute.xlu0 %3165
    %v3167 = vsel %vm255, %v3164, 0
    %v3169 = vsel %vm255, %v3166, 0
    %3171 = vmatprep.subr.mxu0 0.0
    %3172 = vmatpush1.xpose.msra.mxu0 %v3169
    %3173 = vmatprep.subr.mxu0 0.0
    %3174 = vmatpush1.xpose.msra.mxu0 0.0
    %3175 = vmatprep.subr.mxu0 0.0
    %3176 = vmatpush1.xpose.msra.mxu0 0.0
    %3177 = vmatprep.subr.mxu0 0.0
    %3178 = vmatpush1.xpose.msra.mxu0 0.0
    %3179 = vmatprep.subr.mxu0 0.0
    %3180 = vmatpush1.xpose.msra.mxu0 0.0
    %3181 = vmatprep.subr.mxu0 0.0
    %3182 = vmatpush1.xpose.msra.mxu0 0.0
    %3183 = vmatprep.subr.mxu0 0.0
    %3184 = vmatpush1.xpose.msra.mxu0 0.0
    %3185 = vmatprep.subr.mxu0 0.0
    %3186 = vmatpush1.xpose.msra.mxu0 0.0
    %3187 = vmatprep.subr.mxu0 0.0
    %3188 = vmatpush1.xpose.msra.mxu0 0.0
    %3189 = vmatprep.subr.mxu0 0.0
    %3190 = vmatpush1.xpose.msra.mxu0 0.0
    %3191 = vmatprep.subr.mxu0 0.0
    %3192 = vmatpush1.xpose.msra.mxu0 0.0
    %3193 = vmatprep.subr.mxu0 0.0
    %3194 = vmatpush1.xpose.msra.mxu0 0.0
    %3195 = vmatprep.subr.mxu0 0.0
    %3196 = vmatpush1.xpose.msra.mxu0 0.0
    %3197 = vmatprep.subr.mxu0 0.0
    %3198 = vmatpush1.xpose.msra.mxu0 0.0
    %3199 = vmatprep.subr.mxu0 0.0
    %3200 = vmatpush1.xpose.msra.mxu0 0.0
    %3201 = vmatprep.subr.mxu0 0.0
    %3202 = vmatpush1.xpose.msra.mxu0 0.0
    %3203 = vmatprep.subr.mxu0 0.0
    %3204 = vmatpush1.xpose.msra.mxu0 0.0
    %3205 = vmatprep.subr.mxu0 0.0
    %3206 = vmatpush1.xpose.msra.mxu0 0.0
    %3207 = vmatprep.subr.mxu0 0.0
    %3208 = vmatpush1.xpose.msra.mxu0 0.0
    %3209 = vmatprep.subr.mxu0 0.0
    %3210 = vmatpush1.xpose.msra.mxu0 0.0
    %3211 = vmatprep.subr.mxu0 0.0
    %3212 = vmatpush1.xpose.msra.mxu0 0.0
    %3213 = vmatprep.subr.mxu0 0.0
    %3214 = vmatpush1.xpose.msra.mxu0 0.0
    %3215 = vmatprep.subr.mxu0 0.0
    %3216 = vmatpush1.xpose.msra.mxu0 0.0
    %3217 = vmatprep.subr.mxu0 0.0
    %3218 = vmatpush1.xpose.msra.mxu0 0.0
    %3219 = vmatprep.subr.mxu0 0.0
    %3220 = vmatpush1.xpose.msra.mxu0 0.0
    %3221 = vmatprep.subr.mxu0 0.0
    %3222 = vmatpush1.xpose.msra.mxu0 0.0
    %3223 = vmatprep.subr.mxu0 0.0
    %3224 = vmatpush1.xpose.msra.mxu0 0.0
    %3225 = vmatprep.subr.mxu0 0.0
    %3226 = vmatpush1.xpose.msra.mxu0 0.0
    %3227 = vmatprep.subr.mxu0 0.0
    %3228 = vmatpush1.xpose.msra.mxu0 0.0
    %3229 = vmatprep.subr.mxu0 0.0
    %3230 = vmatpush1.xpose.msra.mxu0 0.0
    %3231 = vmatprep.subr.mxu0 0.0
    %3232 = vmatpush1.xpose.msra.mxu0 0.0
    %3233 = vmatprep.subr.mxu0 0.0
    %3234 = vmatpush1.xpose.msra.mxu0 0.0
    %3235 = vmatprep.mubr.f32.mxu0 0.0
    %3236 = vmatmul.mubr.f32.gmra.mrb[0].mxu0 %v3167
    %v3237 = vpop.f32.mrb[0].mxu0
    %v3238 = vadd.f32 0.0, %v3237
    %v3239 = vpop.f32.mrb[0].mxu0
    %3240 = vdwg.mxu0
    %v3241 = vmul.f32 %v3238, 0.35355338
    %v3242 = vadd.f32 %v3241, %v1022
    %v3243 = vsel %vm255, %v3242, -inf
    %3244 = vmax.xlane.f32.xlu0 %v3243
    %v3245 = vpop.xlane.xlu0 %3244
    %v3246 = vsub.f32 %v3242, %v3245
    %v3247 = vmul.f32 %v3246, 1.442695
    %v3248 = vpow.pop %v3247
    %v3249 = vsel %vm255, %v3248, 0.0
    %3250 = vadd.xlane.f32.xlu0 %v3249
    %v3251 = vpop.xlane.xlu0 %3250
    %v3252 = vrcp.pop %v3251
    %v3253 = vmul.f32 %v3248, %v3252
    %3254 = vrot.lane.b32.xlu0 %v2145, 48
    %v3255 = vpop.permute.xlu0 %3254
    %v3258 = vsel %vm255, %v3253, 0
    %3260 = vmatprep.subr.mxu0 0.0
    %3261 = vmatpush1.msra.mxu0 %v3255
    %3262 = vmatprep.subr.mxu0 0.0
    %3263 = vmatpush1.msra.mxu0 0.0
    %3264 = vmatprep.subr.mxu0 0.0
    %3265 = vmatpush1.msra.mxu0 0.0
    %3266 = vmatprep.subr.mxu0 0.0
    %3267 = vmatpush1.msra.mxu0 0.0
    %3268 = vmatprep.subr.mxu0 0.0
    %3269 = vmatpush1.msra.mxu0 0.0
    %3270 = vmatprep.subr.mxu0 0.0
    %3271 = vmatpush1.msra.mxu0 0.0
    %3272 = vmatprep.subr.mxu0 0.0
    %3273 = vmatpush1.msra.mxu0 0.0
    %3274 = vmatprep.subr.mxu0 0.0
    %3275 = vmatpush1.msra.mxu0 0.0
    %3276 = vmatprep.subr.mxu0 0.0
    %3277 = vmatpush1.msra.mxu0 0.0
    %3278 = vmatprep.subr.mxu0 0.0
    %3279 = vmatpush1.msra.mxu0 0.0
    %3280 = vmatprep.subr.mxu0 0.0
    %3281 = vmatpush1.msra.mxu0 0.0
    %3282 = vmatprep.subr.mxu0 0.0
    %3283 = vmatpush1.msra.mxu0 0.0
    %3284 = vmatprep.subr.mxu0 0.0
    %3285 = vmatpush1.msra.mxu0 0.0
    %3286 = vmatprep.subr.mxu0 0.0
    %3287 = vmatpush1.msra.mxu0 0.0
    %3288 = vmatprep.subr.mxu0 0.0
    %3289 = vmatpush1.msra.mxu0 0.0
    %3290 = vmatprep.subr.mxu0 0.0
    %3291 = vmatpush1.msra.mxu0 0.0
    %3292 = vmatprep.subr.mxu0 0.0
    %3293 = vmatpush1.msra.mxu0 0.0
    %3294 = vmatprep.subr.mxu0 0.0
    %3295 = vmatpush1.msra.mxu0 0.0
    %3296 = vmatprep.subr.mxu0 0.0
    %3297 = vmatpush1.msra.mxu0 0.0
    %3298 = vmatprep.subr.mxu0 0.0
    %3299 = vmatpush1.msra.mxu0 0.0
    %3300 = vmatprep.subr.mxu0 0.0
    %3301 = vmatpush1.msra.mxu0 0.0
    %3302 = vmatprep.subr.mxu0 0.0
    %3303 = vmatpush1.msra.mxu0 0.0
    %3304 = vmatprep.subr.mxu0 0.0
    %3305 = vmatpush1.msra.mxu0 0.0
    %3306 = vmatprep.subr.mxu0 0.0
    %3307 = vmatpush1.msra.mxu0 0.0
    %3308 = vmatprep.subr.mxu0 0.0
    %3309 = vmatpush1.msra.mxu0 0.0
    %3310 = vmatprep.subr.mxu0 0.0
    %3311 = vmatpush1.msra.mxu0 0.0
    %3312 = vmatprep.subr.mxu0 0.0
    %3313 = vmatpush1.msra.mxu0 0.0
    %3314 = vmatprep.subr.mxu0 0.0
    %3315 = vmatpush1.msra.mxu0 0.0
    %3316 = vmatprep.subr.mxu0 0.0
    %3317 = vmatpush1.msra.mxu0 0.0
    %3318 = vmatprep.subr.mxu0 0.0
    %3319 = vmatpush1.msra.mxu0 0.0
    %3320 = vmatprep.subr.mxu0 0.0
    %3321 = vmatpush1.msra.mxu0 0.0
    %3322 = vmatprep.subr.mxu0 0.0
    %3323 = vmatpush1.msra.mxu0 0.0
    %3324 = vmatprep.mubr.f32.mxu0 0.0
    %3325 = vmatmul.mubr.f32.gmra.mrb[0].mxu0 %v3258
    %v3326 = vpop.f32.mrb[0].mxu0
    %v3327 = vadd.f32 0.0, %v3326
    %v3328 = vpop.f32.mrb[0].mxu0
    %3329 = vdwg.mxu0
    %3330 = vrot.lane.b32.xlu0 %v2145, 104
    %v3331 = vpop.permute.xlu0 %3330
    %3332 = vrot.lane.b32.xlu0 %v2145, 72
    %v3333 = vpop.permute.xlu0 %3332
    %v3334 = vsel %vm255, %v3331, 0
    %v3336 = vsel %vm255, %v3333, 0
    %3338 = vmatprep.subr.mxu0 0.0
    %3339 = vmatpush1.xpose.msra.mxu0 %v3336
    %3340 = vmatprep.subr.mxu0 0.0
    %3341 = vmatpush1.xpose.msra.mxu0 0.0
    %3342 = vmatprep.subr.mxu0 0.0
    %3343 = vmatpush1.xpose.msra.mxu0 0.0
    %3344 = vmatprep.subr.mxu0 0.0
    %3345 = vmatpush1.xpose.msra.mxu0 0.0
    %3346 = vmatprep.subr.mxu0 0.0
    %3347 = vmatpush1.xpose.msra.mxu0 0.0
    %3348 = vmatprep.subr.mxu0 0.0
    %3349 = vmatpush1.xpose.msra.mxu0 0.0
    %3350 = vmatprep.subr.mxu0 0.0
    %3351 = vmatpush1.xpose.msra.mxu0 0.0
    %3352 = vmatprep.subr.mxu0 0.0
    %3353 = vmatpush1.xpose.msra.mxu0 0.0
    %3354 = vmatprep.subr.mxu0 0.0
    %3355 = vmatpush1.xpose.msra.mxu0 0.0
    %3356 = vmatprep.subr.mxu0 0.0
    %3357 = vmatpush1.xpose.msra.mxu0 0.0
    %3358 = vmatprep.subr.mxu0 0.0
    %3359 = vmatpush1.xpose.msra.mxu0 0.0
    %3360 = vmatprep.subr.mxu0 0.0
    %3361 = vmatpush1.xpose.msra.mxu0 0.0
    %3362 = vmatprep.subr.mxu0 0.0
    %3363 = vmatpush1.xpose.msra.mxu0 0.0
    %3364 = vmatprep.subr.mxu0 0.0
    %3365 = vmatpush1.xpose.msra.mxu0 0.0
    %3366 = vmatprep.subr.mxu0 0.0
    %3367 = vmatpush1.xpose.msra.mxu0 0.0
    %3368 = vmatprep.subr.mxu0 0.0
    %3369 = vmatpush1.xpose.msra.mxu0 0.0
    %3370 = vmatprep.subr.mxu0 0.0
    %3371 = vmatpush1.xpose.msra.mxu0 0.0
    %3372 = vmatprep.subr.mxu0 0.0
    %3373 = vmatpush1.xpose.msra.mxu0 0.0
    %3374 = vmatprep.subr.mxu0 0.0
    %3375 = vmatpush1.xpose.msra.mxu0 0.0
    %3376 = vmatprep.subr.mxu0 0.0
    %3377 = vmatpush1.xpose.msra.mxu0 0.0
    %3378 = vmatprep.subr.mxu0 0.0
    %3379 = vmatpush1.xpose.msra.mxu0 0.0
    %3380 = vmatprep.subr.mxu0 0.0
    %3381 = vmatpush1.xpose.msra.mxu0 0.0
    %3382 = vmatprep.subr.mxu0 0.0
    %3383 = vmatpush1.xpose.msra.mxu0 0.0
    %3384 = vmatprep.subr.mxu0 0.0
    %3385 = vmatpush1.xpose.msra.mxu0 0.0
    %3386 = vmatprep.subr.mxu0 0.0
    %3387 = vmatpush1.xpose.msra.mxu0 0.0
    %3388 = vmatprep.subr.mxu0 0.0
    %3389 = vmatpush1.xpose.msra.mxu0 0.0
    %3390 = vmatprep.subr.mxu0 0.0
    %3391 = vmatpush1.xpose.msra.mxu0 0.0
    %3392 = vmatprep.subr.mxu0 0.0
    %3393 = vmatpush1.xpose.msra.mxu0 0.0
    %3394 = vmatprep.subr.mxu0 0.0
    %3395 = vmatpush1.xpose.msra.mxu0 0.0
    %3396 = vmatprep.subr.mxu0 0.0
    %3397 = vmatpush1.xpose.msra.mxu0 0.0
    %3398 = vmatprep.subr.mxu0 0.0
    %3399 = vmatpush1.xpose.msra.mxu0 0.0
    %3400 = vmatprep.subr.mxu0 0.0
    %3401 = vmatpush1.xpose.msra.mxu0 0.0
    %3402 = vmatprep.mubr.f32.mxu0 0.0
    %3403 = vmatmul.mubr.f32.gmra.mrb[0].mxu0 %v3334
    %v3404 = vpop.f32.mrb[0].mxu0
    %v3405 = vadd.f32 0.0, %v3404
    %v3406 = vpop.f32.mrb[0].mxu0
    %3407 = vdwg.mxu0
    %v3408 = vmul.f32 %v3405, 0.35355338
    %v3409 = vadd.f32 %v3408, %v1022
    %v3410 = vsel %vm255, %v3409, -inf
    %3411 = vmax.xlane.f32.xlu0 %v3410
    %v3412 = vpop.xlane.xlu0 %3411
    %v3413 = vsub.f32 %v3409, %v3412
    %v3414 = vmul.f32 %v3413, 1.442695
    %v3415 = vpow.pop %v3414
    %v3416 = vsel %vm255, %v3415, 0.0
    %3417 = vadd.xlane.f32.xlu0 %v3416
    %v3418 = vpop.xlane.xlu0 %3417
    %v3419 = vrcp.pop %v3418
    %v3420 = vmul.f32 %v3415, %v3419
    %3421 = vrot.lane.b32.xlu0 %v2145, 40
    %v3422 = vpop.permute.xlu0 %3421
    %v3425 = vsel %vm255, %v3420, 0
    %3427 = vmatprep.subr.mxu0 0.0
    %3428 = vmatpush1.msra.mxu0 %v3422
    %3429 = vmatprep.subr.mxu0 0.0
    %3430 = vmatpush1.msra.mxu0 0.0
    %3431 = vmatprep.subr.mxu0 0.0
    %3432 = vmatpush1.msra.mxu0 0.0
    %3433 = vmatprep.subr.mxu0 0.0
    %3434 = vmatpush1.msra.mxu0 0.0
    %3435 = vmatprep.subr.mxu0 0.0
    %3436 = vmatpush1.msra.mxu0 0.0
    %3437 = vmatprep.subr.mxu0 0.0
    %3438 = vmatpush1.msra.mxu0 0.0
    %3439 = vmatprep.subr.mxu0 0.0
    %3440 = vmatpush1.msra.mxu0 0.0
    %3441 = vmatprep.subr.mxu0 0.0
    %3442 = vmatpush1.msra.mxu0 0.0
    %3443 = vmatprep.subr.mxu0 0.0
    %3444 = vmatpush1.msra.mxu0 0.0
    %3445 = vmatprep.subr.mxu0 0.0
    %3446 = vmatpush1.msra.mxu0 0.0
    %3447 = vmatprep.subr.mxu0 0.0
    %3448 = vmatpush1.msra.mxu0 0.0
    %3449 = vmatprep.subr.mxu0 0.0
    %3450 = vmatpush1.msra.mxu0 0.0
    %3451 = vmatprep.subr.mxu0 0.0
    %3452 = vmatpush1.msra.mxu0 0.0
    %3453 = vmatprep.subr.mxu0 0.0
    %3454 = vmatpush1.msra.mxu0 0.0
    %3455 = vmatprep.subr.mxu0 0.0
    %3456 = vmatpush1.msra.mxu0 0.0
    %3457 = vmatprep.subr.mxu0 0.0
    %3458 = vmatpush1.msra.mxu0 0.0
    %3459 = vmatprep.subr.mxu0 0.0
    %3460 = vmatpush1.msra.mxu0 0.0
    %3461 = vmatprep.subr.mxu0 0.0
    %3462 = vmatpush1.msra.mxu0 0.0
    %3463 = vmatprep.subr.mxu0 0.0
    %3464 = vmatpush1.msra.mxu0 0.0
    %3465 = vmatprep.subr.mxu0 0.0
    %3466 = vmatpush1.msra.mxu0 0.0
    %3467 = vmatprep.subr.mxu0 0.0
    %3468 = vmatpush1.msra.mxu0 0.0
    %3469 = vmatprep.subr.mxu0 0.0
    %3470 = vmatpush1.msra.mxu0 0.0
    %3471 = vmatprep.subr.mxu0 0.0
    %3472 = vmatpush1.msra.mxu0 0.0
    %3473 = vmatprep.subr.mxu0 0.0
    %3474 = vmatpush1.msra.mxu0 0.0
    %3475 = vmatprep.subr.mxu0 0.0
    %3476 = vmatpush1.msra.mxu0 0.0
    %3477 = vmatprep.subr.mxu0 0.0
    %3478 = vmatpush1.msra.mxu0 0.0
    %3479 = vmatprep.subr.mxu0 0.0
    %3480 = vmatpush1.msra.mxu0 0.0
    %3481 = vmatprep.subr.mxu0 0.0
    %3482 = vmatpush1.msra.mxu0 0.0
    %3483 = vmatprep.subr.mxu0 0.0
    %3484 = vmatpush1.msra.mxu0 0.0
    %3485 = vmatprep.subr.mxu0 0.0
    %3486 = vmatpush1.msra.mxu0 0.0
    %3487 = vmatprep.subr.mxu0 0.0
    %3488 = vmatpush1.msra.mxu0 0.0
    %3489 = vmatprep.subr.mxu0 0.0
    %3490 = vmatpush1.msra.mxu0 0.0
    %3491 = vmatprep.mubr.f32.mxu0 0.0
    %3492 = vmatmul.mubr.f32.gmra.mrb[0].mxu0 %v3425
    %v3493 = vpop.f32.mrb[0].mxu0
    %v3494 = vadd.f32 0.0, %v3493
    %v3495 = vpop.f32.mrb[0].mxu0
    %3496 = vdwg.mxu0
    %3498 = vrot.lane.b32.xlu0 %v3160, 8
    %v3499 = vpop.permute.xlu0 %3498
    %3502 = vrot.lane.b32.xlu0 %v3327, 16
    %v3503 = vpop.permute.xlu0 %3502
    %3506 = vrot.lane.b32.xlu0 %v3494, 24
    %v3507 = vpop.permute.xlu0 %3506
    %v3509 = vsel %vm255, %v2993, %v3499
    %v3510 = vsel %vm937, %v3509, %v3503
    %v3511 = vsel %vm939, %v3510, %v3507
    %s3512 = scalar_lea.vmem %s9, 32
    %v3513 = vld [vmem:[%s3512] sm:$0xff]
    %v3514 = vld [vmem:[%s3512 + $0x8] sm:$0xff]
    %v3515 = vld [vmem:[%s3512 + $0x10] sm:$0xff]
    %v3516 = vld [vmem:[%s3512 + $0x18] sm:$0xff]
    %s3517 = scalar_lea.vmem %s10, 1
    %v3518 = vld [vmem:[%s3517] sm:$0x1]
    %v3520 = vlaneseq
    %v3521 = vshrl.u32 %v3520, 7
    %v3522 = vsub.s32 0, %v3521
    %v3523 = vrot.slane %v3518, %v3522
    %v3526 = vsel %vm116, %v2829, 0
    %v3529 = vsel %vm116, %v3511, 0
    %3531 = vmatprep.subr.mxu0 0.0
    %3532 = vmatpush1.msra.mxu0 %v3513
    %3533 = vmatprep.subr.mxu0 0.0
    %3534 = vmatpush1.msra.mxu0 %v3514
    %3535 = vmatprep.subr.mxu0 0.0
    %3536 = vmatpush1.msra.mxu0 %v3515
    %3537 = vmatprep.subr.mxu0 0.0
    %3538 = vmatpush1.msra.mxu0 %v3516
    %3539 = vmatprep.subr.mxu0 0.0
    %3540 = vmatpush1.msra.mxu0 0.0
    %3541 = vmatprep.subr.mxu0 0.0
    %3542 = vmatpush1.msra.mxu0 0.0
    %3543 = vmatprep.subr.mxu0 0.0
    %3544 = vmatpush1.msra.mxu0 0.0
    %3545 = vmatprep.subr.mxu0 0.0
    %3546 = vmatpush1.msra.mxu0 0.0
    %3547 = vmatprep.subr.mxu0 0.0
    %3548 = vmatpush1.msra.mxu0 0.0
    %3549 = vmatprep.subr.mxu0 0.0
    %3550 = vmatpush1.msra.mxu0 0.0
    %3551 = vmatprep.subr.mxu0 0.0
    %3552 = vmatpush1.msra.mxu0 0.0
    %3553 = vmatprep.subr.mxu0 0.0
    %3554 = vmatpush1.msra.mxu0 0.0
    %3555 = vmatprep.subr.mxu0 0.0
    %3556 = vmatpush1.msra.mxu0 0.0
    %3557 = vmatprep.subr.mxu0 0.0
    %3558 = vmatpush1.msra.mxu0 0.0
    %3559 = vmatprep.subr.mxu0 0.0
    %3560 = vmatpush1.msra.mxu0 0.0
    %3561 = vmatprep.subr.mxu0 0.0
    %3562 = vmatpush1.msra.mxu0 0.0
    %3563 = vmatprep.subr.mxu0 0.0
    %3564 = vmatpush1.msra.mxu0 0.0
    %3565 = vmatprep.subr.mxu0 0.0
    %3566 = vmatpush1.msra.mxu0 0.0
    %3567 = vmatprep.subr.mxu0 0.0
    %3568 = vmatpush1.msra.mxu0 0.0
    %3569 = vmatprep.subr.mxu0 0.0
    %3570 = vmatpush1.msra.mxu0 0.0
    %3571 = vmatprep.subr.mxu0 0.0
    %3572 = vmatpush1.msra.mxu0 0.0
    %3573 = vmatprep.subr.mxu0 0.0
    %3574 = vmatpush1.msra.mxu0 0.0
    %3575 = vmatprep.subr.mxu0 0.0
    %3576 = vmatpush1.msra.mxu0 0.0
    %3577 = vmatprep.subr.mxu0 0.0
    %3578 = vmatpush1.msra.mxu0 0.0
    %3579 = vmatprep.subr.mxu0 0.0
    %3580 = vmatpush1.msra.mxu0 0.0
    %3581 = vmatprep.subr.mxu0 0.0
    %3582 = vmatpush1.msra.mxu0 0.0
    %3583 = vmatprep.subr.mxu0 0.0
    %3584 = vmatpush1.msra.mxu0 0.0
    %3585 = vmatprep.subr.mxu0 0.0
    %3586 = vmatpush1.msra.mxu0 0.0
    %3587 = vmatprep.subr.mxu0 0.0
    %3588 = vmatpush1.msra.mxu0 0.0
    %3589 = vmatprep.subr.mxu0 0.0
    %3590 = vmatpush1.msra.mxu0 0.0
    %3591 = vmatprep.subr.mxu0 0.0
    %3592 = vmatpush1.msra.mxu0 0.0
    %3593 = vmatprep.subr.mxu0 0.0
    %3594 = vmatpush1.msra.mxu0 0.0
    %3595 = vmatprep.mubr.f32.mxu0 0.0
    %3596 = vmatmul.mubr.f32.gmra.mrb[0].mxu0 %v3526
    %v3597 = vpop.f32.mrb[0].mxu0
    %v3598 = vadd.f32 %v3523, %v3597
    %v3599 = vpop.f32.mrb[0].mxu0
    %3600 = vmatprep.mubr.f32.mxu0 0.0
    %3601 = vmatmul.mubr.f32.gmra.mrb[0].mxu0 %v3529
    %v3602 = vpop.f32.mrb[0].mxu0
    %v3603 = vadd.f32 %v3523, %v3602
    %v3604 = vpop.f32.mrb[0].mxu0
    %3605 = vdwg.mxu0
    %v3606 = vadd.f32 %v3598, %v2052
    %v3607 = vadd.f32 %v3603, %v2053
    %s3608 = scalar_lea.vmem %s11, 1
    %v3609 = vld [vmem:[%s3608] sm:$0x1]
    %s3610 = scalar_lea.vmem %s12, 1
    %v3611 = vld [vmem:[%s3610] sm:$0x1]
    %v3612 = vsel %vm116, %v3606, 0.0
    %3613 = vadd.xlane.f32.xlu0 %v3612
    %v3614 = vpop.xlane.xlu0 %3613
    %v3615 = vsel %vm116, %v3607, 0.0
    %3616 = vadd.xlane.f32.xlu0 %v3615
    %v3617 = vpop.xlane.xlu0 %3616
    %v3618 = vmul.f32 %v3614, %v123
    %v3619 = vmul.f32 %v3617, %v123
    %v3620 = vsub.f32 %v3606, %v3618
    %v3621 = vsub.f32 %v3607, %v3619
    %v3622 = vmul.f32 %v3620, %v3620
    %v3623 = vmul.f32 %v3621, %v3621
    %v3624 = vsel %vm116, %v3622, 0.0
    %3625 = vadd.xlane.f32.xlu0 %v3624
    %v3626 = vpop.xlane.xlu0 %3625
    %v3627 = vsel %vm116, %v3623, 0.0
    %3628 = vadd.xlane.f32.xlu0 %v3627
    %v3629 = vpop.xlane.xlu0 %3628
    %v3630 = vmul.f32 %v3626, %v123
    %v3631 = vmul.f32 %v3629, %v123
    %v3632 = vadd.f32 %v3630, 1e-12
    %v3633 = vadd.f32 %v3631, 1e-12
    %v3634 = vrsqrt.pop %v3632
    %v3635 = vrsqrt.pop %v3633
    %v3636 = vmul.f32 %v3620, %v3634
    %v3637 = vmul.f32 %v3621, %v3635
    %v3639 = vlaneseq
    %v3640 = vshrl.u32 %v3639, 7
    %v3641 = vsub.s32 0, %v3640
    %v3642 = vrot.slane %v3609, %v3641
    %v3644 = vmul.f32 %v3636, %v3642
    %v3645 = vmul.f32 %v3637, %v3642
    %v3647 = vlaneseq
    %v3648 = vshrl.u32 %v3647, 7
    %v3649 = vsub.s32 0, %v3648
    %v3650 = vrot.slane %v3611, %v3649
    %v3652 = vadd.f32 %v3644, %v3650
    %v3653 = vadd.f32 %v3645, %v3650
    %s3654 = scalar_lea.vmem %s13, 32
    %v3655 = vld [vmem:[%s3654] sm:$0xff]
    %v3656 = vld [vmem:[%s3654 + $0x8] sm:$0xff]
    %v3657 = vld [vmem:[%s3654 + $0x10] sm:$0xff]
    %v3658 = vld [vmem:[%s3654 + $0x18] sm:$0xff]
    %s3659 = scalar_lea.vmem [#allocation7], 1
    %v3660 = vld [vmem:[%s3659] sm:$0x1]
    %v3662 = vlaneseq
    %v3663 = vshrl.u32 %v3662, 7
    %v3664 = vsub.s32 0, %v3663
    %v3665 = vrot.slane %v3660, %v3664
    %v3668 = vsel %vm116, %v3652, 0
    %v3671 = vsel %vm116, %v3653, 0
    %3673 = vmatprep.subr.mxu0 0.0
    %3674 = vmatpush1.msra.mxu0 %v3655
    %3675 = vmatprep.subr.mxu0 0.0
    %3676 = vmatpush1.msra.mxu0 %v3656
    %3677 = vmatprep.subr.mxu0 0.0
    %3678 = vmatpush1.msra.mxu0 %v3657
    %3679 = vmatprep.subr.mxu0 0.0
    %3680 = vmatpush1.msra.mxu0 %v3658
    %3681 = vmatprep.subr.mxu0 0.0
    %3682 = vmatpush1.msra.mxu0 0.0
    %3683 = vmatprep.subr.mxu0 0.0
    %3684 = vmatpush1.msra.mxu0 0.0
    %3685 = vmatprep.subr.mxu0 0.0
    %3686 = vmatpush1.msra.mxu0 0.0
    %3687 = vmatprep.subr.mxu0 0.0
    %3688 = vmatpush1.msra.mxu0 0.0
    %3689 = vmatprep.subr.mxu0 0.0
    %3690 = vmatpush1.msra.mxu0 0.0
    %3691 = vmatprep.subr.mxu0 0.0
    %3692 = vmatpush1.msra.mxu0 0.0
    %3693 = vmatprep.subr.mxu0 0.0
    %3694 = vmatpush1.msra.mxu0 0.0
    %3695 = vmatprep.subr.mxu0 0.0
    %3696 = vmatpush1.msra.mxu0 0.0
    %3697 = vmatprep.subr.mxu0 0.0
    %3698 = vmatpush1.msra.mxu0 0.0
    %3699 = vmatprep.subr.mxu0 0.0
    %3700 = vmatpush1.msra.mxu0 0.0
    %3701 = vmatprep.subr.mxu0 0.0
    %3702 = vmatpush1.msra.mxu0 0.0
    %3703 = vmatprep.subr.mxu0 0.0
    %3704 = vmatpush1.msra.mxu0 0.0
    %3705 = vmatprep.subr.mxu0 0.0
    %3706 = vmatpush1.msra.mxu0 0.0
    %3707 = vmatprep.subr.mxu0 0.0
    %3708 = vmatpush1.msra.mxu0 0.0
    %3709 = vmatprep.subr.mxu0 0.0
    %3710 = vmatpush1.msra.mxu0 0.0
    %3711 = vmatprep.subr.mxu0 0.0
    %3712 = vmatpush1.msra.mxu0 0.0
    %3713 = vmatprep.subr.mxu0 0.0
    %3714 = vmatpush1.msra.mxu0 0.0
    %3715 = vmatprep.subr.mxu0 0.0
    %3716 = vmatpush1.msra.mxu0 0.0
    %3717 = vmatprep.subr.mxu0 0.0
    %3718 = vmatpush1.msra.mxu0 0.0
    %3719 = vmatprep.subr.mxu0 0.0
    %3720 = vmatpush1.msra.mxu0 0.0
    %3721 = vmatprep.subr.mxu0 0.0
    %3722 = vmatpush1.msra.mxu0 0.0
    %3723 = vmatprep.subr.mxu0 0.0
    %3724 = vmatpush1.msra.mxu0 0.0
    %3725 = vmatprep.subr.mxu0 0.0
    %3726 = vmatpush1.msra.mxu0 0.0
    %3727 = vmatprep.subr.mxu0 0.0
    %3728 = vmatpush1.msra.mxu0 0.0
    %3729 = vmatprep.subr.mxu0 0.0
    %3730 = vmatpush1.msra.mxu0 0.0
    %3731 = vmatprep.subr.mxu0 0.0
    %3732 = vmatpush1.msra.mxu0 0.0
    %3733 = vmatprep.subr.mxu0 0.0
    %3734 = vmatpush1.msra.mxu0 0.0
    %3735 = vmatprep.subr.mxu0 0.0
    %3736 = vmatpush1.msra.mxu0 0.0
    %3737 = vmatprep.mubr.f32.mxu0 0.0
    %3738 = vmatmul.mubr.f32.gmra.mrb[0].mxu0 %v3668
    %v3739 = vpop.f32.mrb[0].mxu0
    %v3740 = vadd.f32 %v3665, %v3739
    %v3741 = vpop.f32.mrb[0].mxu0
    %3742 = vmatprep.mubr.f32.mxu0 0.0
    %3743 = vmatmul.mubr.f32.gmra.mrb[0].mxu0 %v3671
    %v3744 = vpop.f32.mrb[0].mxu0
    %v3745 = vadd.f32 %v3665, %v3744
    %v3746 = vpop.f32.mrb[0].mxu0
    %3747 = vdwg.mxu0
    %v3748 = vmul.f32 %v3740, 0.70710677
    %v3749 = vmul.f32 %v3745, 0.70710677
    %v3750 = vand.u32 2147483647, %v3748
    %v3751 = vand.u32 2147483647, %v3749
    %v3752 = vmul.f32 %v3750, 0.3275911
    %v3753 = vmul.f32 %v3751, 0.3275911
    %v3754 = vadd.f32 %v3752, 1.0
    %v3755 = vadd.f32 %v3753, 1.0
    %v3756 = vrcp.pop %v3754
    %v3757 = vmul.f32 1.0, %v3756
    %v3758 = vrcp.pop %v3755
    %v3759 = vmul.f32 1.0, %v3758
    %v3760 = vmul.f32 %v3757, 1.0614054
    %v3761 = vmul.f32 %v3759, 1.0614054
    %v3762 = vadd.f32 %v3760, -1.4531521
    %v3763 = vadd.f32 %v3761, -1.4531521
    %v3764 = vmul.f32 %v3757, %v3762
    %v3765 = vmul.f32 %v3759, %v3763
    %v3766 = vadd.f32 %v3764, 1.4214138
    %v3767 = vadd.f32 %v3765, 1.4214138
    %v3768 = vmul.f32 %v3757, %v3766
    %v3769 = vmul.f32 %v3759, %v3767
    %v3770 = vadd.f32 %v3768, -0.28449672
    %v3771 = vadd.f32 %v3769, -0.28449672
    %v3772 = vmul.f32 %v3757, %v3770
    %v3773 = vmul.f32 %v3759, %v3771
    %v3774 = vadd.f32 %v3772, 0.2548296
    %v3775 = vadd.f32 %v3773, 0.2548296
    %v3776 = vmul.f32 %v3757, %v3774
    %v3777 = vmul.f32 %v3759, %v3775
    %v3778 = vsub.f32 0.0, %v3750
    %v3779 = vsub.f32 0.0, %v3751
    %v3780 = vmul.f32 %v3778, %v3750
    %v3781 = vmul.f32 %v3779, %v3751
    %v3782 = vmul.f32 %v3780, 1.442695
    %v3783 = vpow.pop %v3782
    %v3784 = vmul.f32 %v3781, 1.442695
    %v3785 = vpow.pop %v3784
    %v3786 = vmul.f32 %v3776, %v3783
    %v3787 = vmul.f32 %v3777, %v3785
    %v3788 = vsub.f32 1.0, %v3786
    %v3789 = vsub.f32 1.0, %v3787
    %vm3790 = vcmp.ge.f32.partialorder %v3748, 0.0
    %vm3791 = vcmp.ge.f32.partialorder %v3749, 0.0
    %v3792 = vsub.f32 0.0, %v3788
    %v3793 = vsub.f32 0.0, %v3789
    %v3794 = vsel %vm3790, %v3788, %v3792
    %v3795 = vsel %vm3791, %v3789, %v3793
    %v3796 = vmul.f32 %v3740, 0.5
    %v3797 = vmul.f32 %v3745, 0.5
    %v3798 = vadd.f32 %v3794, 1.0
    %v3799 = vadd.f32 %v3795, 1.0
    %v3800 = vmul.f32 %v3796, %v3798
    %v3801 = vmul.f32 %v3797, %v3799
    %s3802 = scalar_lea.vmem %s15, 64
    %v3803 = vld [vmem:[%s3802] sm:$0xff]
    %v3804 = vld [vmem:[%s3802 + $0x8] sm:$0xff]
    %v3805 = vld [vmem:[%s3802 + $0x10] sm:$0xff]
    %v3806 = vld [vmem:[%s3802 + $0x18] sm:$0xff]
    %v3807 = vld [vmem:[%s3802 + $0x20] sm:$0xff]
    %v3808 = vld [vmem:[%s3802 + $0x28] sm:$0xff]
    %v3809 = vld [vmem:[%s3802 + $0x30] sm:$0xff]
    %v3810 = vld [vmem:[%s3802 + $0x38] sm:$0xff]
    %s3811 = scalar_lea.vmem %s16, 1
    %v3812 = vld [vmem:[%s3811] sm:$0x1]
    %v3814 = vlaneseq
    %v3815 = vshrl.u32 %v3814, 7
    %v3816 = vsub.s32 0, %v3815
    %v3817 = vrot.slane %v3812, %v3816
    %v3820 = vsel %vm1926, %v3800, 0
    %v3823 = vsel %vm1926, %v3801, 0
    %3825 = vmatprep.subr.mxu0 0.0
    %3826 = vmatpush1.msra.mxu0 %v3803
    %3827 = vmatprep.subr.mxu0 0.0
    %3828 = vmatpush1.msra.mxu0 %v3804
    %3829 = vmatprep.subr.mxu0 0.0
    %3830 = vmatpush1.msra.mxu0 %v3805
    %3831 = vmatprep.subr.mxu0 0.0
    %3832 = vmatpush1.msra.mxu0 %v3806
    %3833 = vmatprep.subr.mxu0 0.0
    %3834 = vmatpush1.msra.mxu0 %v3807
    %3835 = vmatprep.subr.mxu0 0.0
    %3836 = vmatpush1.msra.mxu0 %v3808
    %3837 = vmatprep.subr.mxu0 0.0
    %3838 = vmatpush1.msra.mxu0 %v3809
    %3839 = vmatprep.subr.mxu0 0.0
    %3840 = vmatpush1.msra.mxu0 %v3810
    %3841 = vmatprep.subr.mxu0 0.0
    %3842 = vmatpush1.msra.mxu0 0.0
    %3843 = vmatprep.subr.mxu0 0.0
    %3844 = vmatpush1.msra.mxu0 0.0
    %3845 = vmatprep.subr.mxu0 0.0
    %3846 = vmatpush1.msra.mxu0 0.0
    %3847 = vmatprep.subr.mxu0 0.0
    %3848 = vmatpush1.msra.mxu0 0.0
    %3849 = vmatprep.subr.mxu0 0.0
    %3850 = vmatpush1.msra.mxu0 0.0
    %3851 = vmatprep.subr.mxu0 0.0
    %3852 = vmatpush1.msra.mxu0 0.0
    %3853 = vmatprep.subr.mxu0 0.0
    %3854 = vmatpush1.msra.mxu0 0.0
    %3855 = vmatprep.subr.mxu0 0.0
    %3856 = vmatpush1.msra.mxu0 0.0
    %3857 = vmatprep.subr.mxu0 0.0
    %3858 = vmatpush1.msra.mxu0 0.0
    %3859 = vmatprep.subr.mxu0 0.0
    %3860 = vmatpush1.msra.mxu0 0.0
    %3861 = vmatprep.subr.mxu0 0.0
    %3862 = vmatpush1.msra.mxu0 0.0
    %3863 = vmatprep.subr.mxu0 0.0
    %3864 = vmatpush1.msra.mxu0 0.0
    %3865 = vmatprep.subr.mxu0 0.0
    %3866 = vmatpush1.msra.mxu0 0.0
    %3867 = vmatprep.subr.mxu0 0.0
    %3868 = vmatpush1.msra.mxu0 0.0
    %3869 = vmatprep.subr.mxu0 0.0
    %3870 = vmatpush1.msra.mxu0 0.0
    %3871 = vmatprep.subr.mxu0 0.0
    %3872 = vmatpush1.msra.mxu0 0.0
    %3873 = vmatprep.subr.mxu0 0.0
    %3874 = vmatpush1.msra.mxu0 0.0
    %3875 = vmatprep.subr.mxu0 0.0
    %3876 = vmatpush1.msra.mxu0 0.0
    %3877 = vmatprep.subr.mxu0 0.0
    %3878 = vmatpush1.msra.mxu0 0.0
    %3879 = vmatprep.subr.mxu0 0.0
    %3880 = vmatpush1.msra.mxu0 0.0
    %3881 = vmatprep.subr.mxu0 0.0
    %3882 = vmatpush1.msra.mxu0 0.0
    %3883 = vmatprep.subr.mxu0 0.0
    %3884 = vmatpush1.msra.mxu0 0.0
    %3885 = vmatprep.subr.mxu0 0.0
    %3886 = vmatpush1.msra.mxu0 0.0
    %3887 = vmatprep.subr.mxu0 0.0
    %3888 = vmatpush1.msra.mxu0 0.0
    %3889 = vmatprep.mubr.f32.mxu0 0.0
    %3890 = vmatmul.mubr.f32.gmra.mrb[0].mxu0 %v3820
    %v3891 = vpop.f32.mrb[0].mxu0
    %v3892 = vadd.f32 %v3817, %v3891
    %v3893 = vpop.f32.mrb[0].mxu0
    %3894 = vmatprep.mubr.f32.mxu0 0.0
    %3895 = vmatmul.mubr.f32.gmra.mrb[0].mxu0 %v3823
    %v3896 = vpop.f32.mrb[0].mxu0
    %v3897 = vadd.f32 %v3817, %v3896
    %v3898 = vpop.f32.mrb[0].mxu0
    %3899 = vdwg.mxu0
    %v3900 = vadd.f32 %v3892, %v3652
    %v3901 = vadd.f32 %v3897, %v3653
    %s3902 = scalar_lea.vmem %s17, 1
    %v3903 = vld [vmem:[%s3902] sm:$0x1]
    %s3904 = scalar_lea.vmem %s18, 1
    %v3905 = vld [vmem:[%s3904] sm:$0x1]
    %v3906 = vsel %vm116, %v3900, 0.0
    %3907 = vadd.xlane.f32.xlu0 %v3906
    %v3908 = vpop.xlane.xlu0 %3907
    %v3909 = vsel %vm116, %v3901, 0.0
    %3910 = vadd.xlane.f32.xlu0 %v3909
    %v3911 = vpop.xlane.xlu0 %3910
    %v3912 = vmul.f32 %v3908, %v123
    %v3913 = vmul.f32 %v3911, %v123
    %v3914 = vsub.f32 %v3900, %v3912
    %v3915 = vsub.f32 %v3901, %v3913
    %v3916 = vmul.f32 %v3914, %v3914
    %v3917 = vmul.f32 %v3915, %v3915
    %v3918 = vsel %vm116, %v3916, 0.0
    %3919 = vadd.xlane.f32.xlu0 %v3918
    %v3920 = vpop.xlane.xlu0 %3919
    %v3921 = vsel %vm116, %v3917, 0.0
    %3922 = vadd.xlane.f32.xlu0 %v3921
    %v3923 = vpop.xlane.xlu0 %3922
    %v3924 = vmul.f32 %v3920, %v123
    %v3925 = vmul.f32 %v3923, %v123
    %v3926 = vadd.f32 %v3924, 1e-12
    %v3927 = vadd.f32 %v3925, 1e-12
    %v3928 = vrsqrt.pop %v3926
    %v3929 = vrsqrt.pop %v3927
    %v3930 = vmul.f32 %v3914, %v3928
    %v3931 = vmul.f32 %v3915, %v3929
    %v3933 = vlaneseq
    %v3934 = vshrl.u32 %v3933, 7
    %v3935 = vsub.s32 0, %v3934
    %v3936 = vrot.slane %v3903, %v3935
    %v3938 = vmul.f32 %v3930, %v3936
    %v3939 = vmul.f32 %v3931, %v3936
    %v3941 = vlaneseq
    %v3942 = vshrl.u32 %v3941, 7
    %v3943 = vsub.s32 0, %v3942
    %v3944 = vrot.slane %v3905, %v3943
    %v3946 = vadd.f32 %v3938, %v3944
    %v3947 = vadd.f32 %v3939, %v3944
    %v3948 = vld [vmem:[%s19] sm:$0xff]
    %v3949 = vld [vmem:[%s19 + $0x8] sm:$0xff]
    %v3950 = vld [vmem:[%s19 + $0x10] sm:$0xff]
    %v3951 = vld [vmem:[%s19 + $0x18] sm:$0xff]
    %v3952 = vld [vmem:[%s20] sm:$0x1]
    %v3954 = vlaneseq
    %v3955 = vshrl.u32 %v3954, 7
    %v3956 = vsub.s32 0, %v3955
    %v3957 = vrot.slane %v3952, %v3956
    %v3960 = vsel %vm116, %v3946, 0
    %v3963 = vsel %vm116, %v3947, 0
    %3965 = vmatprep.subr.mxu0 0.0
    %3966 = vmatpush1.msra.mxu0 %v3948
    %3967 = vmatprep.subr.mxu0 0.0
    %3968 = vmatpush1.msra.mxu0 %v3949
    %3969 = vmatprep.subr.mxu0 0.0
    %3970 = vmatpush1.msra.mxu0 %v3950
    %3971 = vmatprep.subr.mxu0 0.0
    %3972 = vmatpush1.msra.mxu0 %v3951
    %3973 = vmatprep.subr.mxu0 0.0
    %3974 = vmatpush1.msra.mxu0 0.0
    %3975 = vmatprep.subr.mxu0 0.0
    %3976 = vmatpush1.msra.mxu0 0.0
    %3977 = vmatprep.subr.mxu0 0.0
    %3978 = vmatpush1.msra.mxu0 0.0
    %3979 = vmatprep.subr.mxu0 0.0
    %3980 = vmatpush1.msra.mxu0 0.0
    %3981 = vmatprep.subr.mxu0 0.0
    %3982 = vmatpush1.msra.mxu0 0.0
    %3983 = vmatprep.subr.mxu0 0.0
    %3984 = vmatpush1.msra.mxu0 0.0
    %3985 = vmatprep.subr.mxu0 0.0
    %3986 = vmatpush1.msra.mxu0 0.0
    %3987 = vmatprep.subr.mxu0 0.0
    %3988 = vmatpush1.msra.mxu0 0.0
    %3989 = vmatprep.subr.mxu0 0.0
    %3990 = vmatpush1.msra.mxu0 0.0
    %3991 = vmatprep.subr.mxu0 0.0
    %3992 = vmatpush1.msra.mxu0 0.0
    %3993 = vmatprep.subr.mxu0 0.0
    %3994 = vmatpush1.msra.mxu0 0.0
    %3995 = vmatprep.subr.mxu0 0.0
    %3996 = vmatpush1.msra.mxu0 0.0
    %3997 = vmatprep.subr.mxu0 0.0
    %3998 = vmatpush1.msra.mxu0 0.0
    %3999 = vmatprep.subr.mxu0 0.0
    %4000 = vmatpush1.msra.mxu0 0.0
    %4001 = vmatprep.subr.mxu0 0.0
    %4002 = vmatpush1.msra.mxu0 0.0
    %4003 = vmatprep.subr.mxu0 0.0
    %4004 = vmatpush1.msra.mxu0 0.0
    %4005 = vmatprep.subr.mxu0 0.0
    %4006 = vmatpush1.msra.mxu0 0.0
    %4007 = vmatprep.subr.mxu0 0.0
    %4008 = vmatpush1.msra.mxu0 0.0
    %4009 = vmatprep.subr.mxu0 0.0
    %4010 = vmatpush1.msra.mxu0 0.0
    %4011 = vmatprep.subr.mxu0 0.0
    %4012 = vmatpush1.msra.mxu0 0.0
    %4013 = vmatprep.subr.mxu0 0.0
    %4014 = vmatpush1.msra.mxu0 0.0
    %4015 = vmatprep.subr.mxu0 0.0
    %4016 = vmatpush1.msra.mxu0 0.0
    %4017 = vmatprep.subr.mxu0 0.0
    %4018 = vmatpush1.msra.mxu0 0.0
    %4019 = vmatprep.subr.mxu0 0.0
    %4020 = vmatpush1.msra.mxu0 0.0
    %4021 = vmatprep.subr.mxu0 0.0
    %4022 = vmatpush1.msra.mxu0 0.0
    %4023 = vmatprep.subr.mxu0 0.0
    %4024 = vmatpush1.msra.mxu0 0.0
    %4025 = vmatprep.subr.mxu0 0.0
    %4026 = vmatpush1.msra.mxu0 0.0
    %4027 = vmatprep.subr.mxu0 0.0
    %4028 = vmatpush1.msra.mxu0 0.0
    %4029 = vmatprep.mubr.f32.mxu0 0.0
    %4030 = vmatmul.mubr.f32.gmra.mrb[0].mxu0 %v3960
    %v4031 = vpop.f32.mrb[0].mxu0
    %v4032 = vadd.f32 %v3957, %v4031
    %v4033 = vpop.f32.mrb[0].mxu0
    %4034 = vmatprep.mubr.f32.mxu0 0.0
    %4035 = vmatmul.mubr.f32.gmra.mrb[0].mxu0 %v3963
    %v4036 = vpop.f32.mrb[0].mxu0
    %v4037 = vadd.f32 %v3957, %v4036
    %v4038 = vpop.f32.mrb[0].mxu0
    %4039 = vdwg.mxu0
    %4040 = vst [vmem:[#allocation8] sm:$0xff] %v4032
    %4041 = vst [vmem:[#allocation8 + $0x8] sm:$0xff] %v4037
    %v4042 = vld [vmem:[%s2] sm:$0xff]
    %v4043 = vld [vmem:[%s2 + $0x8] sm:$0xff]
    %vm4044 = vcmask 7168
    %v4045 = vsel %vm4044, %v4042, 0.0
    %v4046 = vsel %vm4044, %v4043, 0.0
    %v4047 = vadd.f32 %v4045, %v4046
    %v4048 = vrot.slane %v4047, 4
    %v4049 = vadd.f32 %v4047, %v4048
    %v4050 = vrot.slane %v4049, 2
    %v4051 = vadd.f32 %v4049, %v4050
    %v4052 = vrot.slane %v4051, 1
    %v4053 = vadd.f32 %v4051, %v4052
    %v4054 = vrcp.pop %v4053
    %v4055 = vld [vmem:[%s3] sm:$0xff]
    %v4056 = vld [vmem:[%s3 + $0x8] sm:$0xff]
    %vm4057 = vcmask 39936
    %v4058 = vsel %vm4057, %v4032, -inf
    %4059 = vmax.xlane.f32.xlu0 %v4058
    %v4060 = vpop.xlane.xlu0 %4059
    %v4061 = vsel %vm4057, %v4037, -inf
    %4062 = vmax.xlane.f32.xlu0 %v4061
    %v4063 = vpop.xlane.xlu0 %4062
    %v4064 = vsub.f32 %v4032, %v4060
    %v4065 = vsub.f32 %v4037, %v4063
    %v4066 = vmul.f32 %v4064, 1.442695
    %v4067 = vpow.pop %v4066
    %v4068 = vmul.f32 %v4065, 1.442695
    %v4069 = vpow.pop %v4068
    %v4070 = vsel %vm4057, %v4067, 0.0
    %4071 = vadd.xlane.f32.xlu0 %v4070
    %v4072 = vpop.xlane.xlu0 %4071
    %v4073 = vsel %vm4057, %v4069, 0.0
    %4074 = vadd.xlane.f32.xlu0 %v4073
    %v4075 = vpop.xlane.xlu0 %4074
    %v4076 = vlog2.pop %v4072
    %v4077 = vmul.f32 %v4076, 0.6931472
    %v4078 = vlog2.pop %v4075
    %v4079 = vmul.f32 %v4078, 0.6931472
    %v4080 = vadd.f32 %v4077, %v4060
    %v4081 = vadd.f32 %v4079, %v4063
    %v4082 = vlaneseq
    %v4083 = vand.u32 %v4082, 127
    %4084 = vset.pattern.permute.xlu0 0
    %4085 = vperm.xlu0 %4084, %v4055
    %v4086 = vpop.permute.xlu0 %4085
    %4087 = vset.pattern.permute.xlu0 0
    %4088 = vperm.xlu0 %4087, %v4056
    %v4089 = vpop.permute.xlu0 %4088
    %vm4090 = vcmp.eq.s32.totalorder %v4083, %v4086
    %vm4091 = vcmp.eq.s32.totalorder %v4083, %v4089
    %v4092 = vsel %vm4090, %v4032, 0.0
    %v4093 = vsel %vm4091, %v4037, 0.0
    %v4094 = vsel %vm4057, %v4092, 0.0
    %4095 = vadd.xlane.f32.xlu0 %v4094
    %v4096 = vpop.xlane.xlu0 %4095
    %v4097 = vsel %vm4057, %v4093, 0.0
    %4098 = vadd.xlane.f32.xlu0 %v4097
    %v4099 = vpop.xlane.xlu0 %4098
    %v4100 = vsub.f32 %v4080, %v4096
    %v4101 = vsub.f32 %v4081, %v4099
    %v4102 = vmul.f32 %v4100, %v4042
    %v4103 = vmul.f32 %v4101, %v4043
    %v4104 = vsel %vm4044, %v4102, 0.0
    %v4105 = vsel %vm4044, %v4103, 0.0
    %v4106 = vadd.f32 %v4104, %v4105
    %v4107 = vrot.slane %v4106, 4
    %v4108 = vadd.f32 %v4106, %v4107
    %v4109 = vrot.slane %v4108, 2
    %v4110 = vadd.f32 %v4108, %v4109
    %v4111 = vrot.slane %v4110, 1
    %v4112 = vadd.f32 %v4110, %v4111
    %v4113 = vld [vmem:[%s4] sm:$0xff]
    %v4114 = vld [vmem:[%s4 + $0x8] sm:$0xff]
    %vm4115 = vcmask 97320
    %v4116 = vsel %vm4115, %v4032, -inf
    %4117 = vmax.xlane.f32.xlu0 %v4116
    %v4118 = vpop.xlane.xlu0 %4117
    %v4119 = vsel %vm4115, %v4037, -inf
    %4120 = vmax.xlane.f32.xlu0 %v4119
    %v4121 = vpop.xlane.xlu0 %4120
    %v4122 = vsub.f32 %v4032, %v4118
    %v4123 = vsub.f32 %v4037, %v4121
    %v4124 = vmul.f32 %v4122, 1.442695
    %v4125 = vpow.pop %v4124
    %v4126 = vmul.f32 %v4123, 1.442695
    %v4127 = vpow.pop %v4126
    %4130 = vrot.lane.b32.xlu0 %v4125, 123
    %v4131 = vpop.permute.xlu0 %4130
    %4132 = vrot.lane.b32.xlu0 %v4127, 123
    %v4133 = vpop.permute.xlu0 %4132
    %vm4136 = vcmask 56320
    %v4137 = vsel %vm4136, %v4131, 0.0
    %4138 = vadd.xlane.f32.xlu0 %v4137
    %v4139 = vpop.xlane.xlu0 %4138
    %v4140 = vsel %vm4136, %v4133, 0.0
    %4141 = vadd.xlane.f32.xlu0 %v4140
    %v4142 = vpop.xlane.xlu0 %4141
    %v4143 = vlog2.pop %v4139
    %v4144 = vmul.f32 %v4143, 0.6931472
    %v4145 = vlog2.pop %v4142
    %v4146 = vmul.f32 %v4145, 0.6931472
    %v4147 = vadd.f32 %v4144, %v4118
    %v4148 = vadd.f32 %v4146, %v4121
    %4149 = vset.pattern.permute.xlu0 0
    %4150 = vperm.xlu0 %4149, %v4113
    %v4151 = vpop.permute.xlu0 %4150
    %4152 = vset.pattern.permute.xlu0 0
    %4153 = vperm.xlu0 %4152, %v4114
    %v4154 = vpop.permute.xlu0 %4153
    %vm4155 = vcmp.eq.s32.totalorder %v4083, %v4151
    %vm4156 = vcmp.eq.s32.totalorder %v4083, %v4154
    %4159 = vrot.lane.b32.xlu0 %v4032, 123
    %v4160 = vpop.permute.xlu0 %4159
    %4161 = vrot.lane.b32.xlu0 %v4037, 123
    %v4162 = vpop.permute.xlu0 %4161
    %v4165 = vsel %vm4155, %v4160, 0.0
    %v4166 = vsel %vm4156, %v4162, 0.0
    %v4167 = vsel %vm4136, %v4165, 0.0
    %4168 = vadd.xlane.f32.xlu0 %v4167
    %v4169 = vpop.xlane.xlu0 %4168
    %v4170 = vsel %vm4136, %v4166, 0.0
    %4171 = vadd.xlane.f32.xlu0 %v4170
    %v4172 = vpop.xlane.xlu0 %4171
    %v4173 = vsub.f32 %v4147, %v4169
    %v4174 = vsub.f32 %v4148, %v4172
    %v4175 = vmul.f32 %v4173, %v4042
    %v4176 = vmul.f32 %v4174, %v4043
    %v4177 = vsel %vm4044, %v4175, 0.0
    %v4178 = vsel %vm4044, %v4176, 0.0
    %v4179 = vadd.f32 %v4177, %v4178
    %v4180 = vrot.slane %v4179, 4
    %v4181 = vadd.f32 %v4179, %v4180
    %v4182 = vrot.slane %v4181, 2
    %v4183 = vadd.f32 %v4181, %v4182
    %v4184 = vrot.slane %v4183, 1
    %v4185 = vadd.f32 %v4183, %v4184
    %v4186 = vadd.f32 %v4185, %v4112
    %v4187 = vmul.f32 %v4186, 0.5
    %v4188 = vmul.f32 %v4187, %v4054
    %vm4189 = vcmask 0
    %4190 = vst.msk [vmem:[#allocation9] sm:$0x1] %vm4189, %v4188
    // Predicated region
    $region98: #{tpu_custom_call.1} parent=1 // pred_check
      _
    $region99: #{tpu_custom_call.1} parent=1 // pred_check_branch
      %4192 = sbr.rel (0) target = $region101
    $region100: #{tpu_custom_call.1} parent=1 // pred_region
      %s4194 = ssub.s32 256, 256
      %4195 = vsyncadd [#allocation4], %s4194
      %s4196 = sshll.u32 [#allocation8], 4
      %s4197 = int_to_ptr.vmem [resolvable:$true] %s4196
      %4202 = dma.vmem_to_hbm [thread:$0]  %s4197, 256, %s21, [#allocation4], 128, 128, 8
    $region101: #{tpu_custom_call.1} parent=1 // pred_fallthru
      _
    // Predicated region
    $region102: #{tpu_custom_call.1} parent=1 // pred_check
      _
    $region103: #{tpu_custom_call.1} parent=1 // pred_check_branch
      %4204 = sbr.rel (0) target = $region105
    $region104: #{tpu_custom_call.1} parent=1 // pred_region
      %s4206 = ssub.s32 16, 16
      %4207 = vsyncadd [#allocation10], %s4206
      %s4209 = sshll.u32 [#allocation9], 4
      %s4210 = int_to_ptr.vmem [resolvable:$true] %s4209
      %4212 = dma.vmem_to_hbm [thread:$0]  %s4210, 16, %s22, [#allocation10]
    $region105: #{tpu_custom_call.1} parent=1 // pred_fallthru
      _
    // Predicated region
    $region106: #{tpu_custom_call.1} parent=1 // pred_check
      _
    $region107: #{tpu_custom_call.1} parent=1 // pred_check_branch
      %4214 = sbr.rel (0) target = $region109
    $region108: #{tpu_custom_call.1} parent=1 // pred_region
      %4215 = dma.done [#allocation4], 256
    $region109: #{tpu_custom_call.1} parent=1 // pred_fallthru
      _
    // Predicated region
    $region110: #{tpu_custom_call.1} parent=1 // pred_check
      _
    $region111: #{tpu_custom_call.1} parent=1 // pred_check_branch
      %4217 = sbr.rel (0) target = $region113
    $region112: #{tpu_custom_call.1} parent=1 // pred_region
      %4218 = dma.done [#allocation10], 16
    $region113: #{tpu_custom_call.1} parent=1 // pred_fallthru
      _
    %4219 = vsyncpa [#allocation3], 1
    %4220 = vsyncpa [#allocation6], 1
    %4221 = vsyncpa [#allocation4], 1
    %4222 = vsyncpa [#allocation10], 1

</llo_original>
